<compile_context>
chip_gen: v6e
topology: v6e:2x2x1
jax: 0.10.0
libtpu: 0.0.40
codegen_flags: <defaults>
</compile_context>

<pallas_src>
import math

import jax
import jax.numpy as jnp
from jax.experimental import pallas as pl
from jax.experimental.pallas import tpu as pltpu

# ----------------------- model hyper-parameters -----------------------------
B = 2          # batch
S = 8          # sequence length
D = 32         # d_model
H = 4          # attention heads
DK = D // H    # head dim
F = 64         # feed-forward hidden dim
N_LAYER = 2
EPS = 1e-5     # nn.LayerNorm default
BS = B * S     # flattened rows fed to every matmul


def _layer_norm(x, gamma, beta):
    """LayerNorm over the last axis (biased variance, like nn.LayerNorm)."""
    mean = jnp.mean(x, axis=-1, keepdims=True)
    var = jnp.mean((x - mean) ** 2, axis=-1, keepdims=True)
    inv = jax.lax.rsqrt(var + EPS)
    return (x - mean) * inv * gamma + beta


# --------------------------- fused Pallas kernel -----------------------------
def encoder_kernel(
    x_ref, mask_ref,
    wqkv_ref, bqkv_ref, wo_ref, bo_ref,
    g1_ref, be1_ref,
    w1_ref, b1_ref, w2_ref, b2_ref,
    g2_ref, be2_ref,
    gf_ref, bf_ref,
    o_ref,
):
    out = x_ref[...]                                   # [BS, D] flattened activations

    # Hoisted mask -> additive bias; shared across every layer and head.
    # (If a whole row is masked the softmax becomes uniform, same as the
    #  reference -1e9 masked_fill behaviour.)
    neg = jnp.where(mask_ref[...] > 0, 0.0, -1e9)      # [B, S, S]

    for l in range(N_LAYER):                           # static unroll over layers
        wqkv = wqkv_ref[l]                             # [D, 3D] (Q cols pre-scaled)
        bqkv = bqkv_ref[l]                             # [1, 3D]
        wo = wo_ref[l]                                 # [D, D]
        bo = bo_ref[l]                                 # [1, D]

        # ---- fused QKV projection (one matmul) ------------------------------
        qkv = jnp.dot(out, wqkv, preferred_element_type=jnp.float32) + bqkv
        q3 = qkv[:, 0 * D:1 * D].reshape(B, S, D)      # [B, S, D]
        k3 = qkv[:, 1 * D:2 * D].reshape(B, S, D)
        v3 = qkv[:, 2 * D:3 * D].reshape(B, S, D)

        # ---- multi-head attention, batched over B, summed over heads --------
        attn = jnp.zeros((BS, D), jnp.float32)
        for h in range(H):                             # static loop over heads
            sl = slice(h * DK, (h + 1) * DK)
            qh = q3[:, :, sl]                          # [B, S, DK]
            kh = k3[:, :, sl]
            vh = v3[:, :, sl]
            scores = jnp.einsum('bqd,bkd->bqk', qh, kh,
                                preferred_element_type=jnp.float32) + neg
            m = jnp.max(scores, axis=-1, keepdims=True)
            p = jnp.exp(scores - m)
            denom = jnp.sum(p, axis=-1, keepdims=True)
            p = p * pl.reciprocal(denom, approx=True)
            ctx = jnp.einsum('bqk,bkd->bqd', p, vh,
                             preferred_element_type=jnp.float32)      # [B, S, DK]
            # concat over heads + output projection  ==  sum of partial projections
            attn = attn + jnp.dot(ctx.reshape(BS, DK), wo[sl, :],
                                  preferred_element_type=jnp.float32)
        attn = attn + bo

        # ---- residual + LayerNorm 1 ------------------------------------------
        y = _layer_norm(out + attn, g1_ref[l], be1_ref[l])

        # ---- position-wise feed forward --------------------------------------
        h1 = jnp.maximum(
            jnp.dot(y, w1_ref[l], preferred_element_type=jnp.float32) + b1_ref[l],
            0.0)
        ff = jnp.dot(h1, w2_ref[l], preferred_element_type=jnp.float32) + b2_ref[l]

        # ---- residual + LayerNorm 2 ------------------------------------------
        out = _layer_norm(y + ff, g2_ref[l], be2_ref[l])

    # ---- final Encoder norm ---------------------------------------------------
    o_ref[...] = _layer_norm(out, gf_ref[...], bf_ref[...])


# --------------------------- wrapper -----------------------------------------
def _full_spec(shape):
    nd = len(shape)
    return pl.BlockSpec(shape, lambda i: (0,) * nd)


@jax.jit
def encoder_forward(x, mask, p, final_gamma, final_beta):
    """x: [B, S, D]; mask: [B, S, S] (>0 == attend)."""
    x_flat = x.reshape(BS, D)

    args = (
        x_flat, mask,
        p["wqkv"], p["bqkv"], p["wo"], p["bo"],
        p["g1"], p["be1"],
        p["w1"], p["b1"], p["w2"], p["b2"],
        p["g2"], p["be2"],
        final_gamma, final_beta,
    )
    in_specs = [_full_spec(a.shape) for a in args]

    out_flat = pl.pallas_call(
        encoder_kernel,
        out_shape=jax.ShapeDtypeStruct((BS, D), jnp.float32),
        grid=(1,),
        in_specs=in_specs,
        out_specs=_full_spec((BS, D)),
        compiler_params=pltpu.CompilerParams(
            dimension_semantics=("arbitrary",)),
    )(*args)
    # TODO(synk): output is 32 lanes wide (masked stores); at one 2 KB store per
    # forward the in-kernel relayout to a 128-lane slab would cost more than it saves.
    return out_flat.reshape(B, S, D)


# --------------------------- parameter init / packing -------------------------
def init_params(key):
    ks = jax.random.split(key, 6)
    sd = 1.0 / math.sqrt(D)
    sf = 1.0 / math.sqrt(F)
    p = {
        "wq": jax.random.normal(ks[0], (D, D), jnp.float32) * sd,
        "wk": jax.random.normal(ks[1], (D, D), jnp.float32) * sd,
        "wv": jax.random.normal(ks[2], (D, D), jnp.float32) * sd,
        "wo": jax.random.normal(ks[3], (D, D), jnp.float32) * sd,
        "bq": jnp.zeros((1, D), jnp.float32),
        "bk": jnp.zeros((1, D), jnp.float32),
        "bv": jnp.zeros((1, D), jnp.float32),
        "bo": jnp.zeros((1, D), jnp.float32),
        "g1": jnp.ones((1, D), jnp.float32),
        "be1": jnp.zeros((1, D), jnp.float32),
        "w1": jax.random.normal(ks[4], (D, F), jnp.float32) * sd,
        "b1": jnp.zeros((1, F), jnp.float32),
        "w2": jax.random.normal(ks[5], (F, D), jnp.float32) * sf,
        "b2": jnp.zeros((1, D), jnp.float32),
        "g2": jnp.ones((1, D), jnp.float32),
        "be2": jnp.zeros((1, D), jnp.float32),
    }
    final_gamma = jnp.ones((1, D), jnp.float32)
    final_beta = jnp.zeros((1, D), jnp.float32)
    return p, final_gamma, final_beta


def pack_params(p):
    """Fuse Q/K/V, fold the 1/sqrt(dk) scale into Q, and stack per layer."""
    scale = 1.0 / math.sqrt(DK)
    one = {
        "wqkv": jnp.concatenate([p["wq"] * scale, p["wk"], p["wv"]], axis=1),  # [D, 3D]
        "bqkv": jnp.concatenate([p["bq"] * scale, p["bk"], p["bv"]], axis=1),  # [1, 3D]
        "wo": p["wo"], "bo": p["bo"],
        "g1": p["g1"], "be1": p["be1"],
        "w1": p["w1"], "b1": p["b1"],
        "w2": p["w2"], "b2": p["b2"],
        "g2": p["g2"], "be2": p["be2"],
    }
    # copy.deepcopy(encoder_block) -> every layer has identical initial params,
    # so stack the same set N_LAYER times (leading layer axis).
    return {k: jnp.stack([v] * N_LAYER, axis=0) for k, v in one.items()}


# ------------------------------- main -----------------------------------------
if __name__ == "__main__":
    key = jax.random.PRNGKey(0)
    kx, kp = jax.random.split(key)

    x = jax.random.normal(kx, (B, S, D), jnp.float32)
    mask = jnp.ones((B, S, S), jnp.float32)   # no masking (== mask=None path)

    layer_params, fg, fb = init_params(kp)
    stacked = pack_params(layer_params)

    out = encoder_forward(x, mask, stacked, fg, fb)
    out = jax.block_until_ready(out)

    assert out.shape == (B, S, D), out.shape
    assert jnp.all(jnp.isfinite(out))
    print("KERNEL_OK")
</pallas_src>

<mosaic_0001>
module attributes {stable_mosaic.version = 11 : i64} {
  func.func @encoder_kernel(%arg0: i32, %arg1: memref<16x32xf32, #tpu.memory_space<vmem>>, %arg2: memref<2x8x8xf32, #tpu.memory_space<vmem>>, %arg3: memref<2x32x96xf32, #tpu.memory_space<vmem>>, %arg4: memref<2x1x96xf32, #tpu.memory_space<vmem>>, %arg5: memref<2x32x32xf32, #tpu.memory_space<vmem>>, %arg6: memref<2x1x32xf32, #tpu.memory_space<vmem>>, %arg7: memref<2x1x32xf32, #tpu.memory_space<vmem>>, %arg8: memref<2x1x32xf32, #tpu.memory_space<vmem>>, %arg9: memref<2x32x64xf32, #tpu.memory_space<vmem>>, %arg10: memref<2x1x64xf32, #tpu.memory_space<vmem>>, %arg11: memref<2x64x32xf32, #tpu.memory_space<vmem>>, %arg12: memref<2x1x32xf32, #tpu.memory_space<vmem>>, %arg13: memref<2x1x32xf32, #tpu.memory_space<vmem>>, %arg14: memref<2x1x32xf32, #tpu.memory_space<vmem>>, %arg15: memref<1x32xf32, #tpu.memory_space<vmem>>, %arg16: memref<1x32xf32, #tpu.memory_space<vmem>>, %arg17: memref<16x32xf32, #tpu.memory_space<vmem>>) attributes {dimension_semantics = [#tpu.dimension_semantics<arbitrary>], iteration_bounds = array<i64: 1>, scalar_prefetch = 0 : i64, scratch_operands = 0 : i64, tpu.core_type = #tpu.core_type<tc>, window_params = [{pipeline_mode = #tpu.pipeline_mode<synchronous>, transform_indices = @transform_0, window_bounds = array<i64: 16, 32>}, {pipeline_mode = #tpu.pipeline_mode<synchronous>, transform_indices = @transform_1, window_bounds = array<i64: 2, 8, 8>}, {pipeline_mode = #tpu.pipeline_mode<synchronous>, transform_indices = @transform_2, window_bounds = array<i64: 2, 32, 96>}, {pipeline_mode = #tpu.pipeline_mode<synchronous>, transform_indices = @transform_3, window_bounds = array<i64: 2, 1, 96>}, {pipeline_mode = #tpu.pipeline_mode<synchronous>, transform_indices = @transform_4, window_bounds = array<i64: 2, 32, 32>}, {pipeline_mode = #tpu.pipeline_mode<synchronous>, transform_indices = @transform_5, window_bounds = array<i64: 2, 1, 32>}, {pipeline_mode = #tpu.pipeline_mode<synchronous>, transform_indices = @transform_6, window_bounds = array<i64: 2, 1, 32>}, {pipeline_mode = #tpu.pipeline_mode<synchronous>, transform_indices = @transform_7, window_bounds = array<i64: 2, 1, 32>}, {pipeline_mode = #tpu.pipeline_mode<synchronous>, transform_indices = @transform_8, window_bounds = array<i64: 2, 32, 64>}, {pipeline_mode = #tpu.pipeline_mode<synchronous>, transform_indices = @transform_9, window_bounds = array<i64: 2, 1, 64>}, {pipeline_mode = #tpu.pipeline_mode<synchronous>, transform_indices = @transform_10, window_bounds = array<i64: 2, 64, 32>}, {pipeline_mode = #tpu.pipeline_mode<synchronous>, transform_indices = @transform_11, window_bounds = array<i64: 2, 1, 32>}, {pipeline_mode = #tpu.pipeline_mode<synchronous>, transform_indices = @transform_12, window_bounds = array<i64: 2, 1, 32>}, {pipeline_mode = #tpu.pipeline_mode<synchronous>, transform_indices = @transform_13, window_bounds = array<i64: 2, 1, 32>}, {pipeline_mode = #tpu.pipeline_mode<synchronous>, transform_indices = @transform_14, window_bounds = array<i64: 1, 32>}, {pipeline_mode = #tpu.pipeline_mode<synchronous>, transform_indices = @transform_15, window_bounds = array<i64: 1, 32>}, {pipeline_mode = #tpu.pipeline_mode<synchronous>, transform_indices = @transform_16, window_bounds = array<i64: 16, 32>}]} {
    %c0 = arith.constant 0 : index
    %c0_0 = arith.constant 0 : index
    %0 = vector.load %arg1[%c0, %c0_0] : memref<16x32xf32, #tpu.memory_space<vmem>>, vector<16x32xf32>
    %c0_1 = arith.constant 0 : index
    %c0_2 = arith.constant 0 : index
    %c0_3 = arith.constant 0 : index
    %1 = vector.load %arg2[%c0_1, %c0_2, %c0_3] : memref<2x8x8xf32, #tpu.memory_space<vmem>>, vector<2x8x8xf32>
    %cst = arith.constant 0.000000e+00 : f32
    %2 = vector.broadcast %cst : f32 to vector<2x8x8xf32>
    %3 = arith.cmpf ogt, %1, %2 : vector<2x8x8xf32>
    %cst_4 = arith.constant 0.000000e+00 : f32
    %cst_5 = arith.constant -1.000000e+09 : f32
    %4 = vector.broadcast %cst_4 : f32 to vector<2x8x8xf32>
    %5 = vector.broadcast %cst_5 : f32 to vector<2x8x8xf32>
    %6 = arith.select %3, %4, %5 : vector<2x8x8xi1>, vector<2x8x8xf32>
    %c0_6 = arith.constant 0 : index
    %c0_7 = arith.constant 0 : index
    %c0_8 = arith.constant 0 : index
    %7 = vector.load %arg3[%c0_6, %c0_7, %c0_8] : memref<2x32x96xf32, #tpu.memory_space<vmem>>, vector<1x32x96xf32>
    %8 = vector.shape_cast %7 : vector<1x32x96xf32> to vector<32x96xf32>
    %c0_9 = arith.constant 0 : index
    %c0_10 = arith.constant 0 : index
    %c0_11 = arith.constant 0 : index
    %9 = vector.load %arg4[%c0_9, %c0_10, %c0_11] : memref<2x1x96xf32, #tpu.memory_space<vmem>>, vector<1x1x96xf32>
    %10 = vector.shape_cast %9 : vector<1x1x96xf32> to vector<1x96xf32>
    %c0_12 = arith.constant 0 : index
    %c0_13 = arith.constant 0 : index
    %c0_14 = arith.constant 0 : index
    %11 = vector.load %arg5[%c0_12, %c0_13, %c0_14] : memref<2x32x32xf32, #tpu.memory_space<vmem>>, vector<1x32x32xf32>
    %12 = vector.shape_cast %11 : vector<1x32x32xf32> to vector<32x32xf32>
    %c0_15 = arith.constant 0 : index
    %c0_16 = arith.constant 0 : index
    %c0_17 = arith.constant 0 : index
    %13 = vector.load %arg6[%c0_15, %c0_16, %c0_17] : memref<2x1x32xf32, #tpu.memory_space<vmem>>, vector<1x1x32xf32>
    %14 = vector.shape_cast %13 : vector<1x1x32xf32> to vector<1x32xf32>
    %cst_18 = arith.constant dense<0.000000e+00> : vector<16x96xf32>
    %15 = tpu.matmul %0, %8, %cst_18 {dimension_numbers = #tpu.dot_dimension_numbers<[1], [0], [0], [1], [0, 0, 1, 1], [], []>} : vector<16x32xf32>, vector<32x96xf32>, vector<16x96xf32> -> vector<16x96xf32>
    %16 = vector.broadcast %10 : vector<1x96xf32> to vector<16x96xf32>
    %17 = arith.addf %15, %16 : vector<16x96xf32>
    %18 = vector.extract_strided_slice %17 {offsets = [0, 0], sizes = [16, 32], strides = [1, 1]} : vector<16x96xf32> to vector<16x32xf32>
    %19 = vector.shape_cast %18 : vector<16x32xf32> to vector<2x8x32xf32>
    %20 = vector.extract_strided_slice %17 {offsets = [0, 32], sizes = [16, 32], strides = [1, 1]} : vector<16x96xf32> to vector<16x32xf32>
    %21 = vector.shape_cast %20 : vector<16x32xf32> to vector<2x8x32xf32>
    %22 = vector.extract_strided_slice %17 {offsets = [0, 64], sizes = [16, 32], strides = [1, 1]} : vector<16x96xf32> to vector<16x32xf32>
    %23 = vector.shape_cast %22 : vector<16x32xf32> to vector<2x8x32xf32>
    %cst_19 = arith.constant 0.000000e+00 : f32
    %24 = vector.broadcast %cst_19 : f32 to vector<16x32xf32>
    %25 = vector.extract_strided_slice %19 {offsets = [0, 0, 0], sizes = [2, 8, 8], strides = [1, 1, 1]} : vector<2x8x32xf32> to vector<2x8x8xf32>
    %26 = vector.extract_strided_slice %21 {offsets = [0, 0, 0], sizes = [2, 8, 8], strides = [1, 1, 1]} : vector<2x8x32xf32> to vector<2x8x8xf32>
    %27 = vector.extract_strided_slice %23 {offsets = [0, 0, 0], sizes = [2, 8, 8], strides = [1, 1, 1]} : vector<2x8x32xf32> to vector<2x8x8xf32>
    "tpu.trace_start"() <{level = 10 : i32, message = "bqd,bkd->bqk"}> : () -> ()
    %cst_20 = arith.constant dense<0.000000e+00> : vector<2x8x8xf32>
    %28 = tpu.matmul %25, %26, %cst_20 {dimension_numbers = #tpu.dot_dimension_numbers<[2], [2], [1], [1], [0, 0, 0, 1, 1, 1], [0], [0]>} : vector<2x8x8xf32>, vector<2x8x8xf32>, vector<2x8x8xf32> -> vector<2x8x8xf32>
    "tpu.trace_stop"() : () -> ()
    %29 = arith.addf %28, %6 : vector<2x8x8xf32>
    %cst_21 = arith.constant dense<0xFF800000> : vector<2x8xf32>
    %30 = vector.multi_reduction <maximumf>, %29, %cst_21 [2] : vector<2x8x8xf32> to vector<2x8xf32>
    %31 = vector.shape_cast %30 : vector<2x8xf32> to vector<2x8x1xf32>
    %32 = vector.broadcast %31 : vector<2x8x1xf32> to vector<2x8x8xf32>
    %33 = arith.subf %29, %32 : vector<2x8x8xf32>
    %34 = math.exp %33 : vector<2x8x8xf32>
    %cst_22 = arith.constant dense<0.000000e+00> : vector<2x8xf32>
    %35 = vector.multi_reduction <add>, %34, %cst_22 [2] : vector<2x8x8xf32> to vector<2x8xf32>
    %36 = vector.shape_cast %35 : vector<2x8xf32> to vector<2x8x1xf32>
    %37 = tpu.reciprocal %36 {approx = true} : vector<2x8x1xf32> -> vector<2x8x1xf32>
    %38 = vector.broadcast %37 : vector<2x8x1xf32> to vector<2x8x8xf32>
    %39 = arith.mulf %34, %38 : vector<2x8x8xf32>
    "tpu.trace_start"() <{level = 10 : i32, message = "bqk,bkd->bqd"}> : () -> ()
    %cst_23 = arith.constant dense<0.000000e+00> : vector<2x8x8xf32>
    %40 = tpu.matmul %39, %27, %cst_23 {dimension_numbers = #tpu.dot_dimension_numbers<[2], [1], [1], [2], [0, 0, 0, 1, 1, 2], [0], [0]>} : vector<2x8x8xf32>, vector<2x8x8xf32>, vector<2x8x8xf32> -> vector<2x8x8xf32>
    "tpu.trace_stop"() : () -> ()
    %41 = vector.shape_cast %40 : vector<2x8x8xf32> to vector<16x8xf32>
    %42 = vector.extract_strided_slice %12 {offsets = [0, 0], sizes = [8, 32], strides = [1, 1]} : vector<32x32xf32> to vector<8x32xf32>
    %cst_24 = arith.constant dense<0.000000e+00> : vector<16x32xf32>
    %43 = tpu.matmul %41, %42, %cst_24 {dimension_numbers = #tpu.dot_dimension_numbers<[1], [0], [0], [1], [0, 0, 1, 1], [], []>} : vector<16x8xf32>, vector<8x32xf32>, vector<16x32xf32> -> vector<16x32xf32>
    %44 = arith.addf %24, %43 : vector<16x32xf32>
    %45 = vector.extract_strided_slice %19 {offsets = [0, 0, 8], sizes = [2, 8, 8], strides = [1, 1, 1]} : vector<2x8x32xf32> to vector<2x8x8xf32>
    %46 = vector.extract_strided_slice %21 {offsets = [0, 0, 8], sizes = [2, 8, 8], strides = [1, 1, 1]} : vector<2x8x32xf32> to vector<2x8x8xf32>
    %47 = vector.extract_strided_slice %23 {offsets = [0, 0, 8], sizes = [2, 8, 8], strides = [1, 1, 1]} : vector<2x8x32xf32> to vector<2x8x8xf32>
    "tpu.trace_start"() <{level = 10 : i32, message = "bqd,bkd->bqk"}> : () -> ()
    %cst_25 = arith.constant dense<0.000000e+00> : vector<2x8x8xf32>
    %48 = tpu.matmul %45, %46, %cst_25 {dimension_numbers = #tpu.dot_dimension_numbers<[2], [2], [1], [1], [0, 0, 0, 1, 1, 1], [0], [0]>} : vector<2x8x8xf32>, vector<2x8x8xf32>, vector<2x8x8xf32> -> vector<2x8x8xf32>
    "tpu.trace_stop"() : () -> ()
    %49 = arith.addf %48, %6 : vector<2x8x8xf32>
    %cst_26 = arith.constant dense<0xFF800000> : vector<2x8xf32>
    %50 = vector.multi_reduction <maximumf>, %49, %cst_26 [2] : vector<2x8x8xf32> to vector<2x8xf32>
    %51 = vector.shape_cast %50 : vector<2x8xf32> to vector<2x8x1xf32>
    %52 = vector.broadcast %51 : vector<2x8x1xf32> to vector<2x8x8xf32>
    %53 = arith.subf %49, %52 : vector<2x8x8xf32>
    %54 = math.exp %53 : vector<2x8x8xf32>
    %cst_27 = arith.constant dense<0.000000e+00> : vector<2x8xf32>
    %55 = vector.multi_reduction <add>, %54, %cst_27 [2] : vector<2x8x8xf32> to vector<2x8xf32>
    %56 = vector.shape_cast %55 : vector<2x8xf32> to vector<2x8x1xf32>
    %57 = tpu.reciprocal %56 {approx = true} : vector<2x8x1xf32> -> vector<2x8x1xf32>
    %58 = vector.broadcast %57 : vector<2x8x1xf32> to vector<2x8x8xf32>
    %59 = arith.mulf %54, %58 : vector<2x8x8xf32>
    "tpu.trace_start"() <{level = 10 : i32, message = "bqk,bkd->bqd"}> : () -> ()
    %cst_28 = arith.constant dense<0.000000e+00> : vector<2x8x8xf32>
    %60 = tpu.matmul %59, %47, %cst_28 {dimension_numbers = #tpu.dot_dimension_numbers<[2], [1], [1], [2], [0, 0, 0, 1, 1, 2], [0], [0]>} : vector<2x8x8xf32>, vector<2x8x8xf32>, vector<2x8x8xf32> -> vector<2x8x8xf32>
    "tpu.trace_stop"() : () -> ()
    %61 = vector.shape_cast %60 : vector<2x8x8xf32> to vector<16x8xf32>
    %62 = vector.extract_strided_slice %12 {offsets = [8, 0], sizes = [8, 32], strides = [1, 1]} : vector<32x32xf32> to vector<8x32xf32>
    %cst_29 = arith.constant dense<0.000000e+00> : vector<16x32xf32>
    %63 = tpu.matmul %61, %62, %cst_29 {dimension_numbers = #tpu.dot_dimension_numbers<[1], [0], [0], [1], [0, 0, 1, 1], [], []>} : vector<16x8xf32>, vector<8x32xf32>, vector<16x32xf32> -> vector<16x32xf32>
    %64 = arith.addf %44, %63 : vector<16x32xf32>
    %65 = vector.extract_strided_slice %19 {offsets = [0, 0, 16], sizes = [2, 8, 8], strides = [1, 1, 1]} : vector<2x8x32xf32> to vector<2x8x8xf32>
    %66 = vector.extract_strided_slice %21 {offsets = [0, 0, 16], sizes = [2, 8, 8], strides = [1, 1, 1]} : vector<2x8x32xf32> to vector<2x8x8xf32>
    %67 = vector.extract_strided_slice %23 {offsets = [0, 0, 16], sizes = [2, 8, 8], strides = [1, 1, 1]} : vector<2x8x32xf32> to vector<2x8x8xf32>
    "tpu.trace_start"() <{level = 10 : i32, message = "bqd,bkd->bqk"}> : () -> ()
    %cst_30 = arith.constant dense<0.000000e+00> : vector<2x8x8xf32>
    %68 = tpu.matmul %65, %66, %cst_30 {dimension_numbers = #tpu.dot_dimension_numbers<[2], [2], [1], [1], [0, 0, 0, 1, 1, 1], [0], [0]>} : vector<2x8x8xf32>, vector<2x8x8xf32>, vector<2x8x8xf32> -> vector<2x8x8xf32>
    "tpu.trace_stop"() : () -> ()
    %69 = arith.addf %68, %6 : vector<2x8x8xf32>
    %cst_31 = arith.constant dense<0xFF800000> : vector<2x8xf32>
    %70 = vector.multi_reduction <maximumf>, %69, %cst_31 [2] : vector<2x8x8xf32> to vector<2x8xf32>
    %71 = vector.shape_cast %70 : vector<2x8xf32> to vector<2x8x1xf32>
    %72 = vector.broadcast %71 : vector<2x8x1xf32> to vector<2x8x8xf32>
    %73 = arith.subf %69, %72 : vector<2x8x8xf32>
    %74 = math.exp %73 : vector<2x8x8xf32>
    %cst_32 = arith.constant dense<0.000000e+00> : vector<2x8xf32>
    %75 = vector.multi_reduction <add>, %74, %cst_32 [2] : vector<2x8x8xf32> to vector<2x8xf32>
    %76 = vector.shape_cast %75 : vector<2x8xf32> to vector<2x8x1xf32>
    %77 = tpu.reciprocal %76 {approx = true} : vector<2x8x1xf32> -> vector<2x8x1xf32>
    %78 = vector.broadcast %77 : vector<2x8x1xf32> to vector<2x8x8xf32>
    %79 = arith.mulf %74, %78 : vector<2x8x8xf32>
    "tpu.trace_start"() <{level = 10 : i32, message = "bqk,bkd->bqd"}> : () -> ()
    %cst_33 = arith.constant dense<0.000000e+00> : vector<2x8x8xf32>
    %80 = tpu.matmul %79, %67, %cst_33 {dimension_numbers = #tpu.dot_dimension_numbers<[2], [1], [1], [2], [0, 0, 0, 1, 1, 2], [0], [0]>} : vector<2x8x8xf32>, vector<2x8x8xf32>, vector<2x8x8xf32> -> vector<2x8x8xf32>
    "tpu.trace_stop"() : () -> ()
    %81 = vector.shape_cast %80 : vector<2x8x8xf32> to vector<16x8xf32>
    %82 = vector.extract_strided_slice %12 {offsets = [16, 0], sizes = [8, 32], strides = [1, 1]} : vector<32x32xf32> to vector<8x32xf32>
    %cst_34 = arith.constant dense<0.000000e+00> : vector<16x32xf32>
    %83 = tpu.matmul %81, %82, %cst_34 {dimension_numbers = #tpu.dot_dimension_numbers<[1], [0], [0], [1], [0, 0, 1, 1], [], []>} : vector<16x8xf32>, vector<8x32xf32>, vector<16x32xf32> -> vector<16x32xf32>
    %84 = arith.addf %64, %83 : vector<16x32xf32>
    %85 = vector.extract_strided_slice %19 {offsets = [0, 0, 24], sizes = [2, 8, 8], strides = [1, 1, 1]} : vector<2x8x32xf32> to vector<2x8x8xf32>
    %86 = vector.extract_strided_slice %21 {offsets = [0, 0, 24], sizes = [2, 8, 8], strides = [1, 1, 1]} : vector<2x8x32xf32> to vector<2x8x8xf32>
    %87 = vector.extract_strided_slice %23 {offsets = [0, 0, 24], sizes = [2, 8, 8], strides = [1, 1, 1]} : vector<2x8x32xf32> to vector<2x8x8xf32>
    "tpu.trace_start"() <{level = 10 : i32, message = "bqd,bkd->bqk"}> : () -> ()
    %cst_35 = arith.constant dense<0.000000e+00> : vector<2x8x8xf32>
    %88 = tpu.matmul %85, %86, %cst_35 {dimension_numbers = #tpu.dot_dimension_numbers<[2], [2], [1], [1], [0, 0, 0, 1, 1, 1], [0], [0]>} : vector<2x8x8xf32>, vector<2x8x8xf32>, vector<2x8x8xf32> -> vector<2x8x8xf32>
    "tpu.trace_stop"() : () -> ()
    %89 = arith.addf %88, %6 : vector<2x8x8xf32>
    %cst_36 = arith.constant dense<0xFF800000> : vector<2x8xf32>
    %90 = vector.multi_reduction <maximumf>, %89, %cst_36 [2] : vector<2x8x8xf32> to vector<2x8xf32>
    %91 = vector.shape_cast %90 : vector<2x8xf32> to vector<2x8x1xf32>
    %92 = vector.broadcast %91 : vector<2x8x1xf32> to vector<2x8x8xf32>
    %93 = arith.subf %89, %92 : vector<2x8x8xf32>
    %94 = math.exp %93 : vector<2x8x8xf32>
    %cst_37 = arith.constant dense<0.000000e+00> : vector<2x8xf32>
    %95 = vector.multi_reduction <add>, %94, %cst_37 [2] : vector<2x8x8xf32> to vector<2x8xf32>
    %96 = vector.shape_cast %95 : vector<2x8xf32> to vector<2x8x1xf32>
    %97 = tpu.reciprocal %96 {approx = true} : vector<2x8x1xf32> -> vector<2x8x1xf32>
    %98 = vector.broadcast %97 : vector<2x8x1xf32> to vector<2x8x8xf32>
    %99 = arith.mulf %94, %98 : vector<2x8x8xf32>
    "tpu.trace_start"() <{level = 10 : i32, message = "bqk,bkd->bqd"}> : () -> ()
    %cst_38 = arith.constant dense<0.000000e+00> : vector<2x8x8xf32>
    %100 = tpu.matmul %99, %87, %cst_38 {dimension_numbers = #tpu.dot_dimension_numbers<[2], [1], [1], [2], [0, 0, 0, 1, 1, 2], [0], [0]>} : vector<2x8x8xf32>, vector<2x8x8xf32>, vector<2x8x8xf32> -> vector<2x8x8xf32>
    "tpu.trace_stop"() : () -> ()
    %101 = vector.shape_cast %100 : vector<2x8x8xf32> to vector<16x8xf32>
    %102 = vector.extract_strided_slice %12 {offsets = [24, 0], sizes = [8, 32], strides = [1, 1]} : vector<32x32xf32> to vector<8x32xf32>
    %cst_39 = arith.constant dense<0.000000e+00> : vector<16x32xf32>
    %103 = tpu.matmul %101, %102, %cst_39 {dimension_numbers = #tpu.dot_dimension_numbers<[1], [0], [0], [1], [0, 0, 1, 1], [], []>} : vector<16x8xf32>, vector<8x32xf32>, vector<16x32xf32> -> vector<16x32xf32>
    %104 = arith.addf %84, %103 : vector<16x32xf32>
    %105 = vector.broadcast %14 : vector<1x32xf32> to vector<16x32xf32>
    %106 = arith.addf %104, %105 : vector<16x32xf32>
    %107 = arith.addf %0, %106 : vector<16x32xf32>
    %c0_40 = arith.constant 0 : index
    %c0_41 = arith.constant 0 : index
    %c0_42 = arith.constant 0 : index
    %108 = vector.load %arg7[%c0_40, %c0_41, %c0_42] : memref<2x1x32xf32, #tpu.memory_space<vmem>>, vector<1x1x32xf32>
    %109 = vector.shape_cast %108 : vector<1x1x32xf32> to vector<1x32xf32>
    %c0_43 = arith.constant 0 : index
    %c0_44 = arith.constant 0 : index
    %c0_45 = arith.constant 0 : index
    %110 = vector.load %arg8[%c0_43, %c0_44, %c0_45] : memref<2x1x32xf32, #tpu.memory_space<vmem>>, vector<1x1x32xf32>
    %111 = vector.shape_cast %110 : vector<1x1x32xf32> to vector<1x32xf32>
    %cst_46 = arith.constant dense<0.000000e+00> : vector<16xf32>
    %112 = vector.multi_reduction <add>, %107, %cst_46 [1] : vector<16x32xf32> to vector<16xf32>
    %113 = vector.shape_cast %112 : vector<16xf32> to vector<16x1xf32>
    %cst_47 = arith.constant 3.200000e+01 : f32
    %114 = vector.broadcast %cst_47 : f32 to vector<16x1xf32>
    %115 = arith.divf %113, %114 : vector<16x1xf32>
    %116 = vector.broadcast %115 : vector<16x1xf32> to vector<16x32xf32>
    %117 = arith.subf %107, %116 : vector<16x32xf32>
    %118 = arith.mulf %117, %117 : vector<16x32xf32>
    %cst_48 = arith.constant dense<0.000000e+00> : vector<16xf32>
    %119 = vector.multi_reduction <add>, %118, %cst_48 [1] : vector<16x32xf32> to vector<16xf32>
    %120 = vector.shape_cast %119 : vector<16xf32> to vector<16x1xf32>
    %cst_49 = arith.constant 3.200000e+01 : f32
    %121 = vector.broadcast %cst_49 : f32 to vector<16x1xf32>
    %122 = arith.divf %120, %121 : vector<16x1xf32>
    %cst_50 = arith.constant 9.99999974E-6 : f32
    %123 = vector.broadcast %cst_50 : f32 to vector<16x1xf32>
    %124 = arith.addf %122, %123 : vector<16x1xf32>
    %125 = math.rsqrt %124 : vector<16x1xf32>
    %126 = vector.broadcast %115 : vector<16x1xf32> to vector<16x32xf32>
    %127 = arith.subf %107, %126 : vector<16x32xf32>
    %128 = vector.broadcast %125 : vector<16x1xf32> to vector<16x32xf32>
    %129 = arith.mulf %127, %128 : vector<16x32xf32>
    %130 = vector.broadcast %109 : vector<1x32xf32> to vector<16x32xf32>
    %131 = arith.mulf %129, %130 : vector<16x32xf32>
    %132 = vector.broadcast %111 : vector<1x32xf32> to vector<16x32xf32>
    %133 = arith.addf %131, %132 : vector<16x32xf32>
    %c0_51 = arith.constant 0 : index
    %c0_52 = arith.constant 0 : index
    %c0_53 = arith.constant 0 : index
    %134 = vector.load %arg9[%c0_51, %c0_52, %c0_53] : memref<2x32x64xf32, #tpu.memory_space<vmem>>, vector<1x32x64xf32>
    %135 = vector.shape_cast %134 : vector<1x32x64xf32> to vector<32x64xf32>
    %cst_54 = arith.constant dense<0.000000e+00> : vector<16x64xf32>
    %136 = tpu.matmul %133, %135, %cst_54 {dimension_numbers = #tpu.dot_dimension_numbers<[1], [0], [0], [1], [0, 0, 1, 1], [], []>} : vector<16x32xf32>, vector<32x64xf32>, vector<16x64xf32> -> vector<16x64xf32>
    %c0_55 = arith.constant 0 : index
    %c0_56 = arith.constant 0 : index
    %c0_57 = arith.constant 0 : index
    %137 = vector.load %arg10[%c0_55, %c0_56, %c0_57] : memref<2x1x64xf32, #tpu.memory_space<vmem>>, vector<1x1x64xf32>
    %138 = vector.shape_cast %137 : vector<1x1x64xf32> to vector<1x64xf32>
    %139 = vector.broadcast %138 : vector<1x64xf32> to vector<16x64xf32>
    %140 = arith.addf %136, %139 : vector<16x64xf32>
    %cst_58 = arith.constant 0.000000e+00 : f32
    %141 = vector.broadcast %cst_58 : f32 to vector<16x64xf32>
    %142 = arith.maximumf %140, %141 : vector<16x64xf32>
    %c0_59 = arith.constant 0 : index
    %c0_60 = arith.constant 0 : index
    %c0_61 = arith.constant 0 : index
    %143 = vector.load %arg11[%c0_59, %c0_60, %c0_61] : memref<2x64x32xf32, #tpu.memory_space<vmem>>, vector<1x64x32xf32>
    %144 = vector.shape_cast %143 : vector<1x64x32xf32> to vector<64x32xf32>
    %cst_62 = arith.constant dense<0.000000e+00> : vector<16x32xf32>
    %145 = tpu.matmul %142, %144, %cst_62 {dimension_numbers = #tpu.dot_dimension_numbers<[1], [0], [0], [1], [0, 0, 1, 1], [], []>} : vector<16x64xf32>, vector<64x32xf32>, vector<16x32xf32> -> vector<16x32xf32>
    %c0_63 = arith.constant 0 : index
    %c0_64 = arith.constant 0 : index
    %c0_65 = arith.constant 0 : index
    %146 = vector.load %arg12[%c0_63, %c0_64, %c0_65] : memref<2x1x32xf32, #tpu.memory_space<vmem>>, vector<1x1x32xf32>
    %147 = vector.shape_cast %146 : vector<1x1x32xf32> to vector<1x32xf32>
    %148 = vector.broadcast %147 : vector<1x32xf32> to vector<16x32xf32>
    %149 = arith.addf %145, %148 : vector<16x32xf32>
    %150 = arith.addf %133, %149 : vector<16x32xf32>
    %c0_66 = arith.constant 0 : index
    %c0_67 = arith.constant 0 : index
    %c0_68 = arith.constant 0 : index
    %151 = vector.load %arg13[%c0_66, %c0_67, %c0_68] : memref<2x1x32xf32, #tpu.memory_space<vmem>>, vector<1x1x32xf32>
    %152 = vector.shape_cast %151 : vector<1x1x32xf32> to vector<1x32xf32>
    %c0_69 = arith.constant 0 : index
    %c0_70 = arith.constant 0 : index
    %c0_71 = arith.constant 0 : index
    %153 = vector.load %arg14[%c0_69, %c0_70, %c0_71] : memref<2x1x32xf32, #tpu.memory_space<vmem>>, vector<1x1x32xf32>
    %154 = vector.shape_cast %153 : vector<1x1x32xf32> to vector<1x32xf32>
    %cst_72 = arith.constant dense<0.000000e+00> : vector<16xf32>
    %155 = vector.multi_reduction <add>, %150, %cst_72 [1] : vector<16x32xf32> to vector<16xf32>
    %156 = vector.shape_cast %155 : vector<16xf32> to vector<16x1xf32>
    %cst_73 = arith.constant 3.200000e+01 : f32
    %157 = vector.broadcast %cst_73 : f32 to vector<16x1xf32>
    %158 = arith.divf %156, %157 : vector<16x1xf32>
    %159 = vector.broadcast %158 : vector<16x1xf32> to vector<16x32xf32>
    %160 = arith.subf %150, %159 : vector<16x32xf32>
    %161 = arith.mulf %160, %160 : vector<16x32xf32>
    %cst_74 = arith.constant dense<0.000000e+00> : vector<16xf32>
    %162 = vector.multi_reduction <add>, %161, %cst_74 [1] : vector<16x32xf32> to vector<16xf32>
    %163 = vector.shape_cast %162 : vector<16xf32> to vector<16x1xf32>
    %cst_75 = arith.constant 3.200000e+01 : f32
    %164 = vector.broadcast %cst_75 : f32 to vector<16x1xf32>
    %165 = arith.divf %163, %164 : vector<16x1xf32>
    %cst_76 = arith.constant 9.99999974E-6 : f32
    %166 = vector.broadcast %cst_76 : f32 to vector<16x1xf32>
    %167 = arith.addf %165, %166 : vector<16x1xf32>
    %168 = math.rsqrt %167 : vector<16x1xf32>
    %169 = vector.broadcast %158 : vector<16x1xf32> to vector<16x32xf32>
    %170 = arith.subf %150, %169 : vector<16x32xf32>
    %171 = vector.broadcast %168 : vector<16x1xf32> to vector<16x32xf32>
    %172 = arith.mulf %170, %171 : vector<16x32xf32>
    %173 = vector.broadcast %152 : vector<1x32xf32> to vector<16x32xf32>
    %174 = arith.mulf %172, %173 : vector<16x32xf32>
    %175 = vector.broadcast %154 : vector<1x32xf32> to vector<16x32xf32>
    %176 = arith.addf %174, %175 : vector<16x32xf32>
    %c1 = arith.constant 1 : index
    %c0_77 = arith.constant 0 : index
    %c0_78 = arith.constant 0 : index
    %177 = vector.load %arg3[%c1, %c0_77, %c0_78] : memref<2x32x96xf32, #tpu.memory_space<vmem>>, vector<1x32x96xf32>
    %178 = vector.shape_cast %177 : vector<1x32x96xf32> to vector<32x96xf32>
    %c1_79 = arith.constant 1 : index
    %c0_80 = arith.constant 0 : index
    %c0_81 = arith.constant 0 : index
    %179 = vector.load %arg4[%c1_79, %c0_80, %c0_81] : memref<2x1x96xf32, #tpu.memory_space<vmem>>, vector<1x1x96xf32>
    %180 = vector.shape_cast %179 : vector<1x1x96xf32> to vector<1x96xf32>
    %c1_82 = arith.constant 1 : index
    %c0_83 = arith.constant 0 : index
    %c0_84 = arith.constant 0 : index
    %181 = vector.load %arg5[%c1_82, %c0_83, %c0_84] : memref<2x32x32xf32, #tpu.memory_space<vmem>>, vector<1x32x32xf32>
    %182 = vector.shape_cast %181 : vector<1x32x32xf32> to vector<32x32xf32>
    %c1_85 = arith.constant 1 : index
    %c0_86 = arith.constant 0 : index
    %c0_87 = arith.constant 0 : index
    %183 = vector.load %arg6[%c1_85, %c0_86, %c0_87] : memref<2x1x32xf32, #tpu.memory_space<vmem>>, vector<1x1x32xf32>
    %184 = vector.shape_cast %183 : vector<1x1x32xf32> to vector<1x32xf32>
    %cst_88 = arith.constant dense<0.000000e+00> : vector<16x96xf32>
    %185 = tpu.matmul %176, %178, %cst_88 {dimension_numbers = #tpu.dot_dimension_numbers<[1], [0], [0], [1], [0, 0, 1, 1], [], []>} : vector<16x32xf32>, vector<32x96xf32>, vector<16x96xf32> -> vector<16x96xf32>
    %186 = vector.broadcast %180 : vector<1x96xf32> to vector<16x96xf32>
    %187 = arith.addf %185, %186 : vector<16x96xf32>
    %188 = vector.extract_strided_slice %187 {offsets = [0, 0], sizes = [16, 32], strides = [1, 1]} : vector<16x96xf32> to vector<16x32xf32>
    %189 = vector.shape_cast %188 : vector<16x32xf32> to vector<2x8x32xf32>
    %190 = vector.extract_strided_slice %187 {offsets = [0, 32], sizes = [16, 32], strides = [1, 1]} : vector<16x96xf32> to vector<16x32xf32>
    %191 = vector.shape_cast %190 : vector<16x32xf32> to vector<2x8x32xf32>
    %192 = vector.extract_strided_slice %187 {offsets = [0, 64], sizes = [16, 32], strides = [1, 1]} : vector<16x96xf32> to vector<16x32xf32>
    %193 = vector.shape_cast %192 : vector<16x32xf32> to vector<2x8x32xf32>
    %cst_89 = arith.constant 0.000000e+00 : f32
    %194 = vector.broadcast %cst_89 : f32 to vector<16x32xf32>
    %195 = vector.extract_strided_slice %189 {offsets = [0, 0, 0], sizes = [2, 8, 8], strides = [1, 1, 1]} : vector<2x8x32xf32> to vector<2x8x8xf32>
    %196 = vector.extract_strided_slice %191 {offsets = [0, 0, 0], sizes = [2, 8, 8], strides = [1, 1, 1]} : vector<2x8x32xf32> to vector<2x8x8xf32>
    %197 = vector.extract_strided_slice %193 {offsets = [0, 0, 0], sizes = [2, 8, 8], strides = [1, 1, 1]} : vector<2x8x32xf32> to vector<2x8x8xf32>
    "tpu.trace_start"() <{level = 10 : i32, message = "bqd,bkd->bqk"}> : () -> ()
    %cst_90 = arith.constant dense<0.000000e+00> : vector<2x8x8xf32>
    %198 = tpu.matmul %195, %196, %cst_90 {dimension_numbers = #tpu.dot_dimension_numbers<[2], [2], [1], [1], [0, 0, 0, 1, 1, 1], [0], [0]>} : vector<2x8x8xf32>, vector<2x8x8xf32>, vector<2x8x8xf32> -> vector<2x8x8xf32>
    "tpu.trace_stop"() : () -> ()
    %199 = arith.addf %198, %6 : vector<2x8x8xf32>
    %cst_91 = arith.constant dense<0xFF800000> : vector<2x8xf32>
    %200 = vector.multi_reduction <maximumf>, %199, %cst_91 [2] : vector<2x8x8xf32> to vector<2x8xf32>
    %201 = vector.shape_cast %200 : vector<2x8xf32> to vector<2x8x1xf32>
    %202 = vector.broadcast %201 : vector<2x8x1xf32> to vector<2x8x8xf32>
    %203 = arith.subf %199, %202 : vector<2x8x8xf32>
    %204 = math.exp %203 : vector<2x8x8xf32>
    %cst_92 = arith.constant dense<0.000000e+00> : vector<2x8xf32>
    %205 = vector.multi_reduction <add>, %204, %cst_92 [2] : vector<2x8x8xf32> to vector<2x8xf32>
    %206 = vector.shape_cast %205 : vector<2x8xf32> to vector<2x8x1xf32>
    %207 = tpu.reciprocal %206 {approx = true} : vector<2x8x1xf32> -> vector<2x8x1xf32>
    %208 = vector.broadcast %207 : vector<2x8x1xf32> to vector<2x8x8xf32>
    %209 = arith.mulf %204, %208 : vector<2x8x8xf32>
    "tpu.trace_start"() <{level = 10 : i32, message = "bqk,bkd->bqd"}> : () -> ()
    %cst_93 = arith.constant dense<0.000000e+00> : vector<2x8x8xf32>
    %210 = tpu.matmul %209, %197, %cst_93 {dimension_numbers = #tpu.dot_dimension_numbers<[2], [1], [1], [2], [0, 0, 0, 1, 1, 2], [0], [0]>} : vector<2x8x8xf32>, vector<2x8x8xf32>, vector<2x8x8xf32> -> vector<2x8x8xf32>
    "tpu.trace_stop"() : () -> ()
    %211 = vector.shape_cast %210 : vector<2x8x8xf32> to vector<16x8xf32>
    %212 = vector.extract_strided_slice %182 {offsets = [0, 0], sizes = [8, 32], strides = [1, 1]} : vector<32x32xf32> to vector<8x32xf32>
    %cst_94 = arith.constant dense<0.000000e+00> : vector<16x32xf32>
    %213 = tpu.matmul %211, %212, %cst_94 {dimension_numbers = #tpu.dot_dimension_numbers<[1], [0], [0], [1], [0, 0, 1, 1], [], []>} : vector<16x8xf32>, vector<8x32xf32>, vector<16x32xf32> -> vector<16x32xf32>
    %214 = arith.addf %194, %213 : vector<16x32xf32>
    %215 = vector.extract_strided_slice %189 {offsets = [0, 0, 8], sizes = [2, 8, 8], strides = [1, 1, 1]} : vector<2x8x32xf32> to vector<2x8x8xf32>
    %216 = vector.extract_strided_slice %191 {offsets = [0, 0, 8], sizes = [2, 8, 8], strides = [1, 1, 1]} : vector<2x8x32xf32> to vector<2x8x8xf32>
    %217 = vector.extract_strided_slice %193 {offsets = [0, 0, 8], sizes = [2, 8, 8], strides = [1, 1, 1]} : vector<2x8x32xf32> to vector<2x8x8xf32>
    "tpu.trace_start"() <{level = 10 : i32, message = "bqd,bkd->bqk"}> : () -> ()
    %cst_95 = arith.constant dense<0.000000e+00> : vector<2x8x8xf32>
    %218 = tpu.matmul %215, %216, %cst_95 {dimension_numbers = #tpu.dot_dimension_numbers<[2], [2], [1], [1], [0, 0, 0, 1, 1, 1], [0], [0]>} : vector<2x8x8xf32>, vector<2x8x8xf32>, vector<2x8x8xf32> -> vector<2x8x8xf32>
    "tpu.trace_stop"() : () -> ()
    %219 = arith.addf %218, %6 : vector<2x8x8xf32>
    %cst_96 = arith.constant dense<0xFF800000> : vector<2x8xf32>
    %220 = vector.multi_reduction <maximumf>, %219, %cst_96 [2] : vector<2x8x8xf32> to vector<2x8xf32>
    %221 = vector.shape_cast %220 : vector<2x8xf32> to vector<2x8x1xf32>
    %222 = vector.broadcast %221 : vector<2x8x1xf32> to vector<2x8x8xf32>
    %223 = arith.subf %219, %222 : vector<2x8x8xf32>
    %224 = math.exp %223 : vector<2x8x8xf32>
    %cst_97 = arith.constant dense<0.000000e+00> : vector<2x8xf32>
    %225 = vector.multi_reduction <add>, %224, %cst_97 [2] : vector<2x8x8xf32> to vector<2x8xf32>
    %226 = vector.shape_cast %225 : vector<2x8xf32> to vector<2x8x1xf32>
    %227 = tpu.reciprocal %226 {approx = true} : vector<2x8x1xf32> -> vector<2x8x1xf32>
    %228 = vector.broadcast %227 : vector<2x8x1xf32> to vector<2x8x8xf32>
    %229 = arith.mulf %224, %228 : vector<2x8x8xf32>
    "tpu.trace_start"() <{level = 10 : i32, message = "bqk,bkd->bqd"}> : () -> ()
    %cst_98 = arith.constant dense<0.000000e+00> : vector<2x8x8xf32>
    %230 = tpu.matmul %229, %217, %cst_98 {dimension_numbers = #tpu.dot_dimension_numbers<[2], [1], [1], [2], [0, 0, 0, 1, 1, 2], [0], [0]>} : vector<2x8x8xf32>, vector<2x8x8xf32>, vector<2x8x8xf32> -> vector<2x8x8xf32>
    "tpu.trace_stop"() : () -> ()
    %231 = vector.shape_cast %230 : vector<2x8x8xf32> to vector<16x8xf32>
    %232 = vector.extract_strided_slice %182 {offsets = [8, 0], sizes = [8, 32], strides = [1, 1]} : vector<32x32xf32> to vector<8x32xf32>
    %cst_99 = arith.constant dense<0.000000e+00> : vector<16x32xf32>
    %233 = tpu.matmul %231, %232, %cst_99 {dimension_numbers = #tpu.dot_dimension_numbers<[1], [0], [0], [1], [0, 0, 1, 1], [], []>} : vector<16x8xf32>, vector<8x32xf32>, vector<16x32xf32> -> vector<16x32xf32>
    %234 = arith.addf %214, %233 : vector<16x32xf32>
    %235 = vector.extract_strided_slice %189 {offsets = [0, 0, 16], sizes = [2, 8, 8], strides = [1, 1, 1]} : vector<2x8x32xf32> to vector<2x8x8xf32>
    %236 = vector.extract_strided_slice %191 {offsets = [0, 0, 16], sizes = [2, 8, 8], strides = [1, 1, 1]} : vector<2x8x32xf32> to vector<2x8x8xf32>
    %237 = vector.extract_strided_slice %193 {offsets = [0, 0, 16], sizes = [2, 8, 8], strides = [1, 1, 1]} : vector<2x8x32xf32> to vector<2x8x8xf32>
    "tpu.trace_start"() <{level = 10 : i32, message = "bqd,bkd->bqk"}> : () -> ()
    %cst_100 = arith.constant dense<0.000000e+00> : vector<2x8x8xf32>
    %238 = tpu.matmul %235, %236, %cst_100 {dimension_numbers = #tpu.dot_dimension_numbers<[2], [2], [1], [1], [0, 0, 0, 1, 1, 1], [0], [0]>} : vector<2x8x8xf32>, vector<2x8x8xf32>, vector<2x8x8xf32> -> vector<2x8x8xf32>
    "tpu.trace_stop"() : () -> ()
    %239 = arith.addf %238, %6 : vector<2x8x8xf32>
    %cst_101 = arith.constant dense<0xFF800000> : vector<2x8xf32>
    %240 = vector.multi_reduction <maximumf>, %239, %cst_101 [2] : vector<2x8x8xf32> to vector<2x8xf32>
    %241 = vector.shape_cast %240 : vector<2x8xf32> to vector<2x8x1xf32>
    %242 = vector.broadcast %241 : vector<2x8x1xf32> to vector<2x8x8xf32>
    %243 = arith.subf %239, %242 : vector<2x8x8xf32>
    %244 = math.exp %243 : vector<2x8x8xf32>
    %cst_102 = arith.constant dense<0.000000e+00> : vector<2x8xf32>
    %245 = vector.multi_reduction <add>, %244, %cst_102 [2] : vector<2x8x8xf32> to vector<2x8xf32>
    %246 = vector.shape_cast %245 : vector<2x8xf32> to vector<2x8x1xf32>
    %247 = tpu.reciprocal %246 {approx = true} : vector<2x8x1xf32> -> vector<2x8x1xf32>
    %248 = vector.broadcast %247 : vector<2x8x1xf32> to vector<2x8x8xf32>
    %249 = arith.mulf %244, %248 : vector<2x8x8xf32>
    "tpu.trace_start"() <{level = 10 : i32, message = "bqk,bkd->bqd"}> : () -> ()
    %cst_103 = arith.constant dense<0.000000e+00> : vector<2x8x8xf32>
    %250 = tpu.matmul %249, %237, %cst_103 {dimension_numbers = #tpu.dot_dimension_numbers<[2], [1], [1], [2], [0, 0, 0, 1, 1, 2], [0], [0]>} : vector<2x8x8xf32>, vector<2x8x8xf32>, vector<2x8x8xf32> -> vector<2x8x8xf32>
    "tpu.trace_stop"() : () -> ()
    %251 = vector.shape_cast %250 : vector<2x8x8xf32> to vector<16x8xf32>
    %252 = vector.extract_strided_slice %182 {offsets = [16, 0], sizes = [8, 32], strides = [1, 1]} : vector<32x32xf32> to vector<8x32xf32>
    %cst_104 = arith.constant dense<0.000000e+00> : vector<16x32xf32>
    %253 = tpu.matmul %251, %252, %cst_104 {dimension_numbers = #tpu.dot_dimension_numbers<[1], [0], [0], [1], [0, 0, 1, 1], [], []>} : vector<16x8xf32>, vector<8x32xf32>, vector<16x32xf32> -> vector<16x32xf32>
    %254 = arith.addf %234, %253 : vector<16x32xf32>
    %255 = vector.extract_strided_slice %189 {offsets = [0, 0, 24], sizes = [2, 8, 8], strides = [1, 1, 1]} : vector<2x8x32xf32> to vector<2x8x8xf32>
    %256 = vector.extract_strided_slice %191 {offsets = [0, 0, 24], sizes = [2, 8, 8], strides = [1, 1, 1]} : vector<2x8x32xf32> to vector<2x8x8xf32>
    %257 = vector.extract_strided_slice %193 {offsets = [0, 0, 24], sizes = [2, 8, 8], strides = [1, 1, 1]} : vector<2x8x32xf32> to vector<2x8x8xf32>
    "tpu.trace_start"() <{level = 10 : i32, message = "bqd,bkd->bqk"}> : () -> ()
    %cst_105 = arith.constant dense<0.000000e+00> : vector<2x8x8xf32>
    %258 = tpu.matmul %255, %256, %cst_105 {dimension_numbers = #tpu.dot_dimension_numbers<[2], [2], [1], [1], [0, 0, 0, 1, 1, 1], [0], [0]>} : vector<2x8x8xf32>, vector<2x8x8xf32>, vector<2x8x8xf32> -> vector<2x8x8xf32>
    "tpu.trace_stop"() : () -> ()
    %259 = arith.addf %258, %6 : vector<2x8x8xf32>
    %cst_106 = arith.constant dense<0xFF800000> : vector<2x8xf32>
    %260 = vector.multi_reduction <maximumf>, %259, %cst_106 [2] : vector<2x8x8xf32> to vector<2x8xf32>
    %261 = vector.shape_cast %260 : vector<2x8xf32> to vector<2x8x1xf32>
    %262 = vector.broadcast %261 : vector<2x8x1xf32> to vector<2x8x8xf32>
    %263 = arith.subf %259, %262 : vector<2x8x8xf32>
    %264 = math.exp %263 : vector<2x8x8xf32>
    %cst_107 = arith.constant dense<0.000000e+00> : vector<2x8xf32>
    %265 = vector.multi_reduction <add>, %264, %cst_107 [2] : vector<2x8x8xf32> to vector<2x8xf32>
    %266 = vector.shape_cast %265 : vector<2x8xf32> to vector<2x8x1xf32>
    %267 = tpu.reciprocal %266 {approx = true} : vector<2x8x1xf32> -> vector<2x8x1xf32>
    %268 = vector.broadcast %267 : vector<2x8x1xf32> to vector<2x8x8xf32>
    %269 = arith.mulf %264, %268 : vector<2x8x8xf32>
    "tpu.trace_start"() <{level = 10 : i32, message = "bqk,bkd->bqd"}> : () -> ()
    %cst_108 = arith.constant dense<0.000000e+00> : vector<2x8x8xf32>
    %270 = tpu.matmul %269, %257, %cst_108 {dimension_numbers = #tpu.dot_dimension_numbers<[2], [1], [1], [2], [0, 0, 0, 1, 1, 2], [0], [0]>} : vector<2x8x8xf32>, vector<2x8x8xf32>, vector<2x8x8xf32> -> vector<2x8x8xf32>
    "tpu.trace_stop"() : () -> ()
    %271 = vector.shape_cast %270 : vector<2x8x8xf32> to vector<16x8xf32>
    %272 = vector.extract_strided_slice %182 {offsets = [24, 0], sizes = [8, 32], strides = [1, 1]} : vector<32x32xf32> to vector<8x32xf32>
    %cst_109 = arith.constant dense<0.000000e+00> : vector<16x32xf32>
    %273 = tpu.matmul %271, %272, %cst_109 {dimension_numbers = #tpu.dot_dimension_numbers<[1], [0], [0], [1], [0, 0, 1, 1], [], []>} : vector<16x8xf32>, vector<8x32xf32>, vector<16x32xf32> -> vector<16x32xf32>
    %274 = arith.addf %254, %273 : vector<16x32xf32>
    %275 = vector.broadcast %184 : vector<1x32xf32> to vector<16x32xf32>
    %276 = arith.addf %274, %275 : vector<16x32xf32>
    %277 = arith.addf %176, %276 : vector<16x32xf32>
    %c1_110 = arith.constant 1 : index
    %c0_111 = arith.constant 0 : index
    %c0_112 = arith.constant 0 : index
    %278 = vector.load %arg7[%c1_110, %c0_111, %c0_112] : memref<2x1x32xf32, #tpu.memory_space<vmem>>, vector<1x1x32xf32>
    %279 = vector.shape_cast %278 : vector<1x1x32xf32> to vector<1x32xf32>
    %c1_113 = arith.constant 1 : index
    %c0_114 = arith.constant 0 : index
    %c0_115 = arith.constant 0 : index
    %280 = vector.load %arg8[%c1_113, %c0_114, %c0_115] : memref<2x1x32xf32, #tpu.memory_space<vmem>>, vector<1x1x32xf32>
    %281 = vector.shape_cast %280 : vector<1x1x32xf32> to vector<1x32xf32>
    %cst_116 = arith.constant dense<0.000000e+00> : vector<16xf32>
    %282 = vector.multi_reduction <add>, %277, %cst_116 [1] : vector<16x32xf32> to vector<16xf32>
    %283 = vector.shape_cast %282 : vector<16xf32> to vector<16x1xf32>
    %cst_117 = arith.constant 3.200000e+01 : f32
    %284 = vector.broadcast %cst_117 : f32 to vector<16x1xf32>
    %285 = arith.divf %283, %284 : vector<16x1xf32>
    %286 = vector.broadcast %285 : vector<16x1xf32> to vector<16x32xf32>
    %287 = arith.subf %277, %286 : vector<16x32xf32>
    %288 = arith.mulf %287, %287 : vector<16x32xf32>
    %cst_118 = arith.constant dense<0.000000e+00> : vector<16xf32>
    %289 = vector.multi_reduction <add>, %288, %cst_118 [1] : vector<16x32xf32> to vector<16xf32>
    %290 = vector.shape_cast %289 : vector<16xf32> to vector<16x1xf32>
    %cst_119 = arith.constant 3.200000e+01 : f32
    %291 = vector.broadcast %cst_119 : f32 to vector<16x1xf32>
    %292 = arith.divf %290, %291 : vector<16x1xf32>
    %cst_120 = arith.constant 9.99999974E-6 : f32
    %293 = vector.broadcast %cst_120 : f32 to vector<16x1xf32>
    %294 = arith.addf %292, %293 : vector<16x1xf32>
    %295 = math.rsqrt %294 : vector<16x1xf32>
    %296 = vector.broadcast %285 : vector<16x1xf32> to vector<16x32xf32>
    %297 = arith.subf %277, %296 : vector<16x32xf32>
    %298 = vector.broadcast %295 : vector<16x1xf32> to vector<16x32xf32>
    %299 = arith.mulf %297, %298 : vector<16x32xf32>
    %300 = vector.broadcast %279 : vector<1x32xf32> to vector<16x32xf32>
    %301 = arith.mulf %299, %300 : vector<16x32xf32>
    %302 = vector.broadcast %281 : vector<1x32xf32> to vector<16x32xf32>
    %303 = arith.addf %301, %302 : vector<16x32xf32>
    %c1_121 = arith.constant 1 : index
    %c0_122 = arith.constant 0 : index
    %c0_123 = arith.constant 0 : index
    %304 = vector.load %arg9[%c1_121, %c0_122, %c0_123] : memref<2x32x64xf32, #tpu.memory_space<vmem>>, vector<1x32x64xf32>
    %305 = vector.shape_cast %304 : vector<1x32x64xf32> to vector<32x64xf32>
    %cst_124 = arith.constant dense<0.000000e+00> : vector<16x64xf32>
    %306 = tpu.matmul %303, %305, %cst_124 {dimension_numbers = #tpu.dot_dimension_numbers<[1], [0], [0], [1], [0, 0, 1, 1], [], []>} : vector<16x32xf32>, vector<32x64xf32>, vector<16x64xf32> -> vector<16x64xf32>
    %c1_125 = arith.constant 1 : index
    %c0_126 = arith.constant 0 : index
    %c0_127 = arith.constant 0 : index
    %307 = vector.load %arg10[%c1_125, %c0_126, %c0_127] : memref<2x1x64xf32, #tpu.memory_space<vmem>>, vector<1x1x64xf32>
    %308 = vector.shape_cast %307 : vector<1x1x64xf32> to vector<1x64xf32>
    %309 = vector.broadcast %308 : vector<1x64xf32> to vector<16x64xf32>
    %310 = arith.addf %306, %309 : vector<16x64xf32>
    %cst_128 = arith.constant 0.000000e+00 : f32
    %311 = vector.broadcast %cst_128 : f32 to vector<16x64xf32>
    %312 = arith.maximumf %310, %311 : vector<16x64xf32>
    %c1_129 = arith.constant 1 : index
    %c0_130 = arith.constant 0 : index
    %c0_131 = arith.constant 0 : index
    %313 = vector.load %arg11[%c1_129, %c0_130, %c0_131] : memref<2x64x32xf32, #tpu.memory_space<vmem>>, vector<1x64x32xf32>
    %314 = vector.shape_cast %313 : vector<1x64x32xf32> to vector<64x32xf32>
    %cst_132 = arith.constant dense<0.000000e+00> : vector<16x32xf32>
    %315 = tpu.matmul %312, %314, %cst_132 {dimension_numbers = #tpu.dot_dimension_numbers<[1], [0], [0], [1], [0, 0, 1, 1], [], []>} : vector<16x64xf32>, vector<64x32xf32>, vector<16x32xf32> -> vector<16x32xf32>
    %c1_133 = arith.constant 1 : index
    %c0_134 = arith.constant 0 : index
    %c0_135 = arith.constant 0 : index
    %316 = vector.load %arg12[%c1_133, %c0_134, %c0_135] : memref<2x1x32xf32, #tpu.memory_space<vmem>>, vector<1x1x32xf32>
    %317 = vector.shape_cast %316 : vector<1x1x32xf32> to vector<1x32xf32>
    %318 = vector.broadcast %317 : vector<1x32xf32> to vector<16x32xf32>
    %319 = arith.addf %315, %318 : vector<16x32xf32>
    %320 = arith.addf %303, %319 : vector<16x32xf32>
    %c1_136 = arith.constant 1 : index
    %c0_137 = arith.constant 0 : index
    %c0_138 = arith.constant 0 : index
    %321 = vector.load %arg13[%c1_136, %c0_137, %c0_138] : memref<2x1x32xf32, #tpu.memory_space<vmem>>, vector<1x1x32xf32>
    %322 = vector.shape_cast %321 : vector<1x1x32xf32> to vector<1x32xf32>
    %c1_139 = arith.constant 1 : index
    %c0_140 = arith.constant 0 : index
    %c0_141 = arith.constant 0 : index
    %323 = vector.load %arg14[%c1_139, %c0_140, %c0_141] : memref<2x1x32xf32, #tpu.memory_space<vmem>>, vector<1x1x32xf32>
    %324 = vector.shape_cast %323 : vector<1x1x32xf32> to vector<1x32xf32>
    %cst_142 = arith.constant dense<0.000000e+00> : vector<16xf32>
    %325 = vector.multi_reduction <add>, %320, %cst_142 [1] : vector<16x32xf32> to vector<16xf32>
    %326 = vector.shape_cast %325 : vector<16xf32> to vector<16x1xf32>
    %cst_143 = arith.constant 3.200000e+01 : f32
    %327 = vector.broadcast %cst_143 : f32 to vector<16x1xf32>
    %328 = arith.divf %326, %327 : vector<16x1xf32>
    %329 = vector.broadcast %328 : vector<16x1xf32> to vector<16x32xf32>
    %330 = arith.subf %320, %329 : vector<16x32xf32>
    %331 = arith.mulf %330, %330 : vector<16x32xf32>
    %cst_144 = arith.constant dense<0.000000e+00> : vector<16xf32>
    %332 = vector.multi_reduction <add>, %331, %cst_144 [1] : vector<16x32xf32> to vector<16xf32>
    %333 = vector.shape_cast %332 : vector<16xf32> to vector<16x1xf32>
    %cst_145 = arith.constant 3.200000e+01 : f32
    %334 = vector.broadcast %cst_145 : f32 to vector<16x1xf32>
    %335 = arith.divf %333, %334 : vector<16x1xf32>
    %cst_146 = arith.constant 9.99999974E-6 : f32
    %336 = vector.broadcast %cst_146 : f32 to vector<16x1xf32>
    %337 = arith.addf %335, %336 : vector<16x1xf32>
    %338 = math.rsqrt %337 : vector<16x1xf32>
    %339 = vector.broadcast %328 : vector<16x1xf32> to vector<16x32xf32>
    %340 = arith.subf %320, %339 : vector<16x32xf32>
    %341 = vector.broadcast %338 : vector<16x1xf32> to vector<16x32xf32>
    %342 = arith.mulf %340, %341 : vector<16x32xf32>
    %343 = vector.broadcast %322 : vector<1x32xf32> to vector<16x32xf32>
    %344 = arith.mulf %342, %343 : vector<16x32xf32>
    %345 = vector.broadcast %324 : vector<1x32xf32> to vector<16x32xf32>
    %346 = arith.addf %344, %345 : vector<16x32xf32>
    %c0_147 = arith.constant 0 : index
    %c0_148 = arith.constant 0 : index
    %347 = vector.load %arg15[%c0_147, %c0_148] : memref<1x32xf32, #tpu.memory_space<vmem>>, vector<1x32xf32>
    %c0_149 = arith.constant 0 : index
    %c0_150 = arith.constant 0 : index
    %348 = vector.load %arg16[%c0_149, %c0_150] : memref<1x32xf32, #tpu.memory_space<vmem>>, vector<1x32xf32>
    %cst_151 = arith.constant dense<0.000000e+00> : vector<16xf32>
    %349 = vector.multi_reduction <add>, %346, %cst_151 [1] : vector<16x32xf32> to vector<16xf32>
    %350 = vector.shape_cast %349 : vector<16xf32> to vector<16x1xf32>
    %cst_152 = arith.constant 3.200000e+01 : f32
    %351 = vector.broadcast %cst_152 : f32 to vector<16x1xf32>
    %352 = arith.divf %350, %351 : vector<16x1xf32>
    %353 = vector.broadcast %352 : vector<16x1xf32> to vector<16x32xf32>
    %354 = arith.subf %346, %353 : vector<16x32xf32>
    %355 = arith.mulf %354, %354 : vector<16x32xf32>
    %cst_153 = arith.constant dense<0.000000e+00> : vector<16xf32>
    %356 = vector.multi_reduction <add>, %355, %cst_153 [1] : vector<16x32xf32> to vector<16xf32>
    %357 = vector.shape_cast %356 : vector<16xf32> to vector<16x1xf32>
    %cst_154 = arith.constant 3.200000e+01 : f32
    %358 = vector.broadcast %cst_154 : f32 to vector<16x1xf32>
    %359 = arith.divf %357, %358 : vector<16x1xf32>
    %cst_155 = arith.constant 9.99999974E-6 : f32
    %360 = vector.broadcast %cst_155 : f32 to vector<16x1xf32>
    %361 = arith.addf %359, %360 : vector<16x1xf32>
    %362 = math.rsqrt %361 : vector<16x1xf32>
    %363 = vector.broadcast %352 : vector<16x1xf32> to vector<16x32xf32>
    %364 = arith.subf %346, %363 : vector<16x32xf32>
    %365 = vector.broadcast %362 : vector<16x1xf32> to vector<16x32xf32>
    %366 = arith.mulf %364, %365 : vector<16x32xf32>
    %367 = vector.broadcast %347 : vector<1x32xf32> to vector<16x32xf32>
    %368 = arith.mulf %366, %367 : vector<16x32xf32>
    %369 = vector.broadcast %348 : vector<1x32xf32> to vector<16x32xf32>
    %370 = arith.addf %368, %369 : vector<16x32xf32>
    %c0_156 = arith.constant 0 : index
    %c0_157 = arith.constant 0 : index
    %371 = vector.load %arg17[%c0_156, %c0_157] : memref<16x32xf32, #tpu.memory_space<vmem>>, vector<16x32xf32>
    tpu.vector_store %arg17[%c0_156, %c0_157], %370 {strides = array<i32>} : memref<16x32xf32, #tpu.memory_space<vmem>>, vector<16x32xf32>,
    return
  }
  func.func @transform_0(%arg0: i32) -> (i32, i32) {
    %c0_i32 = arith.constant 0 : i32
    %c0_i32_0 = arith.constant 0 : i32
    %c0_i32_1 = arith.constant 0 : i32
    return %c0_i32, %c0_i32_0 : i32, i32
  }
  func.func @transform_1(%arg0: i32) -> (i32, i32, i32) {
    %c0_i32 = arith.constant 0 : i32
    %c0_i32_0 = arith.constant 0 : i32
    %c0_i32_1 = arith.constant 0 : i32
    %c0_i32_2 = arith.constant 0 : i32
    return %c0_i32, %c0_i32_0, %c0_i32_1 : i32, i32, i32
  }
  func.func @transform_2(%arg0: i32) -> (i32, i32, i32) {
    %c0_i32 = arith.constant 0 : i32
    %c0_i32_0 = arith.constant 0 : i32
    %c0_i32_1 = arith.constant 0 : i32
    %c0_i32_2 = arith.constant 0 : i32
    return %c0_i32, %c0_i32_0, %c0_i32_1 : i32, i32, i32
  }
  func.func @transform_3(%arg0: i32) -> (i32, i32, i32) {
    %c0_i32 = arith.constant 0 : i32
    %c0_i32_0 = arith.constant 0 : i32
    %c0_i32_1 = arith.constant 0 : i32
    %c0_i32_2 = arith.constant 0 : i32
    return %c0_i32, %c0_i32_0, %c0_i32_1 : i32, i32, i32
  }
  func.func @transform_4(%arg0: i32) -> (i32, i32, i32) {
    %c0_i32 = arith.constant 0 : i32
    %c0_i32_0 = arith.constant 0 : i32
    %c0_i32_1 = arith.constant 0 : i32
    %c0_i32_2 = arith.constant 0 : i32
    return %c0_i32, %c0_i32_0, %c0_i32_1 : i32, i32, i32
  }
  func.func @transform_5(%arg0: i32) -> (i32, i32, i32) {
    %c0_i32 = arith.constant 0 : i32
    %c0_i32_0 = arith.constant 0 : i32
    %c0_i32_1 = arith.constant 0 : i32
    %c0_i32_2 = arith.constant 0 : i32
    return %c0_i32, %c0_i32_0, %c0_i32_1 : i32, i32, i32
  }
  func.func @transform_6(%arg0: i32) -> (i32, i32, i32) {
    %c0_i32 = arith.constant 0 : i32
    %c0_i32_0 = arith.constant 0 : i32
    %c0_i32_1 = arith.constant 0 : i32
    %c0_i32_2 = arith.constant 0 : i32
    return %c0_i32, %c0_i32_0, %c0_i32_1 : i32, i32, i32
  }
  func.func @transform_7(%arg0: i32) -> (i32, i32, i32) {
    %c0_i32 = arith.constant 0 : i32
    %c0_i32_0 = arith.constant 0 : i32
    %c0_i32_1 = arith.constant 0 : i32
    %c0_i32_2 = arith.constant 0 : i32
    return %c0_i32, %c0_i32_0, %c0_i32_1 : i32, i32, i32
  }
  func.func @transform_8(%arg0: i32) -> (i32, i32, i32) {
    %c0_i32 = arith.constant 0 : i32
    %c0_i32_0 = arith.constant 0 : i32
    %c0_i32_1 = arith.constant 0 : i32
    %c0_i32_2 = arith.constant 0 : i32
    return %c0_i32, %c0_i32_0, %c0_i32_1 : i32, i32, i32
  }
  func.func @transform_9(%arg0: i32) -> (i32, i32, i32) {
    %c0_i32 = arith.constant 0 : i32
    %c0_i32_0 = arith.constant 0 : i32
    %c0_i32_1 = arith.constant 0 : i32
    %c0_i32_2 = arith.constant 0 : i32
    return %c0_i32, %c0_i32_0, %c0_i32_1 : i32, i32, i32
  }
  func.func @transform_10(%arg0: i32) -> (i32, i32, i32) {
    %c0_i32 = arith.constant 0 : i32
    %c0_i32_0 = arith.constant 0 : i32
    %c0_i32_1 = arith.constant 0 : i32
    %c0_i32_2 = arith.constant 0 : i32
    return %c0_i32, %c0_i32_0, %c0_i32_1 : i32, i32, i32
  }
  func.func @transform_11(%arg0: i32) -> (i32, i32, i32) {
    %c0_i32 = arith.constant 0 : i32
    %c0_i32_0 = arith.constant 0 : i32
    %c0_i32_1 = arith.constant 0 : i32
    %c0_i32_2 = arith.constant 0 : i32
    return %c0_i32, %c0_i32_0, %c0_i32_1 : i32, i32, i32
  }
  func.func @transform_12(%arg0: i32) -> (i32, i32, i32) {
    %c0_i32 = arith.constant 0 : i32
    %c0_i32_0 = arith.constant 0 : i32
    %c0_i32_1 = arith.constant 0 : i32
    %c0_i32_2 = arith.constant 0 : i32
    return %c0_i32, %c0_i32_0, %c0_i32_1 : i32, i32, i32
  }
  func.func @transform_13(%arg0: i32) -> (i32, i32, i32) {
    %c0_i32 = arith.constant 0 : i32
    %c0_i32_0 = arith.constant 0 : i32
    %c0_i32_1 = arith.constant 0 : i32
    %c0_i32_2 = arith.constant 0 : i32
    return %c0_i32, %c0_i32_0, %c0_i32_1 : i32, i32, i32
  }
  func.func @transform_14(%arg0: i32) -> (i32, i32) {
    %c0_i32 = arith.constant 0 : i32
    %c0_i32_0 = arith.constant 0 : i32
    %c0_i32_1 = arith.constant 0 : i32
    return %c0_i32, %c0_i32_0 : i32, i32
  }
  func.func @transform_15(%arg0: i32) -> (i32, i32) {
    %c0_i32 = arith.constant 0 : i32
    %c0_i32_0 = arith.constant 0 : i32
    %c0_i32_1 = arith.constant 0 : i32
    return %c0_i32, %c0_i32_0 : i32, i32
  }
  func.func @transform_16(%arg0: i32) -> (i32, i32) {
    %c0_i32 = arith.constant 0 : i32
    %c0_i32_0 = arith.constant 0 : i32
    %c0_i32_1 = arith.constant 0 : i32
    return %c0_i32, %c0_i32_0 : i32, i32
  }
}

</mosaic_0001>

<llo_original>
// kernel: encoder_forward.1
$region0: #{encoder_forward.1}
  #allocation0 [shape = 'u32[]', space=smem, size = 0x4, offset = 0x4, fixed_abs, tag = 'smem constant byte address 0x4 - core index']
  #allocation1 [shape = 'u32[144,128]{1,0:T(1,128)}', space=vmem, size = 0x12000, scoped, tag = 'internal scratch']
  %s0 = inlined_call_operand.hbm [shape: f32[16,32], index: 0, kind: input, shape index: {}]
  %s1 = inlined_call_operand.hbm [shape: f32[2,8,8], index: 1, kind: input, shape index: {}]
  %s2 = inlined_call_operand.vmem [shape: f32[2,32,96], index: 2, kind: input, shape index: {}]
  %s3 = inlined_call_operand.vmem [shape: f32[2,1,96], index: 3, kind: input, shape index: {}]
  %s4 = inlined_call_operand.vmem [shape: f32[2,32,32], index: 4, kind: input, shape index: {}]
  %s5 = inlined_call_operand.vmem [shape: f32[2,1,32], index: 5, kind: input, shape index: {}]
  %s6 = inlined_call_operand.vmem [shape: f32[2,1,32], index: 6, kind: input, shape index: {}]
  %s7 = inlined_call_operand.hbm [shape: f32[2,1,32], index: 7, kind: input, shape index: {}]
  %s8 = inlined_call_operand.vmem [shape: f32[2,32,64], index: 8, kind: input, shape index: {}]
  %s9 = inlined_call_operand.hbm [shape: f32[2,1,64], index: 9, kind: input, shape index: {}]
  %s10 = inlined_call_operand.vmem [shape: f32[2,64,32], index: 10, kind: input, shape index: {}]
  %s11 = inlined_call_operand.hbm [shape: f32[2,1,32], index: 11, kind: input, shape index: {}]
  %s12 = inlined_call_operand.vmem [shape: f32[2,1,32], index: 12, kind: input, shape index: {}]
  %s13 = inlined_call_operand.vmem [shape: f32[2,1,32], index: 13, kind: input, shape index: {}]
  %s14 = inlined_call_operand.vmem [shape: f32[1,32], index: 14, kind: input, shape index: {}]
  %s15 = inlined_call_operand.vmem [shape: f32[1,32], index: 15, kind: input, shape index: {}]
  %s16 = inlined_call_operand.hbm [shape: f32[16,32], index: 16, kind: output, shape index: {}]
  %s17 = sld [smem:[#allocation0]]
  $region94: #{encoder_forward.1} parent=0
    _
  %s19 = ssub.s32 1, %s17
  %s20 = scalar_select 0, %s19, %s17
  $region1: #{encoder_forward.1} parent=0
    #allocation2 [shape = 'u8[8192]{0}', space=vmem, size = 0x2000, scoped, tag = 'input window, operand 0, single buffered']
    #allocation3 [shape = 's32[1]{0}', space=sflag, size = 0x4, scoped, tag = 'scoped memory for encoder_forward.1']
    #allocation4 [shape = 's32[1]{0}', space=sflag, size = 0x4, scoped, tag = 'scoped memory for encoder_forward.1']
    #allocation5 [shape = 'u8[8192]{0}', space=vmem, size = 0x2000, scoped, tag = 'input window, operand 1, single buffered']
    #allocation6 [shape = 's32[1]{0}', space=sflag, size = 0x4, scoped, tag = 'scoped memory for encoder_forward.1']
    #allocation7 [shape = 'u8[1024]{0}', space=vmem, size = 0x400, scoped, tag = 'input window, operand 7, single buffered']
    #allocation8 [shape = 'u8[1024]{0}', space=vmem, size = 0x400, scoped, tag = 'input window, operand 9, single buffered']
    #allocation9 [shape = 's32[1]{0}', space=sflag, size = 0x4, scoped, tag = 'scoped memory for encoder_forward.1']
    #allocation10 [shape = 'u8[1024]{0}', space=vmem, size = 0x400, scoped, tag = 'input window, operand 11, single buffered']
    #allocation11 [shape = 'u8[8192]{0}', space=vmem, size = 0x2000, scoped, tag = 'output window, operand 0, single buffered']
    %21 = vsyncpa [#allocation3], 0
    %22 = vsyncpa [#allocation6], 0
    %23 = vsyncpa [#allocation9], 0
    %24 = vsyncpa [#allocation4], 0
    // Predicated region
    $region2: #{encoder_forward.1} parent=1 // pred_check
      _
    $region3: #{encoder_forward.1} parent=1 // pred_check_branch
      %26 = sbr.rel (0) target = $region5
    $region4: #{encoder_forward.1} parent=1 // pred_region
      %s28 = ssub.s32 256, 256
      %29 = vsyncadd [#allocation3], %s28
      %s30 = sshll.u32 [#allocation2], 4
      %s31 = int_to_ptr.vmem [resolvable:$true] %s30
      %36 = dma.hbm_to_vmem [thread:$0]  %s0, 256, %s31, [#allocation3], 128, 128, 8
    $region5: #{encoder_forward.1} parent=1 // pred_fallthru
      _
    // Predicated region
    $region6: #{encoder_forward.1} parent=1 // pred_check
      _
    $region7: #{encoder_forward.1} parent=1 // pred_check_branch
      %38 = sbr.rel (0) target = $region9
    $region8: #{encoder_forward.1} parent=1 // pred_region
      %s40 = ssub.s32 256, 256
      %41 = vsyncadd [#allocation6], %s40
      %s42 = sshll.u32 [#allocation5], 4
      %s43 = int_to_ptr.vmem [resolvable:$true] %s42
      %48 = dma.hbm_to_vmem [thread:$0]  %s1, 256, %s43, [#allocation6], 128, 128, 8
    $region9: #{encoder_forward.1} parent=1 // pred_fallthru
      _
    // Predicated region
    $region10: #{encoder_forward.1} parent=1 // pred_check
      _
    $region11: #{encoder_forward.1} parent=1 // pred_check_branch
      %50 = sbr.rel (0) target = $region13
    $region12: #{encoder_forward.1} parent=1 // pred_region
      _
    $region13: #{encoder_forward.1} parent=1 // pred_fallthru
      _
    // Predicated region
    $region14: #{encoder_forward.1} parent=1 // pred_check
      _
    $region15: #{encoder_forward.1} parent=1 // pred_check_branch
      %52 = sbr.rel (0) target = $region17
    $region16: #{encoder_forward.1} parent=1 // pred_region
      _
    $region17: #{encoder_forward.1} parent=1 // pred_fallthru
      _
    // Predicated region
    $region18: #{encoder_forward.1} parent=1 // pred_check
      _
    $region19: #{encoder_forward.1} parent=1 // pred_check_branch
      %54 = sbr.rel (0) target = $region21
    $region20: #{encoder_forward.1} parent=1 // pred_region
      _
    $region21: #{encoder_forward.1} parent=1 // pred_fallthru
      _
    // Predicated region
    $region22: #{encoder_forward.1} parent=1 // pred_check
      _
    $region23: #{encoder_forward.1} parent=1 // pred_check_branch
      %56 = sbr.rel (0) target = $region25
    $region24: #{encoder_forward.1} parent=1 // pred_region
      _
    $region25: #{encoder_forward.1} parent=1 // pred_fallthru
      _
    // Predicated region
    $region26: #{encoder_forward.1} parent=1 // pred_check
      _
    $region27: #{encoder_forward.1} parent=1 // pred_check_branch
      %58 = sbr.rel (0) target = $region29
    $region28: #{encoder_forward.1} parent=1 // pred_region
      _
    $region29: #{encoder_forward.1} parent=1 // pred_fallthru
      _
    // Predicated region
    $region30: #{encoder_forward.1} parent=1 // pred_check
      _
    $region31: #{encoder_forward.1} parent=1 // pred_check_branch
      %60 = sbr.rel (0) target = $region33
    $region32: #{encoder_forward.1} parent=1 // pred_region
      %s62 = ssub.s32 32, 32
      %63 = vsyncadd [#allocation6], %s62
      %s64 = sshll.u32 [#allocation7], 4
      %s65 = int_to_ptr.vmem [resolvable:$true] %s64
      %70 = dma.hbm_to_vmem [thread:$0]  %s7, 32, %s65, [#allocation6], 16, 16, 1
    $region33: #{encoder_forward.1} parent=1 // pred_fallthru
      _
    // Predicated region
    $region34: #{encoder_forward.1} parent=1 // pred_check
      _
    $region35: #{encoder_forward.1} parent=1 // pred_check_branch
      %72 = sbr.rel (0) target = $region37
    $region36: #{encoder_forward.1} parent=1 // pred_region
      _
    $region37: #{encoder_forward.1} parent=1 // pred_fallthru
      _
    // Predicated region
    $region38: #{encoder_forward.1} parent=1 // pred_check
      _
    $region39: #{encoder_forward.1} parent=1 // pred_check_branch
      %74 = sbr.rel (0) target = $region41
    $region40: #{encoder_forward.1} parent=1 // pred_region
      %s76 = ssub.s32 32, 32
      %77 = vsyncadd [#allocation9], %s76
      %s78 = sshll.u32 [#allocation8], 4
      %s79 = int_to_ptr.vmem [resolvable:$true] %s78
      %84 = dma.hbm_to_vmem [thread:$0]  %s9, 32, %s79, [#allocation9], 16, 16, 1
    $region41: #{encoder_forward.1} parent=1 // pred_fallthru
      _
    // Predicated region
    $region42: #{encoder_forward.1} parent=1 // pred_check
      _
    $region43: #{encoder_forward.1} parent=1 // pred_check_branch
      %86 = sbr.rel (0) target = $region45
    $region44: #{encoder_forward.1} parent=1 // pred_region
      _
    $region45: #{encoder_forward.1} parent=1 // pred_fallthru
      _
    // Predicated region
    $region46: #{encoder_forward.1} parent=1 // pred_check
      _
    $region47: #{encoder_forward.1} parent=1 // pred_check_branch
      %88 = sbr.rel (0) target = $region49
    $region48: #{encoder_forward.1} parent=1 // pred_region
      %s90 = ssub.s32 32, 32
      %91 = vsyncadd [#allocation9], %s90
      %s92 = sshll.u32 [#allocation10], 4
      %s93 = int_to_ptr.vmem [resolvable:$true] %s92
      %98 = dma.hbm_to_vmem [thread:$0]  %s11, 32, %s93, [#allocation9], 16, 16, 1
    $region49: #{encoder_forward.1} parent=1 // pred_fallthru
      _
    // Predicated region
    $region50: #{encoder_forward.1} parent=1 // pred_check
      _
    $region51: #{encoder_forward.1} parent=1 // pred_check_branch
      %100 = sbr.rel (0) target = $region53
    $region52: #{encoder_forward.1} parent=1 // pred_region
      _
    $region53: #{encoder_forward.1} parent=1 // pred_fallthru
      _
    // Predicated region
    $region54: #{encoder_forward.1} parent=1 // pred_check
      _
    $region55: #{encoder_forward.1} parent=1 // pred_check_branch
      %102 = sbr.rel (0) target = $region57
    $region56: #{encoder_forward.1} parent=1 // pred_region
      _
    $region57: #{encoder_forward.1} parent=1 // pred_fallthru
      _
    // Predicated region
    $region58: #{encoder_forward.1} parent=1 // pred_check
      _
    $region59: #{encoder_forward.1} parent=1 // pred_check_branch
      %104 = sbr.rel (0) target = $region61
    $region60: #{encoder_forward.1} parent=1 // pred_region
      _
    $region61: #{encoder_forward.1} parent=1 // pred_fallthru
      _
    // Predicated region
    $region62: #{encoder_forward.1} parent=1 // pred_check
      _
    $region63: #{encoder_forward.1} parent=1 // pred_check_branch
      %106 = sbr.rel (0) target = $region65
    $region64: #{encoder_forward.1} parent=1 // pred_region
      _
    $region65: #{encoder_forward.1} parent=1 // pred_fallthru
      _
    // Predicated region
    $region66: #{encoder_forward.1} parent=1 // pred_check
      _
    $region67: #{encoder_forward.1} parent=1 // pred_check_branch
      %108 = sbr.rel (0) target = $region69
    $region68: #{encoder_forward.1} parent=1 // pred_region
      %109 = dma.done [#allocation3], 256
    $region69: #{encoder_forward.1} parent=1 // pred_fallthru
      _
    // Predicated region
    $region70: #{encoder_forward.1} parent=1 // pred_check
      _
    $region71: #{encoder_forward.1} parent=1 // pred_check_branch
      %111 = sbr.rel (0) target = $region73
    $region72: #{encoder_forward.1} parent=1 // pred_region
      %112 = dma.done [#allocation6], 256
    $region73: #{encoder_forward.1} parent=1 // pred_fallthru
      _
    // Predicated region
    $region74: #{encoder_forward.1} parent=1 // pred_check
      _
    $region75: #{encoder_forward.1} parent=1 // pred_check_branch
      %114 = sbr.rel (0) target = $region77
    $region76: #{encoder_forward.1} parent=1 // pred_region
      %115 = dma.done [#allocation6], 32
    $region77: #{encoder_forward.1} parent=1 // pred_fallthru
      _
    // Predicated region
    $region78: #{encoder_forward.1} parent=1 // pred_check
      _
    $region79: #{encoder_forward.1} parent=1 // pred_check_branch
      %117 = sbr.rel (0) target = $region81
    $region80: #{encoder_forward.1} parent=1 // pred_region
      %118 = dma.done [#allocation9], 32
    $region81: #{encoder_forward.1} parent=1 // pred_fallthru
      _
    // Predicated region
    $region82: #{encoder_forward.1} parent=1 // pred_check
      _
    $region83: #{encoder_forward.1} parent=1 // pred_check_branch
      %120 = sbr.rel (0) target = $region85
    $region84: #{encoder_forward.1} parent=1 // pred_region
      %121 = dma.done [#allocation9], 32
    $region85: #{encoder_forward.1} parent=1 // pred_fallthru
      _
    %v122 = vld [vmem:[#allocation2] sm:$0xff]
    %v123 = vld [vmem:[#allocation2 + $0x8] sm:$0xff]
    %v124 = vld [vmem:[#allocation5] sm:$0xff]
    %v125 = vld [vmem:[#allocation5 + $0x8] sm:$0xff]
    %vm126 = vcmp.gt.f32.partialorder %v124, 0.0
    %vm127 = vcmp.gt.f32.partialorder %v125, 0.0
    %v128 = vsel %vm126, 0.0, -1e+09
    %v129 = vsel %vm127, 0.0, -1e+09
    %v130 = vld [vmem:[%s2] sm:$0xff]
    %v131 = vld [vmem:[%s2 + $0x8] sm:$0xff]
    %v132 = vld [vmem:[%s2 + $0x10] sm:$0xff]
    %v133 = vld [vmem:[%s2 + $0x18] sm:$0xff]
    %v134 = vld [vmem:[%s3] sm:$0x1]
    %v135 = vld [vmem:[%s4] sm:$0xff]
    %v136 = vld [vmem:[%s4 + $0x8] sm:$0xff]
    %v137 = vld [vmem:[%s4 + $0x10] sm:$0xff]
    %v138 = vld [vmem:[%s4 + $0x18] sm:$0xff]
    %v139 = vld [vmem:[%s5] sm:$0x1]
    %v141 = vlaneseq
    %v142 = vshrl.u32 %v141, 7
    %v143 = vsub.s32 0, %v142
    %v144 = vrot.slane %v134, %v143
    %vm146 = vcmask 261120
    %v148 = vsel %vm146, %v122, 0
    %v151 = vsel %vm146, %v123, 0
    %153 = vmatprep.subr.mxu0 0.0
    %154 = vmatpush1.msra.mxu0 0.0
    %155 = vmatprep.subr.mxu0 0.0
    %156 = vmatpush1.msra.mxu0 0.0
    %157 = vmatprep.subr.mxu0 0.0
    %158 = vmatpush1.msra.mxu0 0.0
    %159 = vmatprep.subr.mxu0 0.0
    %160 = vmatpush1.msra.mxu0 0.0
    %161 = vmatprep.subr.mxu0 0.0
    %162 = vmatpush1.msra.mxu0 0.0
    %163 = vmatprep.subr.mxu0 0.0
    %164 = vmatpush1.msra.mxu0 0.0
    %165 = vmatprep.subr.mxu0 0.0
    %166 = vmatpush1.msra.mxu0 0.0
    %167 = vmatprep.subr.mxu0 0.0
    %168 = vmatpush1.msra.mxu0 0.0
    %169 = vmatprep.subr.mxu0 0.0
    %170 = vmatpush1.msra.mxu0 0.0
    %171 = vmatprep.subr.mxu0 0.0
    %172 = vmatpush1.msra.mxu0 0.0
    %173 = vmatprep.subr.mxu0 0.0
    %174 = vmatpush1.msra.mxu0 0.0
    %175 = vmatprep.subr.mxu0 0.0
    %176 = vmatpush1.msra.mxu0 0.0
    %177 = vmatprep.subr.mxu0 0.0
    %178 = vmatpush1.msra.mxu0 %v133
    %179 = vmatprep.subr.mxu0 0.0
    %180 = vmatpush1.msra.mxu0 %v132
    %181 = vmatprep.subr.mxu0 0.0
    %182 = vmatpush1.msra.mxu0 %v131
    %183 = vmatprep.subr.mxu0 0.0
    %184 = vmatpush1.msra.mxu0 %v130
    %185 = vmatprep.subr.mxu0 0.0
    %186 = vmatpush2.msra.mxu0 0.0
    %187 = vmatprep.subr.mxu0 0.0
    %188 = vmatpush2.msra.mxu0 0.0
    %189 = vmatprep.subr.mxu0 0.0
    %190 = vmatpush2.msra.mxu0 0.0
    %191 = vmatprep.subr.mxu0 0.0
    %192 = vmatpush2.msra.mxu0 0.0
    %193 = vmatprep.subr.mxu0 0.0
    %194 = vmatpush2.msra.mxu0 0.0
    %195 = vmatprep.subr.mxu0 0.0
    %196 = vmatpush2.msra.mxu0 0.0
    %197 = vmatprep.subr.mxu0 0.0
    %198 = vmatpush2.msra.mxu0 0.0
    %199 = vmatprep.subr.mxu0 0.0
    %200 = vmatpush2.msra.mxu0 0.0
    %201 = vmatprep.subr.mxu0 0.0
    %202 = vmatpush2.msra.mxu0 0.0
    %203 = vmatprep.subr.mxu0 0.0
    %204 = vmatpush2.msra.mxu0 0.0
    %205 = vmatprep.subr.mxu0 0.0
    %206 = vmatpush2.msra.mxu0 0.0
    %207 = vmatprep.subr.mxu0 0.0
    %208 = vmatpush2.msra.mxu0 0.0
    %209 = vmatprep.subr.mxu0 0.0
    %210 = vmatpush2.msra.mxu0 0.0
    %211 = vmatprep.subr.mxu0 0.0
    %212 = vmatpush2.msra.mxu0 0.0
    %213 = vmatprep.subr.mxu0 0.0
    %214 = vmatpush2.msra.mxu0 0.0
    %215 = vmatprep.subr.mxu0 0.0
    %216 = vmatpush2.msra.mxu0 0.0
    %217 = vmatprep.mubr.f32.mxu0 0.0
    %218 = vmatmul.mubr.f32.gmra.mxu0 %v148
    %v219 = vpop.f32.mrf.mxu0
    %v220 = vadd.f32 %v144, %v219
    %v221 = vpop.f32.mrf.mxu0
    %222 = vmatprep.mubr.f32.mxu0 0.0
    %223 = vmatmul.mubr.f32.gmra.mxu0 %v151
    %v224 = vpop.f32.mrf.mxu0
    %v225 = vadd.f32 %v144, %v224
    %v226 = vpop.f32.mrf.mxu0
    %227 = vdwg.mxu0
    %229 = vrot.lane.b32.xlu0 %v220, 96
    %v230 = vpop.permute.xlu0 %229
    %vm231 = vcmask 64512
    %v232 = vsel %vm231, %v220, 0
    %v234 = vsel %vm231, %v230, 0
    %236 = vmatprep.subr.mxu0 0.0
    %237 = vmatpush1.xpose.msra.mxu0 0.0
    %238 = vmatprep.subr.mxu0 0.0
    %239 = vmatpush1.xpose.msra.mxu0 0.0
    %240 = vmatprep.subr.mxu0 0.0
    %241 = vmatpush1.xpose.msra.mxu0 0.0
    %242 = vmatprep.subr.mxu0 0.0
    %243 = vmatpush1.xpose.msra.mxu0 0.0
    %244 = vmatprep.subr.mxu0 0.0
    %245 = vmatpush1.xpose.msra.mxu0 0.0
    %246 = vmatprep.subr.mxu0 0.0
    %247 = vmatpush1.xpose.msra.mxu0 0.0
    %248 = vmatprep.subr.mxu0 0.0
    %249 = vmatpush1.xpose.msra.mxu0 0.0
    %250 = vmatprep.subr.mxu0 0.0
    %251 = vmatpush1.xpose.msra.mxu0 0.0
    %252 = vmatprep.subr.mxu0 0.0
    %253 = vmatpush1.xpose.msra.mxu0 0.0
    %254 = vmatprep.subr.mxu0 0.0
    %255 = vmatpush1.xpose.msra.mxu0 0.0
    %256 = vmatprep.subr.mxu0 0.0
    %257 = vmatpush1.xpose.msra.mxu0 0.0
    %258 = vmatprep.subr.mxu0 0.0
    %259 = vmatpush1.xpose.msra.mxu0 0.0
    %260 = vmatprep.subr.mxu0 0.0
    %261 = vmatpush1.xpose.msra.mxu0 0.0
    %262 = vmatprep.subr.mxu0 0.0
    %263 = vmatpush1.xpose.msra.mxu0 0.0
    %264 = vmatprep.subr.mxu0 0.0
    %265 = vmatpush1.xpose.msra.mxu0 0.0
    %266 = vmatprep.subr.mxu0 0.0
    %267 = vmatpush1.xpose.msra.mxu0 %v234
    %268 = vmatprep.subr.mxu0 0.0
    %269 = vmatpush2.xpose.msra.mxu0 0.0
    %270 = vmatprep.subr.mxu0 0.0
    %271 = vmatpush2.xpose.msra.mxu0 0.0
    %272 = vmatprep.subr.mxu0 0.0
    %273 = vmatpush2.xpose.msra.mxu0 0.0
    %274 = vmatprep.subr.mxu0 0.0
    %275 = vmatpush2.xpose.msra.mxu0 0.0
    %276 = vmatprep.subr.mxu0 0.0
    %277 = vmatpush2.xpose.msra.mxu0 0.0
    %278 = vmatprep.subr.mxu0 0.0
    %279 = vmatpush2.xpose.msra.mxu0 0.0
    %280 = vmatprep.subr.mxu0 0.0
    %281 = vmatpush2.xpose.msra.mxu0 0.0
    %282 = vmatprep.subr.mxu0 0.0
    %283 = vmatpush2.xpose.msra.mxu0 0.0
    %284 = vmatprep.subr.mxu0 0.0
    %285 = vmatpush2.xpose.msra.mxu0 0.0
    %286 = vmatprep.subr.mxu0 0.0
    %287 = vmatpush2.xpose.msra.mxu0 0.0
    %288 = vmatprep.subr.mxu0 0.0
    %289 = vmatpush2.xpose.msra.mxu0 0.0
    %290 = vmatprep.subr.mxu0 0.0
    %291 = vmatpush2.xpose.msra.mxu0 0.0
    %292 = vmatprep.subr.mxu0 0.0
    %293 = vmatpush2.xpose.msra.mxu0 0.0
    %294 = vmatprep.subr.mxu0 0.0
    %295 = vmatpush2.xpose.msra.mxu0 0.0
    %296 = vmatprep.subr.mxu0 0.0
    %297 = vmatpush2.xpose.msra.mxu0 0.0
    %298 = vmatprep.subr.mxu0 0.0
    %299 = vmatpush2.xpose.msra.mxu0 0.0
    %300 = vmatprep.mubr.f32.mxu0 0.0
    %301 = vmatmul.mubr.f32.gmra.mxu0 %v232
    %v302 = vpop.f32.mrf.mxu0
    %v303 = vadd.f32 %v128, %v302
    %v304 = vpop.f32.mrf.mxu0
    %305 = vdwg.mxu0
    %307 = vrot.lane.b32.xlu0 %v225, 96
    %v308 = vpop.permute.xlu0 %307
    %v309 = vsel %vm231, %v225, 0
    %v311 = vsel %vm231, %v308, 0
    %313 = vmatprep.subr.mxu0 0.0
    %314 = vmatpush1.xpose.msra.mxu0 0.0
    %315 = vmatprep.subr.mxu0 0.0
    %316 = vmatpush1.xpose.msra.mxu0 0.0
    %317 = vmatprep.subr.mxu0 0.0
    %318 = vmatpush1.xpose.msra.mxu0 0.0
    %319 = vmatprep.subr.mxu0 0.0
    %320 = vmatpush1.xpose.msra.mxu0 0.0
    %321 = vmatprep.subr.mxu0 0.0
    %322 = vmatpush1.xpose.msra.mxu0 0.0
    %323 = vmatprep.subr.mxu0 0.0
    %324 = vmatpush1.xpose.msra.mxu0 0.0
    %325 = vmatprep.subr.mxu0 0.0
    %326 = vmatpush1.xpose.msra.mxu0 0.0
    %327 = vmatprep.subr.mxu0 0.0
    %328 = vmatpush1.xpose.msra.mxu0 0.0
    %329 = vmatprep.subr.mxu0 0.0
    %330 = vmatpush1.xpose.msra.mxu0 0.0
    %331 = vmatprep.subr.mxu0 0.0
    %332 = vmatpush1.xpose.msra.mxu0 0.0
    %333 = vmatprep.subr.mxu0 0.0
    %334 = vmatpush1.xpose.msra.mxu0 0.0
    %335 = vmatprep.subr.mxu0 0.0
    %336 = vmatpush1.xpose.msra.mxu0 0.0
    %337 = vmatprep.subr.mxu0 0.0
    %338 = vmatpush1.xpose.msra.mxu0 0.0
    %339 = vmatprep.subr.mxu0 0.0
    %340 = vmatpush1.xpose.msra.mxu0 0.0
    %341 = vmatprep.subr.mxu0 0.0
    %342 = vmatpush1.xpose.msra.mxu0 0.0
    %343 = vmatprep.subr.mxu0 0.0
    %344 = vmatpush1.xpose.msra.mxu0 %v311
    %345 = vmatprep.subr.mxu0 0.0
    %346 = vmatpush2.xpose.msra.mxu0 0.0
    %347 = vmatprep.subr.mxu0 0.0
    %348 = vmatpush2.xpose.msra.mxu0 0.0
    %349 = vmatprep.subr.mxu0 0.0
    %350 = vmatpush2.xpose.msra.mxu0 0.0
    %351 = vmatprep.subr.mxu0 0.0
    %352 = vmatpush2.xpose.msra.mxu0 0.0
    %353 = vmatprep.subr.mxu0 0.0
    %354 = vmatpush2.xpose.msra.mxu0 0.0
    %355 = vmatprep.subr.mxu0 0.0
    %356 = vmatpush2.xpose.msra.mxu0 0.0
    %357 = vmatprep.subr.mxu0 0.0
    %358 = vmatpush2.xpose.msra.mxu0 0.0
    %359 = vmatprep.subr.mxu0 0.0
    %360 = vmatpush2.xpose.msra.mxu0 0.0
    %361 = vmatprep.subr.mxu0 0.0
    %362 = vmatpush2.xpose.msra.mxu0 0.0
    %363 = vmatprep.subr.mxu0 0.0
    %364 = vmatpush2.xpose.msra.mxu0 0.0
    %365 = vmatprep.subr.mxu0 0.0
    %366 = vmatpush2.xpose.msra.mxu0 0.0
    %367 = vmatprep.subr.mxu0 0.0
    %368 = vmatpush2.xpose.msra.mxu0 0.0
    %369 = vmatprep.subr.mxu0 0.0
    %370 = vmatpush2.xpose.msra.mxu0 0.0
    %371 = vmatprep.subr.mxu0 0.0
    %372 = vmatpush2.xpose.msra.mxu0 0.0
    %373 = vmatprep.subr.mxu0 0.0
    %374 = vmatpush2.xpose.msra.mxu0 0.0
    %375 = vmatprep.subr.mxu0 0.0
    %376 = vmatpush2.xpose.msra.mxu0 0.0
    %377 = vmatprep.mubr.f32.mxu0 0.0
    %378 = vmatmul.mubr.f32.gmra.mxu0 %v309
    %v379 = vpop.f32.mrf.mxu0
    %v380 = vadd.f32 %v129, %v379
    %v381 = vpop.f32.mrf.mxu0
    %382 = vdwg.mxu0
    %v383 = vsel %vm231, %v303, -inf
    %384 = vmax.xlane.f32.xlu0 %v383
    %v385 = vpop.xlane.xlu0 %384
    %v386 = vsel %vm231, %v380, -inf
    %387 = vmax.xlane.f32.xlu0 %v386
    %v388 = vpop.xlane.xlu0 %387
    %v389 = vsub.f32 %v303, %v385
    %v390 = vsub.f32 %v380, %v388
    %v391 = vmul.f32 %v389, 1.442695
    %v392 = vpow.pop %v391
    %v393 = vmul.f32 %v390, 1.442695
    %v394 = vpow.pop %v393
    %v395 = vsel %vm231, %v392, 0.0
    %396 = vadd.xlane.f32.xlu0 %v395
    %v397 = vpop.xlane.xlu0 %396
    %v398 = vsel %vm231, %v394, 0.0
    %399 = vadd.xlane.f32.xlu0 %v398
    %v400 = vpop.xlane.xlu0 %399
    %v401 = vrcp.pop %v397
    %v402 = vrcp.pop %v400
    %v403 = vmul.f32 %v392, %v401
    %v404 = vmul.f32 %v394, %v402
    %405 = vrot.lane.b32.xlu0 %v220, 64
    %v406 = vpop.permute.xlu0 %405
    %v409 = vsel %vm231, %v403, 0
    %411 = vmatprep.subr.mxu0 0.0
    %412 = vmatpush1.msra.mxu0 0.0
    %413 = vmatprep.subr.mxu0 0.0
    %414 = vmatpush1.msra.mxu0 0.0
    %415 = vmatprep.subr.mxu0 0.0
    %416 = vmatpush1.msra.mxu0 0.0
    %417 = vmatprep.subr.mxu0 0.0
    %418 = vmatpush1.msra.mxu0 0.0
    %419 = vmatprep.subr.mxu0 0.0
    %420 = vmatpush1.msra.mxu0 0.0
    %421 = vmatprep.subr.mxu0 0.0
    %422 = vmatpush1.msra.mxu0 0.0
    %423 = vmatprep.subr.mxu0 0.0
    %424 = vmatpush1.msra.mxu0 0.0
    %425 = vmatprep.subr.mxu0 0.0
    %426 = vmatpush1.msra.mxu0 0.0
    %427 = vmatprep.subr.mxu0 0.0
    %428 = vmatpush1.msra.mxu0 0.0
    %429 = vmatprep.subr.mxu0 0.0
    %430 = vmatpush1.msra.mxu0 0.0
    %431 = vmatprep.subr.mxu0 0.0
    %432 = vmatpush1.msra.mxu0 0.0
    %433 = vmatprep.subr.mxu0 0.0
    %434 = vmatpush1.msra.mxu0 0.0
    %435 = vmatprep.subr.mxu0 0.0
    %436 = vmatpush1.msra.mxu0 0.0
    %437 = vmatprep.subr.mxu0 0.0
    %438 = vmatpush1.msra.mxu0 0.0
    %439 = vmatprep.subr.mxu0 0.0
    %440 = vmatpush1.msra.mxu0 0.0
    %441 = vmatprep.subr.mxu0 0.0
    %442 = vmatpush1.msra.mxu0 %v406
    %443 = vmatprep.subr.mxu0 0.0
    %444 = vmatpush2.msra.mxu0 0.0
    %445 = vmatprep.subr.mxu0 0.0
    %446 = vmatpush2.msra.mxu0 0.0
    %447 = vmatprep.subr.mxu0 0.0
    %448 = vmatpush2.msra.mxu0 0.0
    %449 = vmatprep.subr.mxu0 0.0
    %450 = vmatpush2.msra.mxu0 0.0
    %451 = vmatprep.subr.mxu0 0.0
    %452 = vmatpush2.msra.mxu0 0.0
    %453 = vmatprep.subr.mxu0 0.0
    %454 = vmatpush2.msra.mxu0 0.0
    %455 = vmatprep.subr.mxu0 0.0
    %456 = vmatpush2.msra.mxu0 0.0
    %457 = vmatprep.subr.mxu0 0.0
    %458 = vmatpush2.msra.mxu0 0.0
    %459 = vmatprep.subr.mxu0 0.0
    %460 = vmatpush2.msra.mxu0 0.0
    %461 = vmatprep.subr.mxu0 0.0
    %462 = vmatpush2.msra.mxu0 0.0
    %463 = vmatprep.subr.mxu0 0.0
    %464 = vmatpush2.msra.mxu0 0.0
    %465 = vmatprep.subr.mxu0 0.0
    %466 = vmatpush2.msra.mxu0 0.0
    %467 = vmatprep.subr.mxu0 0.0
    %468 = vmatpush2.msra.mxu0 0.0
    %469 = vmatprep.subr.mxu0 0.0
    %470 = vmatpush2.msra.mxu0 0.0
    %471 = vmatprep.subr.mxu0 0.0
    %472 = vmatpush2.msra.mxu0 0.0
    %473 = vmatprep.subr.mxu0 0.0
    %474 = vmatpush2.msra.mxu0 0.0
    %475 = vmatprep.mubr.f32.mxu0 0.0
    %476 = vmatmul.mubr.f32.gmra.mxu0 %v409
    %v477 = vpop.f32.mrf.mxu0
    %v478 = vadd.f32 0.0, %v477
    %v479 = vpop.f32.mrf.mxu0
    %480 = vdwg.mxu0
    %481 = vrot.lane.b32.xlu0 %v225, 64
    %v482 = vpop.permute.xlu0 %481
    %v485 = vsel %vm231, %v404, 0
    %487 = vmatprep.subr.mxu0 0.0
    %488 = vmatpush1.msra.mxu0 0.0
    %489 = vmatprep.subr.mxu0 0.0
    %490 = vmatpush1.msra.mxu0 0.0
    %491 = vmatprep.subr.mxu0 0.0
    %492 = vmatpush1.msra.mxu0 0.0
    %493 = vmatprep.subr.mxu0 0.0
    %494 = vmatpush1.msra.mxu0 0.0
    %495 = vmatprep.subr.mxu0 0.0
    %496 = vmatpush1.msra.mxu0 0.0
    %497 = vmatprep.subr.mxu0 0.0
    %498 = vmatpush1.msra.mxu0 0.0
    %499 = vmatprep.subr.mxu0 0.0
    %500 = vmatpush1.msra.mxu0 0.0
    %501 = vmatprep.subr.mxu0 0.0
    %502 = vmatpush1.msra.mxu0 0.0
    %503 = vmatprep.subr.mxu0 0.0
    %504 = vmatpush1.msra.mxu0 0.0
    %505 = vmatprep.subr.mxu0 0.0
    %506 = vmatpush1.msra.mxu0 0.0
    %507 = vmatprep.subr.mxu0 0.0
    %508 = vmatpush1.msra.mxu0 0.0
    %509 = vmatprep.subr.mxu0 0.0
    %510 = vmatpush1.msra.mxu0 0.0
    %511 = vmatprep.subr.mxu0 0.0
    %512 = vmatpush1.msra.mxu0 0.0
    %513 = vmatprep.subr.mxu0 0.0
    %514 = vmatpush1.msra.mxu0 0.0
    %515 = vmatprep.subr.mxu0 0.0
    %516 = vmatpush1.msra.mxu0 0.0
    %517 = vmatprep.subr.mxu0 0.0
    %518 = vmatpush1.msra.mxu0 %v482
    %519 = vmatprep.subr.mxu0 0.0
    %520 = vmatpush2.msra.mxu0 0.0
    %521 = vmatprep.subr.mxu0 0.0
    %522 = vmatpush2.msra.mxu0 0.0
    %523 = vmatprep.subr.mxu0 0.0
    %524 = vmatpush2.msra.mxu0 0.0
    %525 = vmatprep.subr.mxu0 0.0
    %526 = vmatpush2.msra.mxu0 0.0
    %527 = vmatprep.subr.mxu0 0.0
    %528 = vmatpush2.msra.mxu0 0.0
    %529 = vmatprep.subr.mxu0 0.0
    %530 = vmatpush2.msra.mxu0 0.0
    %531 = vmatprep.subr.mxu0 0.0
    %532 = vmatpush2.msra.mxu0 0.0
    %533 = vmatprep.subr.mxu0 0.0
    %534 = vmatpush2.msra.mxu0 0.0
    %535 = vmatprep.subr.mxu0 0.0
    %536 = vmatpush2.msra.mxu0 0.0
    %537 = vmatprep.subr.mxu0 0.0
    %538 = vmatpush2.msra.mxu0 0.0
    %539 = vmatprep.subr.mxu0 0.0
    %540 = vmatpush2.msra.mxu0 0.0
    %541 = vmatprep.subr.mxu0 0.0
    %542 = vmatpush2.msra.mxu0 0.0
    %543 = vmatprep.subr.mxu0 0.0
    %544 = vmatpush2.msra.mxu0 0.0
    %545 = vmatprep.subr.mxu0 0.0
    %546 = vmatpush2.msra.mxu0 0.0
    %547 = vmatprep.subr.mxu0 0.0
    %548 = vmatpush2.msra.mxu0 0.0
    %549 = vmatprep.subr.mxu0 0.0
    %550 = vmatpush2.msra.mxu0 0.0
    %551 = vmatprep.mubr.f32.mxu0 0.0
    %552 = vmatmul.mubr.f32.gmra.mxu0 %v485
    %v553 = vpop.f32.mrf.mxu0
    %v554 = vadd.f32 0.0, %v553
    %v555 = vpop.f32.mrf.mxu0
    %556 = vdwg.mxu0
    %557 = vrot.lane.b32.xlu0 %v220, 120
    %v558 = vpop.permute.xlu0 %557
    %559 = vrot.lane.b32.xlu0 %v220, 88
    %v560 = vpop.permute.xlu0 %559
    %v561 = vsel %vm231, %v558, 0
    %v563 = vsel %vm231, %v560, 0
    %565 = vmatprep.subr.mxu0 0.0
    %566 = vmatpush1.xpose.msra.mxu0 0.0
    %567 = vmatprep.subr.mxu0 0.0
    %568 = vmatpush1.xpose.msra.mxu0 0.0
    %569 = vmatprep.subr.mxu0 0.0
    %570 = vmatpush1.xpose.msra.mxu0 0.0
    %571 = vmatprep.subr.mxu0 0.0
    %572 = vmatpush1.xpose.msra.mxu0 0.0
    %573 = vmatprep.subr.mxu0 0.0
    %574 = vmatpush1.xpose.msra.mxu0 0.0
    %575 = vmatprep.subr.mxu0 0.0
    %576 = vmatpush1.xpose.msra.mxu0 0.0
    %577 = vmatprep.subr.mxu0 0.0
    %578 = vmatpush1.xpose.msra.mxu0 0.0
    %579 = vmatprep.subr.mxu0 0.0
    %580 = vmatpush1.xpose.msra.mxu0 0.0
    %581 = vmatprep.subr.mxu0 0.0
    %582 = vmatpush1.xpose.msra.mxu0 0.0
    %583 = vmatprep.subr.mxu0 0.0
    %584 = vmatpush1.xpose.msra.mxu0 0.0
    %585 = vmatprep.subr.mxu0 0.0
    %586 = vmatpush1.xpose.msra.mxu0 0.0
    %587 = vmatprep.subr.mxu0 0.0
    %588 = vmatpush1.xpose.msra.mxu0 0.0
    %589 = vmatprep.subr.mxu0 0.0
    %590 = vmatpush1.xpose.msra.mxu0 0.0
    %591 = vmatprep.subr.mxu0 0.0
    %592 = vmatpush1.xpose.msra.mxu0 0.0
    %593 = vmatprep.subr.mxu0 0.0
    %594 = vmatpush1.xpose.msra.mxu0 0.0
    %595 = vmatprep.subr.mxu0 0.0
    %596 = vmatpush1.xpose.msra.mxu0 %v563
    %597 = vmatprep.subr.mxu0 0.0
    %598 = vmatpush2.xpose.msra.mxu0 0.0
    %599 = vmatprep.subr.mxu0 0.0
    %600 = vmatpush2.xpose.msra.mxu0 0.0
    %601 = vmatprep.subr.mxu0 0.0
    %602 = vmatpush2.xpose.msra.mxu0 0.0
    %603 = vmatprep.subr.mxu0 0.0
    %604 = vmatpush2.xpose.msra.mxu0 0.0
    %605 = vmatprep.subr.mxu0 0.0
    %606 = vmatpush2.xpose.msra.mxu0 0.0
    %607 = vmatprep.subr.mxu0 0.0
    %608 = vmatpush2.xpose.msra.mxu0 0.0
    %609 = vmatprep.subr.mxu0 0.0
    %610 = vmatpush2.xpose.msra.mxu0 0.0
    %611 = vmatprep.subr.mxu0 0.0
    %612 = vmatpush2.xpose.msra.mxu0 0.0
    %613 = vmatprep.subr.mxu0 0.0
    %614 = vmatpush2.xpose.msra.mxu0 0.0
    %615 = vmatprep.subr.mxu0 0.0
    %616 = vmatpush2.xpose.msra.mxu0 0.0
    %617 = vmatprep.subr.mxu0 0.0
    %618 = vmatpush2.xpose.msra.mxu0 0.0
    %619 = vmatprep.subr.mxu0 0.0
    %620 = vmatpush2.xpose.msra.mxu0 0.0
    %621 = vmatprep.subr.mxu0 0.0
    %622 = vmatpush2.xpose.msra.mxu0 0.0
    %623 = vmatprep.subr.mxu0 0.0
    %624 = vmatpush2.xpose.msra.mxu0 0.0
    %625 = vmatprep.subr.mxu0 0.0
    %626 = vmatpush2.xpose.msra.mxu0 0.0
    %627 = vmatprep.subr.mxu0 0.0
    %628 = vmatpush2.xpose.msra.mxu0 0.0
    %629 = vmatprep.mubr.f32.mxu0 0.0
    %630 = vmatmul.mubr.f32.gmra.mxu0 %v561
    %v631 = vpop.f32.mrf.mxu0
    %v632 = vadd.f32 %v128, %v631
    %v633 = vpop.f32.mrf.mxu0
    %634 = vdwg.mxu0
    %635 = vrot.lane.b32.xlu0 %v225, 120
    %v636 = vpop.permute.xlu0 %635
    %637 = vrot.lane.b32.xlu0 %v225, 88
    %v638 = vpop.permute.xlu0 %637
    %v639 = vsel %vm231, %v636, 0
    %v641 = vsel %vm231, %v638, 0
    %643 = vmatprep.subr.mxu0 0.0
    %644 = vmatpush1.xpose.msra.mxu0 0.0
    %645 = vmatprep.subr.mxu0 0.0
    %646 = vmatpush1.xpose.msra.mxu0 0.0
    %647 = vmatprep.subr.mxu0 0.0
    %648 = vmatpush1.xpose.msra.mxu0 0.0
    %649 = vmatprep.subr.mxu0 0.0
    %650 = vmatpush1.xpose.msra.mxu0 0.0
    %651 = vmatprep.subr.mxu0 0.0
    %652 = vmatpush1.xpose.msra.mxu0 0.0
    %653 = vmatprep.subr.mxu0 0.0
    %654 = vmatpush1.xpose.msra.mxu0 0.0
    %655 = vmatprep.subr.mxu0 0.0
    %656 = vmatpush1.xpose.msra.mxu0 0.0
    %657 = vmatprep.subr.mxu0 0.0
    %658 = vmatpush1.xpose.msra.mxu0 0.0
    %659 = vmatprep.subr.mxu0 0.0
    %660 = vmatpush1.xpose.msra.mxu0 0.0
    %661 = vmatprep.subr.mxu0 0.0
    %662 = vmatpush1.xpose.msra.mxu0 0.0
    %663 = vmatprep.subr.mxu0 0.0
    %664 = vmatpush1.xpose.msra.mxu0 0.0
    %665 = vmatprep.subr.mxu0 0.0
    %666 = vmatpush1.xpose.msra.mxu0 0.0
    %667 = vmatprep.subr.mxu0 0.0
    %668 = vmatpush1.xpose.msra.mxu0 0.0
    %669 = vmatprep.subr.mxu0 0.0
    %670 = vmatpush1.xpose.msra.mxu0 0.0
    %671 = vmatprep.subr.mxu0 0.0
    %672 = vmatpush1.xpose.msra.mxu0 0.0
    %673 = vmatprep.subr.mxu0 0.0
    %674 = vmatpush1.xpose.msra.mxu0 %v641
    %675 = vmatprep.subr.mxu0 0.0
    %676 = vmatpush2.xpose.msra.mxu0 0.0
    %677 = vmatprep.subr.mxu0 0.0
    %678 = vmatpush2.xpose.msra.mxu0 0.0
    %679 = vmatprep.subr.mxu0 0.0
    %680 = vmatpush2.xpose.msra.mxu0 0.0
    %681 = vmatprep.subr.mxu0 0.0
    %682 = vmatpush2.xpose.msra.mxu0 0.0
    %683 = vmatprep.subr.mxu0 0.0
    %684 = vmatpush2.xpose.msra.mxu0 0.0
    %685 = vmatprep.subr.mxu0 0.0
    %686 = vmatpush2.xpose.msra.mxu0 0.0
    %687 = vmatprep.subr.mxu0 0.0
    %688 = vmatpush2.xpose.msra.mxu0 0.0
    %689 = vmatprep.subr.mxu0 0.0
    %690 = vmatpush2.xpose.msra.mxu0 0.0
    %691 = vmatprep.subr.mxu0 0.0
    %692 = vmatpush2.xpose.msra.mxu0 0.0
    %693 = vmatprep.subr.mxu0 0.0
    %694 = vmatpush2.xpose.msra.mxu0 0.0
    %695 = vmatprep.subr.mxu0 0.0
    %696 = vmatpush2.xpose.msra.mxu0 0.0
    %697 = vmatprep.subr.mxu0 0.0
    %698 = vmatpush2.xpose.msra.mxu0 0.0
    %699 = vmatprep.subr.mxu0 0.0
    %700 = vmatpush2.xpose.msra.mxu0 0.0
    %701 = vmatprep.subr.mxu0 0.0
    %702 = vmatpush2.xpose.msra.mxu0 0.0
    %703 = vmatprep.subr.mxu0 0.0
    %704 = vmatpush2.xpose.msra.mxu0 0.0
    %705 = vmatprep.subr.mxu0 0.0
    %706 = vmatpush2.xpose.msra.mxu0 0.0
    %707 = vmatprep.mubr.f32.mxu0 0.0
    %708 = vmatmul.mubr.f32.gmra.mxu0 %v639
    %v709 = vpop.f32.mrf.mxu0
    %v710 = vadd.f32 %v129, %v709
    %v711 = vpop.f32.mrf.mxu0
    %712 = vdwg.mxu0
    %v713 = vsel %vm231, %v632, -inf
    %714 = vmax.xlane.f32.xlu0 %v713
    %v715 = vpop.xlane.xlu0 %714
    %v716 = vsel %vm231, %v710, -inf
    %717 = vmax.xlane.f32.xlu0 %v716
    %v718 = vpop.xlane.xlu0 %717
    %v719 = vsub.f32 %v632, %v715
    %v720 = vsub.f32 %v710, %v718
    %v721 = vmul.f32 %v719, 1.442695
    %v722 = vpow.pop %v721
    %v723 = vmul.f32 %v720, 1.442695
    %v724 = vpow.pop %v723
    %v725 = vsel %vm231, %v722, 0.0
    %726 = vadd.xlane.f32.xlu0 %v725
    %v727 = vpop.xlane.xlu0 %726
    %v728 = vsel %vm231, %v724, 0.0
    %729 = vadd.xlane.f32.xlu0 %v728
    %v730 = vpop.xlane.xlu0 %729
    %v731 = vrcp.pop %v727
    %v732 = vrcp.pop %v730
    %v733 = vmul.f32 %v722, %v731
    %v734 = vmul.f32 %v724, %v732
    %735 = vrot.lane.b32.xlu0 %v220, 56
    %v736 = vpop.permute.xlu0 %735
    %v739 = vsel %vm231, %v733, 0
    %741 = vmatprep.subr.mxu0 0.0
    %742 = vmatpush1.msra.mxu0 0.0
    %743 = vmatprep.subr.mxu0 0.0
    %744 = vmatpush1.msra.mxu0 0.0
    %745 = vmatprep.subr.mxu0 0.0
    %746 = vmatpush1.msra.mxu0 0.0
    %747 = vmatprep.subr.mxu0 0.0
    %748 = vmatpush1.msra.mxu0 0.0
    %749 = vmatprep.subr.mxu0 0.0
    %750 = vmatpush1.msra.mxu0 0.0
    %751 = vmatprep.subr.mxu0 0.0
    %752 = vmatpush1.msra.mxu0 0.0
    %753 = vmatprep.subr.mxu0 0.0
    %754 = vmatpush1.msra.mxu0 0.0
    %755 = vmatprep.subr.mxu0 0.0
    %756 = vmatpush1.msra.mxu0 0.0
    %757 = vmatprep.subr.mxu0 0.0
    %758 = vmatpush1.msra.mxu0 0.0
    %759 = vmatprep.subr.mxu0 0.0
    %760 = vmatpush1.msra.mxu0 0.0
    %761 = vmatprep.subr.mxu0 0.0
    %762 = vmatpush1.msra.mxu0 0.0
    %763 = vmatprep.subr.mxu0 0.0
    %764 = vmatpush1.msra.mxu0 0.0
    %765 = vmatprep.subr.mxu0 0.0
    %766 = vmatpush1.msra.mxu0 0.0
    %767 = vmatprep.subr.mxu0 0.0
    %768 = vmatpush1.msra.mxu0 0.0
    %769 = vmatprep.subr.mxu0 0.0
    %770 = vmatpush1.msra.mxu0 0.0
    %771 = vmatprep.subr.mxu0 0.0
    %772 = vmatpush1.msra.mxu0 %v736
    %773 = vmatprep.subr.mxu0 0.0
    %774 = vmatpush2.msra.mxu0 0.0
    %775 = vmatprep.subr.mxu0 0.0
    %776 = vmatpush2.msra.mxu0 0.0
    %777 = vmatprep.subr.mxu0 0.0
    %778 = vmatpush2.msra.mxu0 0.0
    %779 = vmatprep.subr.mxu0 0.0
    %780 = vmatpush2.msra.mxu0 0.0
    %781 = vmatprep.subr.mxu0 0.0
    %782 = vmatpush2.msra.mxu0 0.0
    %783 = vmatprep.subr.mxu0 0.0
    %784 = vmatpush2.msra.mxu0 0.0
    %785 = vmatprep.subr.mxu0 0.0
    %786 = vmatpush2.msra.mxu0 0.0
    %787 = vmatprep.subr.mxu0 0.0
    %788 = vmatpush2.msra.mxu0 0.0
    %789 = vmatprep.subr.mxu0 0.0
    %790 = vmatpush2.msra.mxu0 0.0
    %791 = vmatprep.subr.mxu0 0.0
    %792 = vmatpush2.msra.mxu0 0.0
    %793 = vmatprep.subr.mxu0 0.0
    %794 = vmatpush2.msra.mxu0 0.0
    %795 = vmatprep.subr.mxu0 0.0
    %796 = vmatpush2.msra.mxu0 0.0
    %797 = vmatprep.subr.mxu0 0.0
    %798 = vmatpush2.msra.mxu0 0.0
    %799 = vmatprep.subr.mxu0 0.0
    %800 = vmatpush2.msra.mxu0 0.0
    %801 = vmatprep.subr.mxu0 0.0
    %802 = vmatpush2.msra.mxu0 0.0
    %803 = vmatprep.subr.mxu0 0.0
    %804 = vmatpush2.msra.mxu0 0.0
    %805 = vmatprep.mubr.f32.mxu0 0.0
    %806 = vmatmul.mubr.f32.gmra.mxu0 %v739
    %v807 = vpop.f32.mrf.mxu0
    %v808 = vadd.f32 0.0, %v807
    %v809 = vpop.f32.mrf.mxu0
    %810 = vdwg.mxu0
    %811 = vrot.lane.b32.xlu0 %v225, 56
    %v812 = vpop.permute.xlu0 %811
    %v815 = vsel %vm231, %v734, 0
    %817 = vmatprep.subr.mxu0 0.0
    %818 = vmatpush1.msra.mxu0 0.0
    %819 = vmatprep.subr.mxu0 0.0
    %820 = vmatpush1.msra.mxu0 0.0
    %821 = vmatprep.subr.mxu0 0.0
    %822 = vmatpush1.msra.mxu0 0.0
    %823 = vmatprep.subr.mxu0 0.0
    %824 = vmatpush1.msra.mxu0 0.0
    %825 = vmatprep.subr.mxu0 0.0
    %826 = vmatpush1.msra.mxu0 0.0
    %827 = vmatprep.subr.mxu0 0.0
    %828 = vmatpush1.msra.mxu0 0.0
    %829 = vmatprep.subr.mxu0 0.0
    %830 = vmatpush1.msra.mxu0 0.0
    %831 = vmatprep.subr.mxu0 0.0
    %832 = vmatpush1.msra.mxu0 0.0
    %833 = vmatprep.subr.mxu0 0.0
    %834 = vmatpush1.msra.mxu0 0.0
    %835 = vmatprep.subr.mxu0 0.0
    %836 = vmatpush1.msra.mxu0 0.0
    %837 = vmatprep.subr.mxu0 0.0
    %838 = vmatpush1.msra.mxu0 0.0
    %839 = vmatprep.subr.mxu0 0.0
    %840 = vmatpush1.msra.mxu0 0.0
    %841 = vmatprep.subr.mxu0 0.0
    %842 = vmatpush1.msra.mxu0 0.0
    %843 = vmatprep.subr.mxu0 0.0
    %844 = vmatpush1.msra.mxu0 0.0
    %845 = vmatprep.subr.mxu0 0.0
    %846 = vmatpush1.msra.mxu0 0.0
    %847 = vmatprep.subr.mxu0 0.0
    %848 = vmatpush1.msra.mxu0 %v812
    %849 = vmatprep.subr.mxu0 0.0
    %850 = vmatpush2.msra.mxu0 0.0
    %851 = vmatprep.subr.mxu0 0.0
    %852 = vmatpush2.msra.mxu0 0.0
    %853 = vmatprep.subr.mxu0 0.0
    %854 = vmatpush2.msra.mxu0 0.0
    %855 = vmatprep.subr.mxu0 0.0
    %856 = vmatpush2.msra.mxu0 0.0
    %857 = vmatprep.subr.mxu0 0.0
    %858 = vmatpush2.msra.mxu0 0.0
    %859 = vmatprep.subr.mxu0 0.0
    %860 = vmatpush2.msra.mxu0 0.0
    %861 = vmatprep.subr.mxu0 0.0
    %862 = vmatpush2.msra.mxu0 0.0
    %863 = vmatprep.subr.mxu0 0.0
    %864 = vmatpush2.msra.mxu0 0.0
    %865 = vmatprep.subr.mxu0 0.0
    %866 = vmatpush2.msra.mxu0 0.0
    %867 = vmatprep.subr.mxu0 0.0
    %868 = vmatpush2.msra.mxu0 0.0
    %869 = vmatprep.subr.mxu0 0.0
    %870 = vmatpush2.msra.mxu0 0.0
    %871 = vmatprep.subr.mxu0 0.0
    %872 = vmatpush2.msra.mxu0 0.0
    %873 = vmatprep.subr.mxu0 0.0
    %874 = vmatpush2.msra.mxu0 0.0
    %875 = vmatprep.subr.mxu0 0.0
    %876 = vmatpush2.msra.mxu0 0.0
    %877 = vmatprep.subr.mxu0 0.0
    %878 = vmatpush2.msra.mxu0 0.0
    %879 = vmatprep.subr.mxu0 0.0
    %880 = vmatpush2.msra.mxu0 0.0
    %881 = vmatprep.mubr.f32.mxu0 0.0
    %882 = vmatmul.mubr.f32.gmra.mxu0 %v815
    %v883 = vpop.f32.mrf.mxu0
    %v884 = vadd.f32 0.0, %v883
    %v885 = vpop.f32.mrf.mxu0
    %886 = vdwg.mxu0
    %v888 = vsel %vm231, %v808, 0
    %v891 = vsel %vm231, %v884, 0
    %893 = vmatprep.subr.mxu0 0.0
    %894 = vmatpush1.msra.mxu0 0.0
    %895 = vmatprep.subr.mxu0 0.0
    %896 = vmatpush1.msra.mxu0 0.0
    %897 = vmatprep.subr.mxu0 0.0
    %898 = vmatpush1.msra.mxu0 0.0
    %899 = vmatprep.subr.mxu0 0.0
    %900 = vmatpush1.msra.mxu0 0.0
    %901 = vmatprep.subr.mxu0 0.0
    %902 = vmatpush1.msra.mxu0 0.0
    %903 = vmatprep.subr.mxu0 0.0
    %904 = vmatpush1.msra.mxu0 0.0
    %905 = vmatprep.subr.mxu0 0.0
    %906 = vmatpush1.msra.mxu0 0.0
    %907 = vmatprep.subr.mxu0 0.0
    %908 = vmatpush1.msra.mxu0 0.0
    %909 = vmatprep.subr.mxu0 0.0
    %910 = vmatpush1.msra.mxu0 0.0
    %911 = vmatprep.subr.mxu0 0.0
    %912 = vmatpush1.msra.mxu0 0.0
    %913 = vmatprep.subr.mxu0 0.0
    %914 = vmatpush1.msra.mxu0 0.0
    %915 = vmatprep.subr.mxu0 0.0
    %916 = vmatpush1.msra.mxu0 0.0
    %917 = vmatprep.subr.mxu0 0.0
    %918 = vmatpush1.msra.mxu0 0.0
    %919 = vmatprep.subr.mxu0 0.0
    %920 = vmatpush1.msra.mxu0 0.0
    %921 = vmatprep.subr.mxu0 0.0
    %922 = vmatpush1.msra.mxu0 0.0
    %923 = vmatprep.subr.mxu0 0.0
    %924 = vmatpush1.msra.mxu0 %v136
    %925 = vmatprep.subr.mxu0 0.0
    %926 = vmatpush2.msra.mxu0 0.0
    %927 = vmatprep.subr.mxu0 0.0
    %928 = vmatpush2.msra.mxu0 0.0
    %929 = vmatprep.subr.mxu0 0.0
    %930 = vmatpush2.msra.mxu0 0.0
    %931 = vmatprep.subr.mxu0 0.0
    %932 = vmatpush2.msra.mxu0 0.0
    %933 = vmatprep.subr.mxu0 0.0
    %934 = vmatpush2.msra.mxu0 0.0
    %935 = vmatprep.subr.mxu0 0.0
    %936 = vmatpush2.msra.mxu0 0.0
    %937 = vmatprep.subr.mxu0 0.0
    %938 = vmatpush2.msra.mxu0 0.0
    %939 = vmatprep.subr.mxu0 0.0
    %940 = vmatpush2.msra.mxu0 0.0
    %941 = vmatprep.subr.mxu0 0.0
    %942 = vmatpush2.msra.mxu0 0.0
    %943 = vmatprep.subr.mxu0 0.0
    %944 = vmatpush2.msra.mxu0 0.0
    %945 = vmatprep.subr.mxu0 0.0
    %946 = vmatpush2.msra.mxu0 0.0
    %947 = vmatprep.subr.mxu0 0.0
    %948 = vmatpush2.msra.mxu0 0.0
    %949 = vmatprep.subr.mxu0 0.0
    %950 = vmatpush2.msra.mxu0 0.0
    %951 = vmatprep.subr.mxu0 0.0
    %952 = vmatpush2.msra.mxu0 0.0
    %953 = vmatprep.subr.mxu0 0.0
    %954 = vmatpush2.msra.mxu0 0.0
    %955 = vmatprep.subr.mxu0 0.0
    %956 = vmatpush2.msra.mxu0 0.0
    %957 = vmatprep.mubr.f32.mxu0 0.0
    %958 = vmatmul.mubr.f32.gmra.mxu0 %v888
    %v959 = vpop.f32.mrf.mxu0
    %v960 = vadd.f32 0.0, %v959
    %v961 = vpop.f32.mrf.mxu0
    %962 = vmatprep.mubr.f32.mxu0 0.0
    %963 = vmatmul.mubr.f32.gmra.mxu0 %v891
    %v964 = vpop.f32.mrf.mxu0
    %v965 = vadd.f32 0.0, %v964
    %v966 = vpop.f32.mrf.mxu0
    %967 = vdwg.mxu0
    %v969 = vsel %vm231, %v478, 0
    %v972 = vsel %vm231, %v554, 0
    %974 = vmatprep.subr.mxu0 0.0
    %975 = vmatpush1.msra.mxu0 0.0
    %976 = vmatprep.subr.mxu0 0.0
    %977 = vmatpush1.msra.mxu0 0.0
    %978 = vmatprep.subr.mxu0 0.0
    %979 = vmatpush1.msra.mxu0 0.0
    %980 = vmatprep.subr.mxu0 0.0
    %981 = vmatpush1.msra.mxu0 0.0
    %982 = vmatprep.subr.mxu0 0.0
    %983 = vmatpush1.msra.mxu0 0.0
    %984 = vmatprep.subr.mxu0 0.0
    %985 = vmatpush1.msra.mxu0 0.0
    %986 = vmatprep.subr.mxu0 0.0
    %987 = vmatpush1.msra.mxu0 0.0
    %988 = vmatprep.subr.mxu0 0.0
    %989 = vmatpush1.msra.mxu0 0.0
    %990 = vmatprep.subr.mxu0 0.0
    %991 = vmatpush1.msra.mxu0 0.0
    %992 = vmatprep.subr.mxu0 0.0
    %993 = vmatpush1.msra.mxu0 0.0
    %994 = vmatprep.subr.mxu0 0.0
    %995 = vmatpush1.msra.mxu0 0.0
    %996 = vmatprep.subr.mxu0 0.0
    %997 = vmatpush1.msra.mxu0 0.0
    %998 = vmatprep.subr.mxu0 0.0
    %999 = vmatpush1.msra.mxu0 0.0
    %1000 = vmatprep.subr.mxu0 0.0
    %1001 = vmatpush1.msra.mxu0 0.0
    %1002 = vmatprep.subr.mxu0 0.0
    %1003 = vmatpush1.msra.mxu0 0.0
    %1004 = vmatprep.subr.mxu0 0.0
    %1005 = vmatpush1.msra.mxu0 %v135
    %1006 = vmatprep.subr.mxu0 0.0
    %1007 = vmatpush2.msra.mxu0 0.0
    %1008 = vmatprep.subr.mxu0 0.0
    %1009 = vmatpush2.msra.mxu0 0.0
    %1010 = vmatprep.subr.mxu0 0.0
    %1011 = vmatpush2.msra.mxu0 0.0
    %1012 = vmatprep.subr.mxu0 0.0
    %1013 = vmatpush2.msra.mxu0 0.0
    %1014 = vmatprep.subr.mxu0 0.0
    %1015 = vmatpush2.msra.mxu0 0.0
    %1016 = vmatprep.subr.mxu0 0.0
    %1017 = vmatpush2.msra.mxu0 0.0
    %1018 = vmatprep.subr.mxu0 0.0
    %1019 = vmatpush2.msra.mxu0 0.0
    %1020 = vmatprep.subr.mxu0 0.0
    %1021 = vmatpush2.msra.mxu0 0.0
    %1022 = vmatprep.subr.mxu0 0.0
    %1023 = vmatpush2.msra.mxu0 0.0
    %1024 = vmatprep.subr.mxu0 0.0
    %1025 = vmatpush2.msra.mxu0 0.0
    %1026 = vmatprep.subr.mxu0 0.0
    %1027 = vmatpush2.msra.mxu0 0.0
    %1028 = vmatprep.subr.mxu0 0.0
    %1029 = vmatpush2.msra.mxu0 0.0
    %1030 = vmatprep.subr.mxu0 0.0
    %1031 = vmatpush2.msra.mxu0 0.0
    %1032 = vmatprep.subr.mxu0 0.0
    %1033 = vmatpush2.msra.mxu0 0.0
    %1034 = vmatprep.subr.mxu0 0.0
    %1035 = vmatpush2.msra.mxu0 0.0
    %1036 = vmatprep.subr.mxu0 0.0
    %1037 = vmatpush2.msra.mxu0 0.0
    %1038 = vmatprep.mubr.f32.mxu0 0.0
    %1039 = vmatmul.mubr.f32.gmra.mxu0 %v969
    %v1040 = vpop.f32.mrf.mxu0
    %v1041 = vadd.f32 %v960, %v1040
    %v1042 = vpop.f32.mrf.mxu0
    %1043 = vmatprep.mubr.f32.mxu0 0.0
    %1044 = vmatmul.mubr.f32.gmra.mxu0 %v972
    %v1045 = vpop.f32.mrf.mxu0
    %v1046 = vadd.f32 %v965, %v1045
    %v1047 = vpop.f32.mrf.mxu0
    %1048 = vdwg.mxu0
    %1049 = vrot.lane.b32.xlu0 %v220, 112
    %v1050 = vpop.permute.xlu0 %1049
    %1051 = vrot.lane.b32.xlu0 %v220, 80
    %v1052 = vpop.permute.xlu0 %1051
    %v1053 = vsel %vm231, %v1050, 0
    %v1055 = vsel %vm231, %v1052, 0
    %1057 = vmatprep.subr.mxu0 0.0
    %1058 = vmatpush1.xpose.msra.mxu0 0.0
    %1059 = vmatprep.subr.mxu0 0.0
    %1060 = vmatpush1.xpose.msra.mxu0 0.0
    %1061 = vmatprep.subr.mxu0 0.0
    %1062 = vmatpush1.xpose.msra.mxu0 0.0
    %1063 = vmatprep.subr.mxu0 0.0
    %1064 = vmatpush1.xpose.msra.mxu0 0.0
    %1065 = vmatprep.subr.mxu0 0.0
    %1066 = vmatpush1.xpose.msra.mxu0 0.0
    %1067 = vmatprep.subr.mxu0 0.0
    %1068 = vmatpush1.xpose.msra.mxu0 0.0
    %1069 = vmatprep.subr.mxu0 0.0
    %1070 = vmatpush1.xpose.msra.mxu0 0.0
    %1071 = vmatprep.subr.mxu0 0.0
    %1072 = vmatpush1.xpose.msra.mxu0 0.0
    %1073 = vmatprep.subr.mxu0 0.0
    %1074 = vmatpush1.xpose.msra.mxu0 0.0
    %1075 = vmatprep.subr.mxu0 0.0
    %1076 = vmatpush1.xpose.msra.mxu0 0.0
    %1077 = vmatprep.subr.mxu0 0.0
    %1078 = vmatpush1.xpose.msra.mxu0 0.0
    %1079 = vmatprep.subr.mxu0 0.0
    %1080 = vmatpush1.xpose.msra.mxu0 0.0
    %1081 = vmatprep.subr.mxu0 0.0
    %1082 = vmatpush1.xpose.msra.mxu0 0.0
    %1083 = vmatprep.subr.mxu0 0.0
    %1084 = vmatpush1.xpose.msra.mxu0 0.0
    %1085 = vmatprep.subr.mxu0 0.0
    %1086 = vmatpush1.xpose.msra.mxu0 0.0
    %1087 = vmatprep.subr.mxu0 0.0
    %1088 = vmatpush1.xpose.msra.mxu0 %v1055
    %1089 = vmatprep.subr.mxu0 0.0
    %1090 = vmatpush2.xpose.msra.mxu0 0.0
    %1091 = vmatprep.subr.mxu0 0.0
    %1092 = vmatpush2.xpose.msra.mxu0 0.0
    %1093 = vmatprep.subr.mxu0 0.0
    %1094 = vmatpush2.xpose.msra.mxu0 0.0
    %1095 = vmatprep.subr.mxu0 0.0
    %1096 = vmatpush2.xpose.msra.mxu0 0.0
    %1097 = vmatprep.subr.mxu0 0.0
    %1098 = vmatpush2.xpose.msra.mxu0 0.0
    %1099 = vmatprep.subr.mxu0 0.0
    %1100 = vmatpush2.xpose.msra.mxu0 0.0
    %1101 = vmatprep.subr.mxu0 0.0
    %1102 = vmatpush2.xpose.msra.mxu0 0.0
    %1103 = vmatprep.subr.mxu0 0.0
    %1104 = vmatpush2.xpose.msra.mxu0 0.0
    %1105 = vmatprep.subr.mxu0 0.0
    %1106 = vmatpush2.xpose.msra.mxu0 0.0
    %1107 = vmatprep.subr.mxu0 0.0
    %1108 = vmatpush2.xpose.msra.mxu0 0.0
    %1109 = vmatprep.subr.mxu0 0.0
    %1110 = vmatpush2.xpose.msra.mxu0 0.0
    %1111 = vmatprep.subr.mxu0 0.0
    %1112 = vmatpush2.xpose.msra.mxu0 0.0
    %1113 = vmatprep.subr.mxu0 0.0
    %1114 = vmatpush2.xpose.msra.mxu0 0.0
    %1115 = vmatprep.subr.mxu0 0.0
    %1116 = vmatpush2.xpose.msra.mxu0 0.0
    %1117 = vmatprep.subr.mxu0 0.0
    %1118 = vmatpush2.xpose.msra.mxu0 0.0
    %1119 = vmatprep.subr.mxu0 0.0
    %1120 = vmatpush2.xpose.msra.mxu0 0.0
    %1121 = vmatprep.mubr.f32.mxu0 0.0
    %1122 = vmatmul.mubr.f32.gmra.mxu0 %v1053
    %v1123 = vpop.f32.mrf.mxu0
    %v1124 = vadd.f32 %v128, %v1123
    %v1125 = vpop.f32.mrf.mxu0
    %1126 = vdwg.mxu0
    %1127 = vrot.lane.b32.xlu0 %v225, 112
    %v1128 = vpop.permute.xlu0 %1127
    %1129 = vrot.lane.b32.xlu0 %v225, 80
    %v1130 = vpop.permute.xlu0 %1129
    %v1131 = vsel %vm231, %v1128, 0
    %v1133 = vsel %vm231, %v1130, 0
    %1135 = vmatprep.subr.mxu0 0.0
    %1136 = vmatpush1.xpose.msra.mxu0 0.0
    %1137 = vmatprep.subr.mxu0 0.0
    %1138 = vmatpush1.xpose.msra.mxu0 0.0
    %1139 = vmatprep.subr.mxu0 0.0
    %1140 = vmatpush1.xpose.msra.mxu0 0.0
    %1141 = vmatprep.subr.mxu0 0.0
    %1142 = vmatpush1.xpose.msra.mxu0 0.0
    %1143 = vmatprep.subr.mxu0 0.0
    %1144 = vmatpush1.xpose.msra.mxu0 0.0
    %1145 = vmatprep.subr.mxu0 0.0
    %1146 = vmatpush1.xpose.msra.mxu0 0.0
    %1147 = vmatprep.subr.mxu0 0.0
    %1148 = vmatpush1.xpose.msra.mxu0 0.0
    %1149 = vmatprep.subr.mxu0 0.0
    %1150 = vmatpush1.xpose.msra.mxu0 0.0
    %1151 = vmatprep.subr.mxu0 0.0
    %1152 = vmatpush1.xpose.msra.mxu0 0.0
    %1153 = vmatprep.subr.mxu0 0.0
    %1154 = vmatpush1.xpose.msra.mxu0 0.0
    %1155 = vmatprep.subr.mxu0 0.0
    %1156 = vmatpush1.xpose.msra.mxu0 0.0
    %1157 = vmatprep.subr.mxu0 0.0
    %1158 = vmatpush1.xpose.msra.mxu0 0.0
    %1159 = vmatprep.subr.mxu0 0.0
    %1160 = vmatpush1.xpose.msra.mxu0 0.0
    %1161 = vmatprep.subr.mxu0 0.0
    %1162 = vmatpush1.xpose.msra.mxu0 0.0
    %1163 = vmatprep.subr.mxu0 0.0
    %1164 = vmatpush1.xpose.msra.mxu0 0.0
    %1165 = vmatprep.subr.mxu0 0.0
    %1166 = vmatpush1.xpose.msra.mxu0 %v1133
    %1167 = vmatprep.subr.mxu0 0.0
    %1168 = vmatpush2.xpose.msra.mxu0 0.0
    %1169 = vmatprep.subr.mxu0 0.0
    %1170 = vmatpush2.xpose.msra.mxu0 0.0
    %1171 = vmatprep.subr.mxu0 0.0
    %1172 = vmatpush2.xpose.msra.mxu0 0.0
    %1173 = vmatprep.subr.mxu0 0.0
    %1174 = vmatpush2.xpose.msra.mxu0 0.0
    %1175 = vmatprep.subr.mxu0 0.0
    %1176 = vmatpush2.xpose.msra.mxu0 0.0
    %1177 = vmatprep.subr.mxu0 0.0
    %1178 = vmatpush2.xpose.msra.mxu0 0.0
    %1179 = vmatprep.subr.mxu0 0.0
    %1180 = vmatpush2.xpose.msra.mxu0 0.0
    %1181 = vmatprep.subr.mxu0 0.0
    %1182 = vmatpush2.xpose.msra.mxu0 0.0
    %1183 = vmatprep.subr.mxu0 0.0
    %1184 = vmatpush2.xpose.msra.mxu0 0.0
    %1185 = vmatprep.subr.mxu0 0.0
    %1186 = vmatpush2.xpose.msra.mxu0 0.0
    %1187 = vmatprep.subr.mxu0 0.0
    %1188 = vmatpush2.xpose.msra.mxu0 0.0
    %1189 = vmatprep.subr.mxu0 0.0
    %1190 = vmatpush2.xpose.msra.mxu0 0.0
    %1191 = vmatprep.subr.mxu0 0.0
    %1192 = vmatpush2.xpose.msra.mxu0 0.0
    %1193 = vmatprep.subr.mxu0 0.0
    %1194 = vmatpush2.xpose.msra.mxu0 0.0
    %1195 = vmatprep.subr.mxu0 0.0
    %1196 = vmatpush2.xpose.msra.mxu0 0.0
    %1197 = vmatprep.subr.mxu0 0.0
    %1198 = vmatpush2.xpose.msra.mxu0 0.0
    %1199 = vmatprep.mubr.f32.mxu0 0.0
    %1200 = vmatmul.mubr.f32.gmra.mxu0 %v1131
    %v1201 = vpop.f32.mrf.mxu0
    %v1202 = vadd.f32 %v129, %v1201
    %v1203 = vpop.f32.mrf.mxu0
    %1204 = vdwg.mxu0
    %v1205 = vsel %vm231, %v1124, -inf
    %1206 = vmax.xlane.f32.xlu0 %v1205
    %v1207 = vpop.xlane.xlu0 %1206
    %v1208 = vsel %vm231, %v1202, -inf
    %1209 = vmax.xlane.f32.xlu0 %v1208
    %v1210 = vpop.xlane.xlu0 %1209
    %v1211 = vsub.f32 %v1124, %v1207
    %v1212 = vsub.f32 %v1202, %v1210
    %v1213 = vmul.f32 %v1211, 1.442695
    %v1214 = vpow.pop %v1213
    %v1215 = vmul.f32 %v1212, 1.442695
    %v1216 = vpow.pop %v1215
    %v1217 = vsel %vm231, %v1214, 0.0
    %1218 = vadd.xlane.f32.xlu0 %v1217
    %v1219 = vpop.xlane.xlu0 %1218
    %v1220 = vsel %vm231, %v1216, 0.0
    %1221 = vadd.xlane.f32.xlu0 %v1220
    %v1222 = vpop.xlane.xlu0 %1221
    %v1223 = vrcp.pop %v1219
    %v1224 = vrcp.pop %v1222
    %v1225 = vmul.f32 %v1214, %v1223
    %v1226 = vmul.f32 %v1216, %v1224
    %1227 = vrot.lane.b32.xlu0 %v220, 48
    %v1228 = vpop.permute.xlu0 %1227
    %v1231 = vsel %vm231, %v1225, 0
    %1233 = vmatprep.subr.mxu0 0.0
    %1234 = vmatpush1.msra.mxu0 0.0
    %1235 = vmatprep.subr.mxu0 0.0
    %1236 = vmatpush1.msra.mxu0 0.0
    %1237 = vmatprep.subr.mxu0 0.0
    %1238 = vmatpush1.msra.mxu0 0.0
    %1239 = vmatprep.subr.mxu0 0.0
    %1240 = vmatpush1.msra.mxu0 0.0
    %1241 = vmatprep.subr.mxu0 0.0
    %1242 = vmatpush1.msra.mxu0 0.0
    %1243 = vmatprep.subr.mxu0 0.0
    %1244 = vmatpush1.msra.mxu0 0.0
    %1245 = vmatprep.subr.mxu0 0.0
    %1246 = vmatpush1.msra.mxu0 0.0
    %1247 = vmatprep.subr.mxu0 0.0
    %1248 = vmatpush1.msra.mxu0 0.0
    %1249 = vmatprep.subr.mxu0 0.0
    %1250 = vmatpush1.msra.mxu0 0.0
    %1251 = vmatprep.subr.mxu0 0.0
    %1252 = vmatpush1.msra.mxu0 0.0
    %1253 = vmatprep.subr.mxu0 0.0
    %1254 = vmatpush1.msra.mxu0 0.0
    %1255 = vmatprep.subr.mxu0 0.0
    %1256 = vmatpush1.msra.mxu0 0.0
    %1257 = vmatprep.subr.mxu0 0.0
    %1258 = vmatpush1.msra.mxu0 0.0
    %1259 = vmatprep.subr.mxu0 0.0
    %1260 = vmatpush1.msra.mxu0 0.0
    %1261 = vmatprep.subr.mxu0 0.0
    %1262 = vmatpush1.msra.mxu0 0.0
    %1263 = vmatprep.subr.mxu0 0.0
    %1264 = vmatpush1.msra.mxu0 %v1228
    %1265 = vmatprep.subr.mxu0 0.0
    %1266 = vmatpush2.msra.mxu0 0.0
    %1267 = vmatprep.subr.mxu0 0.0
    %1268 = vmatpush2.msra.mxu0 0.0
    %1269 = vmatprep.subr.mxu0 0.0
    %1270 = vmatpush2.msra.mxu0 0.0
    %1271 = vmatprep.subr.mxu0 0.0
    %1272 = vmatpush2.msra.mxu0 0.0
    %1273 = vmatprep.subr.mxu0 0.0
    %1274 = vmatpush2.msra.mxu0 0.0
    %1275 = vmatprep.subr.mxu0 0.0
    %1276 = vmatpush2.msra.mxu0 0.0
    %1277 = vmatprep.subr.mxu0 0.0
    %1278 = vmatpush2.msra.mxu0 0.0
    %1279 = vmatprep.subr.mxu0 0.0
    %1280 = vmatpush2.msra.mxu0 0.0
    %1281 = vmatprep.subr.mxu0 0.0
    %1282 = vmatpush2.msra.mxu0 0.0
    %1283 = vmatprep.subr.mxu0 0.0
    %1284 = vmatpush2.msra.mxu0 0.0
    %1285 = vmatprep.subr.mxu0 0.0
    %1286 = vmatpush2.msra.mxu0 0.0
    %1287 = vmatprep.subr.mxu0 0.0
    %1288 = vmatpush2.msra.mxu0 0.0
    %1289 = vmatprep.subr.mxu0 0.0
    %1290 = vmatpush2.msra.mxu0 0.0
    %1291 = vmatprep.subr.mxu0 0.0
    %1292 = vmatpush2.msra.mxu0 0.0
    %1293 = vmatprep.subr.mxu0 0.0
    %1294 = vmatpush2.msra.mxu0 0.0
    %1295 = vmatprep.subr.mxu0 0.0
    %1296 = vmatpush2.msra.mxu0 0.0
    %1297 = vmatprep.mubr.f32.mxu0 0.0
    %1298 = vmatmul.mubr.f32.gmra.mxu0 %v1231
    %v1299 = vpop.f32.mrf.mxu0
    %v1300 = vadd.f32 0.0, %v1299
    %v1301 = vpop.f32.mrf.mxu0
    %1302 = vdwg.mxu0
    %1303 = vrot.lane.b32.xlu0 %v225, 48
    %v1304 = vpop.permute.xlu0 %1303
    %v1307 = vsel %vm231, %v1226, 0
    %1309 = vmatprep.subr.mxu0 0.0
    %1310 = vmatpush1.msra.mxu0 0.0
    %1311 = vmatprep.subr.mxu0 0.0
    %1312 = vmatpush1.msra.mxu0 0.0
    %1313 = vmatprep.subr.mxu0 0.0
    %1314 = vmatpush1.msra.mxu0 0.0
    %1315 = vmatprep.subr.mxu0 0.0
    %1316 = vmatpush1.msra.mxu0 0.0
    %1317 = vmatprep.subr.mxu0 0.0
    %1318 = vmatpush1.msra.mxu0 0.0
    %1319 = vmatprep.subr.mxu0 0.0
    %1320 = vmatpush1.msra.mxu0 0.0
    %1321 = vmatprep.subr.mxu0 0.0
    %1322 = vmatpush1.msra.mxu0 0.0
    %1323 = vmatprep.subr.mxu0 0.0
    %1324 = vmatpush1.msra.mxu0 0.0
    %1325 = vmatprep.subr.mxu0 0.0
    %1326 = vmatpush1.msra.mxu0 0.0
    %1327 = vmatprep.subr.mxu0 0.0
    %1328 = vmatpush1.msra.mxu0 0.0
    %1329 = vmatprep.subr.mxu0 0.0
    %1330 = vmatpush1.msra.mxu0 0.0
    %1331 = vmatprep.subr.mxu0 0.0
    %1332 = vmatpush1.msra.mxu0 0.0
    %1333 = vmatprep.subr.mxu0 0.0
    %1334 = vmatpush1.msra.mxu0 0.0
    %1335 = vmatprep.subr.mxu0 0.0
    %1336 = vmatpush1.msra.mxu0 0.0
    %1337 = vmatprep.subr.mxu0 0.0
    %1338 = vmatpush1.msra.mxu0 0.0
    %1339 = vmatprep.subr.mxu0 0.0
    %1340 = vmatpush1.msra.mxu0 %v1304
    %1341 = vmatprep.subr.mxu0 0.0
    %1342 = vmatpush2.msra.mxu0 0.0
    %1343 = vmatprep.subr.mxu0 0.0
    %1344 = vmatpush2.msra.mxu0 0.0
    %1345 = vmatprep.subr.mxu0 0.0
    %1346 = vmatpush2.msra.mxu0 0.0
    %1347 = vmatprep.subr.mxu0 0.0
    %1348 = vmatpush2.msra.mxu0 0.0
    %1349 = vmatprep.subr.mxu0 0.0
    %1350 = vmatpush2.msra.mxu0 0.0
    %1351 = vmatprep.subr.mxu0 0.0
    %1352 = vmatpush2.msra.mxu0 0.0
    %1353 = vmatprep.subr.mxu0 0.0
    %1354 = vmatpush2.msra.mxu0 0.0
    %1355 = vmatprep.subr.mxu0 0.0
    %1356 = vmatpush2.msra.mxu0 0.0
    %1357 = vmatprep.subr.mxu0 0.0
    %1358 = vmatpush2.msra.mxu0 0.0
    %1359 = vmatprep.subr.mxu0 0.0
    %1360 = vmatpush2.msra.mxu0 0.0
    %1361 = vmatprep.subr.mxu0 0.0
    %1362 = vmatpush2.msra.mxu0 0.0
    %1363 = vmatprep.subr.mxu0 0.0
    %1364 = vmatpush2.msra.mxu0 0.0
    %1365 = vmatprep.subr.mxu0 0.0
    %1366 = vmatpush2.msra.mxu0 0.0
    %1367 = vmatprep.subr.mxu0 0.0
    %1368 = vmatpush2.msra.mxu0 0.0
    %1369 = vmatprep.subr.mxu0 0.0
    %1370 = vmatpush2.msra.mxu0 0.0
    %1371 = vmatprep.subr.mxu0 0.0
    %1372 = vmatpush2.msra.mxu0 0.0
    %1373 = vmatprep.mubr.f32.mxu0 0.0
    %1374 = vmatmul.mubr.f32.gmra.mxu0 %v1307
    %v1375 = vpop.f32.mrf.mxu0
    %v1376 = vadd.f32 0.0, %v1375
    %v1377 = vpop.f32.mrf.mxu0
    %1378 = vdwg.mxu0
    %v1380 = vsel %vm231, %v1300, 0
    %v1383 = vsel %vm231, %v1376, 0
    %1385 = vmatprep.subr.mxu0 0.0
    %1386 = vmatpush1.msra.mxu0 0.0
    %1387 = vmatprep.subr.mxu0 0.0
    %1388 = vmatpush1.msra.mxu0 0.0
    %1389 = vmatprep.subr.mxu0 0.0
    %1390 = vmatpush1.msra.mxu0 0.0
    %1391 = vmatprep.subr.mxu0 0.0
    %1392 = vmatpush1.msra.mxu0 0.0
    %1393 = vmatprep.subr.mxu0 0.0
    %1394 = vmatpush1.msra.mxu0 0.0
    %1395 = vmatprep.subr.mxu0 0.0
    %1396 = vmatpush1.msra.mxu0 0.0
    %1397 = vmatprep.subr.mxu0 0.0
    %1398 = vmatpush1.msra.mxu0 0.0
    %1399 = vmatprep.subr.mxu0 0.0
    %1400 = vmatpush1.msra.mxu0 0.0
    %1401 = vmatprep.subr.mxu0 0.0
    %1402 = vmatpush1.msra.mxu0 0.0
    %1403 = vmatprep.subr.mxu0 0.0
    %1404 = vmatpush1.msra.mxu0 0.0
    %1405 = vmatprep.subr.mxu0 0.0
    %1406 = vmatpush1.msra.mxu0 0.0
    %1407 = vmatprep.subr.mxu0 0.0
    %1408 = vmatpush1.msra.mxu0 0.0
    %1409 = vmatprep.subr.mxu0 0.0
    %1410 = vmatpush1.msra.mxu0 0.0
    %1411 = vmatprep.subr.mxu0 0.0
    %1412 = vmatpush1.msra.mxu0 0.0
    %1413 = vmatprep.subr.mxu0 0.0
    %1414 = vmatpush1.msra.mxu0 0.0
    %1415 = vmatprep.subr.mxu0 0.0
    %1416 = vmatpush1.msra.mxu0 %v137
    %1417 = vmatprep.subr.mxu0 0.0
    %1418 = vmatpush2.msra.mxu0 0.0
    %1419 = vmatprep.subr.mxu0 0.0
    %1420 = vmatpush2.msra.mxu0 0.0
    %1421 = vmatprep.subr.mxu0 0.0
    %1422 = vmatpush2.msra.mxu0 0.0
    %1423 = vmatprep.subr.mxu0 0.0
    %1424 = vmatpush2.msra.mxu0 0.0
    %1425 = vmatprep.subr.mxu0 0.0
    %1426 = vmatpush2.msra.mxu0 0.0
    %1427 = vmatprep.subr.mxu0 0.0
    %1428 = vmatpush2.msra.mxu0 0.0
    %1429 = vmatprep.subr.mxu0 0.0
    %1430 = vmatpush2.msra.mxu0 0.0
    %1431 = vmatprep.subr.mxu0 0.0
    %1432 = vmatpush2.msra.mxu0 0.0
    %1433 = vmatprep.subr.mxu0 0.0
    %1434 = vmatpush2.msra.mxu0 0.0
    %1435 = vmatprep.subr.mxu0 0.0
    %1436 = vmatpush2.msra.mxu0 0.0
    %1437 = vmatprep.subr.mxu0 0.0
    %1438 = vmatpush2.msra.mxu0 0.0
    %1439 = vmatprep.subr.mxu0 0.0
    %1440 = vmatpush2.msra.mxu0 0.0
    %1441 = vmatprep.subr.mxu0 0.0
    %1442 = vmatpush2.msra.mxu0 0.0
    %1443 = vmatprep.subr.mxu0 0.0
    %1444 = vmatpush2.msra.mxu0 0.0
    %1445 = vmatprep.subr.mxu0 0.0
    %1446 = vmatpush2.msra.mxu0 0.0
    %1447 = vmatprep.subr.mxu0 0.0
    %1448 = vmatpush2.msra.mxu0 0.0
    %1449 = vmatprep.mubr.f32.mxu0 0.0
    %1450 = vmatmul.mubr.f32.gmra.mxu0 %v1380
    %v1451 = vpop.f32.mrf.mxu0
    %v1452 = vadd.f32 0.0, %v1451
    %v1453 = vpop.f32.mrf.mxu0
    %1454 = vmatprep.mubr.f32.mxu0 0.0
    %1455 = vmatmul.mubr.f32.gmra.mxu0 %v1383
    %v1456 = vpop.f32.mrf.mxu0
    %v1457 = vadd.f32 0.0, %v1456
    %v1458 = vpop.f32.mrf.mxu0
    %1459 = vdwg.mxu0
    %v1460 = vadd.f32 %v1041, %v1452
    %v1461 = vadd.f32 %v1046, %v1457
    %1462 = vrot.lane.b32.xlu0 %v220, 104
    %v1463 = vpop.permute.xlu0 %1462
    %1464 = vrot.lane.b32.xlu0 %v220, 72
    %v1465 = vpop.permute.xlu0 %1464
    %v1466 = vsel %vm231, %v1463, 0
    %v1468 = vsel %vm231, %v1465, 0
    %1470 = vmatprep.subr.mxu0 0.0
    %1471 = vmatpush1.xpose.msra.mxu0 0.0
    %1472 = vmatprep.subr.mxu0 0.0
    %1473 = vmatpush1.xpose.msra.mxu0 0.0
    %1474 = vmatprep.subr.mxu0 0.0
    %1475 = vmatpush1.xpose.msra.mxu0 0.0
    %1476 = vmatprep.subr.mxu0 0.0
    %1477 = vmatpush1.xpose.msra.mxu0 0.0
    %1478 = vmatprep.subr.mxu0 0.0
    %1479 = vmatpush1.xpose.msra.mxu0 0.0
    %1480 = vmatprep.subr.mxu0 0.0
    %1481 = vmatpush1.xpose.msra.mxu0 0.0
    %1482 = vmatprep.subr.mxu0 0.0
    %1483 = vmatpush1.xpose.msra.mxu0 0.0
    %1484 = vmatprep.subr.mxu0 0.0
    %1485 = vmatpush1.xpose.msra.mxu0 0.0
    %1486 = vmatprep.subr.mxu0 0.0
    %1487 = vmatpush1.xpose.msra.mxu0 0.0
    %1488 = vmatprep.subr.mxu0 0.0
    %1489 = vmatpush1.xpose.msra.mxu0 0.0
    %1490 = vmatprep.subr.mxu0 0.0
    %1491 = vmatpush1.xpose.msra.mxu0 0.0
    %1492 = vmatprep.subr.mxu0 0.0
    %1493 = vmatpush1.xpose.msra.mxu0 0.0
    %1494 = vmatprep.subr.mxu0 0.0
    %1495 = vmatpush1.xpose.msra.mxu0 0.0
    %1496 = vmatprep.subr.mxu0 0.0
    %1497 = vmatpush1.xpose.msra.mxu0 0.0
    %1498 = vmatprep.subr.mxu0 0.0
    %1499 = vmatpush1.xpose.msra.mxu0 0.0
    %1500 = vmatprep.subr.mxu0 0.0
    %1501 = vmatpush1.xpose.msra.mxu0 %v1468
    %1502 = vmatprep.subr.mxu0 0.0
    %1503 = vmatpush2.xpose.msra.mxu0 0.0
    %1504 = vmatprep.subr.mxu0 0.0
    %1505 = vmatpush2.xpose.msra.mxu0 0.0
    %1506 = vmatprep.subr.mxu0 0.0
    %1507 = vmatpush2.xpose.msra.mxu0 0.0
    %1508 = vmatprep.subr.mxu0 0.0
    %1509 = vmatpush2.xpose.msra.mxu0 0.0
    %1510 = vmatprep.subr.mxu0 0.0
    %1511 = vmatpush2.xpose.msra.mxu0 0.0
    %1512 = vmatprep.subr.mxu0 0.0
    %1513 = vmatpush2.xpose.msra.mxu0 0.0
    %1514 = vmatprep.subr.mxu0 0.0
    %1515 = vmatpush2.xpose.msra.mxu0 0.0
    %1516 = vmatprep.subr.mxu0 0.0
    %1517 = vmatpush2.xpose.msra.mxu0 0.0
    %1518 = vmatprep.subr.mxu0 0.0
    %1519 = vmatpush2.xpose.msra.mxu0 0.0
    %1520 = vmatprep.subr.mxu0 0.0
    %1521 = vmatpush2.xpose.msra.mxu0 0.0
    %1522 = vmatprep.subr.mxu0 0.0
    %1523 = vmatpush2.xpose.msra.mxu0 0.0
    %1524 = vmatprep.subr.mxu0 0.0
    %1525 = vmatpush2.xpose.msra.mxu0 0.0
    %1526 = vmatprep.subr.mxu0 0.0
    %1527 = vmatpush2.xpose.msra.mxu0 0.0
    %1528 = vmatprep.subr.mxu0 0.0
    %1529 = vmatpush2.xpose.msra.mxu0 0.0
    %1530 = vmatprep.subr.mxu0 0.0
    %1531 = vmatpush2.xpose.msra.mxu0 0.0
    %1532 = vmatprep.subr.mxu0 0.0
    %1533 = vmatpush2.xpose.msra.mxu0 0.0
    %1534 = vmatprep.mubr.f32.mxu0 0.0
    %1535 = vmatmul.mubr.f32.gmra.mxu0 %v1466
    %v1536 = vpop.f32.mrf.mxu0
    %v1537 = vadd.f32 %v128, %v1536
    %v1538 = vpop.f32.mrf.mxu0
    %1539 = vdwg.mxu0
    %1540 = vrot.lane.b32.xlu0 %v225, 104
    %v1541 = vpop.permute.xlu0 %1540
    %1542 = vrot.lane.b32.xlu0 %v225, 72
    %v1543 = vpop.permute.xlu0 %1542
    %v1544 = vsel %vm231, %v1541, 0
    %v1546 = vsel %vm231, %v1543, 0
    %1548 = vmatprep.subr.mxu0 0.0
    %1549 = vmatpush1.xpose.msra.mxu0 0.0
    %1550 = vmatprep.subr.mxu0 0.0
    %1551 = vmatpush1.xpose.msra.mxu0 0.0
    %1552 = vmatprep.subr.mxu0 0.0
    %1553 = vmatpush1.xpose.msra.mxu0 0.0
    %1554 = vmatprep.subr.mxu0 0.0
    %1555 = vmatpush1.xpose.msra.mxu0 0.0
    %1556 = vmatprep.subr.mxu0 0.0
    %1557 = vmatpush1.xpose.msra.mxu0 0.0
    %1558 = vmatprep.subr.mxu0 0.0
    %1559 = vmatpush1.xpose.msra.mxu0 0.0
    %1560 = vmatprep.subr.mxu0 0.0
    %1561 = vmatpush1.xpose.msra.mxu0 0.0
    %1562 = vmatprep.subr.mxu0 0.0
    %1563 = vmatpush1.xpose.msra.mxu0 0.0
    %1564 = vmatprep.subr.mxu0 0.0
    %1565 = vmatpush1.xpose.msra.mxu0 0.0
    %1566 = vmatprep.subr.mxu0 0.0
    %1567 = vmatpush1.xpose.msra.mxu0 0.0
    %1568 = vmatprep.subr.mxu0 0.0
    %1569 = vmatpush1.xpose.msra.mxu0 0.0
    %1570 = vmatprep.subr.mxu0 0.0
    %1571 = vmatpush1.xpose.msra.mxu0 0.0
    %1572 = vmatprep.subr.mxu0 0.0
    %1573 = vmatpush1.xpose.msra.mxu0 0.0
    %1574 = vmatprep.subr.mxu0 0.0
    %1575 = vmatpush1.xpose.msra.mxu0 0.0
    %1576 = vmatprep.subr.mxu0 0.0
    %1577 = vmatpush1.xpose.msra.mxu0 0.0
    %1578 = vmatprep.subr.mxu0 0.0
    %1579 = vmatpush1.xpose.msra.mxu0 %v1546
    %1580 = vmatprep.subr.mxu0 0.0
    %1581 = vmatpush2.xpose.msra.mxu0 0.0
    %1582 = vmatprep.subr.mxu0 0.0
    %1583 = vmatpush2.xpose.msra.mxu0 0.0
    %1584 = vmatprep.subr.mxu0 0.0
    %1585 = vmatpush2.xpose.msra.mxu0 0.0
    %1586 = vmatprep.subr.mxu0 0.0
    %1587 = vmatpush2.xpose.msra.mxu0 0.0
    %1588 = vmatprep.subr.mxu0 0.0
    %1589 = vmatpush2.xpose.msra.mxu0 0.0
    %1590 = vmatprep.subr.mxu0 0.0
    %1591 = vmatpush2.xpose.msra.mxu0 0.0
    %1592 = vmatprep.subr.mxu0 0.0
    %1593 = vmatpush2.xpose.msra.mxu0 0.0
    %1594 = vmatprep.subr.mxu0 0.0
    %1595 = vmatpush2.xpose.msra.mxu0 0.0
    %1596 = vmatprep.subr.mxu0 0.0
    %1597 = vmatpush2.xpose.msra.mxu0 0.0
    %1598 = vmatprep.subr.mxu0 0.0
    %1599 = vmatpush2.xpose.msra.mxu0 0.0
    %1600 = vmatprep.subr.mxu0 0.0
    %1601 = vmatpush2.xpose.msra.mxu0 0.0
    %1602 = vmatprep.subr.mxu0 0.0
    %1603 = vmatpush2.xpose.msra.mxu0 0.0
    %1604 = vmatprep.subr.mxu0 0.0
    %1605 = vmatpush2.xpose.msra.mxu0 0.0
    %1606 = vmatprep.subr.mxu0 0.0
    %1607 = vmatpush2.xpose.msra.mxu0 0.0
    %1608 = vmatprep.subr.mxu0 0.0
    %1609 = vmatpush2.xpose.msra.mxu0 0.0
    %1610 = vmatprep.subr.mxu0 0.0
    %1611 = vmatpush2.xpose.msra.mxu0 0.0
    %1612 = vmatprep.mubr.f32.mxu0 0.0
    %1613 = vmatmul.mubr.f32.gmra.mxu0 %v1544
    %v1614 = vpop.f32.mrf.mxu0
    %v1615 = vadd.f32 %v129, %v1614
    %v1616 = vpop.f32.mrf.mxu0
    %1617 = vdwg.mxu0
    %v1618 = vsel %vm231, %v1537, -inf
    %1619 = vmax.xlane.f32.xlu0 %v1618
    %v1620 = vpop.xlane.xlu0 %1619
    %v1621 = vsel %vm231, %v1615, -inf
    %1622 = vmax.xlane.f32.xlu0 %v1621
    %v1623 = vpop.xlane.xlu0 %1622
    %v1624 = vsub.f32 %v1537, %v1620
    %v1625 = vsub.f32 %v1615, %v1623
    %v1626 = vmul.f32 %v1624, 1.442695
    %v1627 = vpow.pop %v1626
    %v1628 = vmul.f32 %v1625, 1.442695
    %v1629 = vpow.pop %v1628
    %v1630 = vsel %vm231, %v1627, 0.0
    %1631 = vadd.xlane.f32.xlu0 %v1630
    %v1632 = vpop.xlane.xlu0 %1631
    %v1633 = vsel %vm231, %v1629, 0.0
    %1634 = vadd.xlane.f32.xlu0 %v1633
    %v1635 = vpop.xlane.xlu0 %1634
    %v1636 = vrcp.pop %v1632
    %v1637 = vrcp.pop %v1635
    %v1638 = vmul.f32 %v1627, %v1636
    %v1639 = vmul.f32 %v1629, %v1637
    %1640 = vrot.lane.b32.xlu0 %v220, 40
    %v1641 = vpop.permute.xlu0 %1640
    %v1644 = vsel %vm231, %v1638, 0
    %1646 = vmatprep.subr.mxu0 0.0
    %1647 = vmatpush1.msra.mxu0 0.0
    %1648 = vmatprep.subr.mxu0 0.0
    %1649 = vmatpush1.msra.mxu0 0.0
    %1650 = vmatprep.subr.mxu0 0.0
    %1651 = vmatpush1.msra.mxu0 0.0
    %1652 = vmatprep.subr.mxu0 0.0
    %1653 = vmatpush1.msra.mxu0 0.0
    %1654 = vmatprep.subr.mxu0 0.0
    %1655 = vmatpush1.msra.mxu0 0.0
    %1656 = vmatprep.subr.mxu0 0.0
    %1657 = vmatpush1.msra.mxu0 0.0
    %1658 = vmatprep.subr.mxu0 0.0
    %1659 = vmatpush1.msra.mxu0 0.0
    %1660 = vmatprep.subr.mxu0 0.0
    %1661 = vmatpush1.msra.mxu0 0.0
    %1662 = vmatprep.subr.mxu0 0.0
    %1663 = vmatpush1.msra.mxu0 0.0
    %1664 = vmatprep.subr.mxu0 0.0
    %1665 = vmatpush1.msra.mxu0 0.0
    %1666 = vmatprep.subr.mxu0 0.0
    %1667 = vmatpush1.msra.mxu0 0.0
    %1668 = vmatprep.subr.mxu0 0.0
    %1669 = vmatpush1.msra.mxu0 0.0
    %1670 = vmatprep.subr.mxu0 0.0
    %1671 = vmatpush1.msra.mxu0 0.0
    %1672 = vmatprep.subr.mxu0 0.0
    %1673 = vmatpush1.msra.mxu0 0.0
    %1674 = vmatprep.subr.mxu0 0.0
    %1675 = vmatpush1.msra.mxu0 0.0
    %1676 = vmatprep.subr.mxu0 0.0
    %1677 = vmatpush1.msra.mxu0 %v1641
    %1678 = vmatprep.subr.mxu0 0.0
    %1679 = vmatpush2.msra.mxu0 0.0
    %1680 = vmatprep.subr.mxu0 0.0
    %1681 = vmatpush2.msra.mxu0 0.0
    %1682 = vmatprep.subr.mxu0 0.0
    %1683 = vmatpush2.msra.mxu0 0.0
    %1684 = vmatprep.subr.mxu0 0.0
    %1685 = vmatpush2.msra.mxu0 0.0
    %1686 = vmatprep.subr.mxu0 0.0
    %1687 = vmatpush2.msra.mxu0 0.0
    %1688 = vmatprep.subr.mxu0 0.0
    %1689 = vmatpush2.msra.mxu0 0.0
    %1690 = vmatprep.subr.mxu0 0.0
    %1691 = vmatpush2.msra.mxu0 0.0
    %1692 = vmatprep.subr.mxu0 0.0
    %1693 = vmatpush2.msra.mxu0 0.0
    %1694 = vmatprep.subr.mxu0 0.0
    %1695 = vmatpush2.msra.mxu0 0.0
    %1696 = vmatprep.subr.mxu0 0.0
    %1697 = vmatpush2.msra.mxu0 0.0
    %1698 = vmatprep.subr.mxu0 0.0
    %1699 = vmatpush2.msra.mxu0 0.0
    %1700 = vmatprep.subr.mxu0 0.0
    %1701 = vmatpush2.msra.mxu0 0.0
    %1702 = vmatprep.subr.mxu0 0.0
    %1703 = vmatpush2.msra.mxu0 0.0
    %1704 = vmatprep.subr.mxu0 0.0
    %1705 = vmatpush2.msra.mxu0 0.0
    %1706 = vmatprep.subr.mxu0 0.0
    %1707 = vmatpush2.msra.mxu0 0.0
    %1708 = vmatprep.subr.mxu0 0.0
    %1709 = vmatpush2.msra.mxu0 0.0
    %1710 = vmatprep.mubr.f32.mxu0 0.0
    %1711 = vmatmul.mubr.f32.gmra.mxu0 %v1644
    %v1712 = vpop.f32.mrf.mxu0
    %v1713 = vadd.f32 0.0, %v1712
    %v1714 = vpop.f32.mrf.mxu0
    %1715 = vdwg.mxu0
    %1716 = vrot.lane.b32.xlu0 %v225, 40
    %v1717 = vpop.permute.xlu0 %1716
    %v1720 = vsel %vm231, %v1639, 0
    %1722 = vmatprep.subr.mxu0 0.0
    %1723 = vmatpush1.msra.mxu0 0.0
    %1724 = vmatprep.subr.mxu0 0.0
    %1725 = vmatpush1.msra.mxu0 0.0
    %1726 = vmatprep.subr.mxu0 0.0
    %1727 = vmatpush1.msra.mxu0 0.0
    %1728 = vmatprep.subr.mxu0 0.0
    %1729 = vmatpush1.msra.mxu0 0.0
    %1730 = vmatprep.subr.mxu0 0.0
    %1731 = vmatpush1.msra.mxu0 0.0
    %1732 = vmatprep.subr.mxu0 0.0
    %1733 = vmatpush1.msra.mxu0 0.0
    %1734 = vmatprep.subr.mxu0 0.0
    %1735 = vmatpush1.msra.mxu0 0.0
    %1736 = vmatprep.subr.mxu0 0.0
    %1737 = vmatpush1.msra.mxu0 0.0
    %1738 = vmatprep.subr.mxu0 0.0
    %1739 = vmatpush1.msra.mxu0 0.0
    %1740 = vmatprep.subr.mxu0 0.0
    %1741 = vmatpush1.msra.mxu0 0.0
    %1742 = vmatprep.subr.mxu0 0.0
    %1743 = vmatpush1.msra.mxu0 0.0
    %1744 = vmatprep.subr.mxu0 0.0
    %1745 = vmatpush1.msra.mxu0 0.0
    %1746 = vmatprep.subr.mxu0 0.0
    %1747 = vmatpush1.msra.mxu0 0.0
    %1748 = vmatprep.subr.mxu0 0.0
    %1749 = vmatpush1.msra.mxu0 0.0
    %1750 = vmatprep.subr.mxu0 0.0
    %1751 = vmatpush1.msra.mxu0 0.0
    %1752 = vmatprep.subr.mxu0 0.0
    %1753 = vmatpush1.msra.mxu0 %v1717
    %1754 = vmatprep.subr.mxu0 0.0
    %1755 = vmatpush2.msra.mxu0 0.0
    %1756 = vmatprep.subr.mxu0 0.0
    %1757 = vmatpush2.msra.mxu0 0.0
    %1758 = vmatprep.subr.mxu0 0.0
    %1759 = vmatpush2.msra.mxu0 0.0
    %1760 = vmatprep.subr.mxu0 0.0
    %1761 = vmatpush2.msra.mxu0 0.0
    %1762 = vmatprep.subr.mxu0 0.0
    %1763 = vmatpush2.msra.mxu0 0.0
    %1764 = vmatprep.subr.mxu0 0.0
    %1765 = vmatpush2.msra.mxu0 0.0
    %1766 = vmatprep.subr.mxu0 0.0
    %1767 = vmatpush2.msra.mxu0 0.0
    %1768 = vmatprep.subr.mxu0 0.0
    %1769 = vmatpush2.msra.mxu0 0.0
    %1770 = vmatprep.subr.mxu0 0.0
    %1771 = vmatpush2.msra.mxu0 0.0
    %1772 = vmatprep.subr.mxu0 0.0
    %1773 = vmatpush2.msra.mxu0 0.0
    %1774 = vmatprep.subr.mxu0 0.0
    %1775 = vmatpush2.msra.mxu0 0.0
    %1776 = vmatprep.subr.mxu0 0.0
    %1777 = vmatpush2.msra.mxu0 0.0
    %1778 = vmatprep.subr.mxu0 0.0
    %1779 = vmatpush2.msra.mxu0 0.0
    %1780 = vmatprep.subr.mxu0 0.0
    %1781 = vmatpush2.msra.mxu0 0.0
    %1782 = vmatprep.subr.mxu0 0.0
    %1783 = vmatpush2.msra.mxu0 0.0
    %1784 = vmatprep.subr.mxu0 0.0
    %1785 = vmatpush2.msra.mxu0 0.0
    %1786 = vmatprep.mubr.f32.mxu0 0.0
    %1787 = vmatmul.mubr.f32.gmra.mxu0 %v1720
    %v1788 = vpop.f32.mrf.mxu0
    %v1789 = vadd.f32 0.0, %v1788
    %v1790 = vpop.f32.mrf.mxu0
    %1791 = vdwg.mxu0
    %v1793 = vsel %vm231, %v1713, 0
    %v1796 = vsel %vm231, %v1789, 0
    %1798 = vmatprep.subr.mxu0 0.0
    %1799 = vmatpush1.msra.mxu0 0.0
    %1800 = vmatprep.subr.mxu0 0.0
    %1801 = vmatpush1.msra.mxu0 0.0
    %1802 = vmatprep.subr.mxu0 0.0
    %1803 = vmatpush1.msra.mxu0 0.0
    %1804 = vmatprep.subr.mxu0 0.0
    %1805 = vmatpush1.msra.mxu0 0.0
    %1806 = vmatprep.subr.mxu0 0.0
    %1807 = vmatpush1.msra.mxu0 0.0
    %1808 = vmatprep.subr.mxu0 0.0
    %1809 = vmatpush1.msra.mxu0 0.0
    %1810 = vmatprep.subr.mxu0 0.0
    %1811 = vmatpush1.msra.mxu0 0.0
    %1812 = vmatprep.subr.mxu0 0.0
    %1813 = vmatpush1.msra.mxu0 0.0
    %1814 = vmatprep.subr.mxu0 0.0
    %1815 = vmatpush1.msra.mxu0 0.0
    %1816 = vmatprep.subr.mxu0 0.0
    %1817 = vmatpush1.msra.mxu0 0.0
    %1818 = vmatprep.subr.mxu0 0.0
    %1819 = vmatpush1.msra.mxu0 0.0
    %1820 = vmatprep.subr.mxu0 0.0
    %1821 = vmatpush1.msra.mxu0 0.0
    %1822 = vmatprep.subr.mxu0 0.0
    %1823 = vmatpush1.msra.mxu0 0.0
    %1824 = vmatprep.subr.mxu0 0.0
    %1825 = vmatpush1.msra.mxu0 0.0
    %1826 = vmatprep.subr.mxu0 0.0
    %1827 = vmatpush1.msra.mxu0 0.0
    %1828 = vmatprep.subr.mxu0 0.0
    %1829 = vmatpush1.msra.mxu0 %v138
    %1830 = vmatprep.subr.mxu0 0.0
    %1831 = vmatpush2.msra.mxu0 0.0
    %1832 = vmatprep.subr.mxu0 0.0
    %1833 = vmatpush2.msra.mxu0 0.0
    %1834 = vmatprep.subr.mxu0 0.0
    %1835 = vmatpush2.msra.mxu0 0.0
    %1836 = vmatprep.subr.mxu0 0.0
    %1837 = vmatpush2.msra.mxu0 0.0
    %1838 = vmatprep.subr.mxu0 0.0
    %1839 = vmatpush2.msra.mxu0 0.0
    %1840 = vmatprep.subr.mxu0 0.0
    %1841 = vmatpush2.msra.mxu0 0.0
    %1842 = vmatprep.subr.mxu0 0.0
    %1843 = vmatpush2.msra.mxu0 0.0
    %1844 = vmatprep.subr.mxu0 0.0
    %1845 = vmatpush2.msra.mxu0 0.0
    %1846 = vmatprep.subr.mxu0 0.0
    %1847 = vmatpush2.msra.mxu0 0.0
    %1848 = vmatprep.subr.mxu0 0.0
    %1849 = vmatpush2.msra.mxu0 0.0
    %1850 = vmatprep.subr.mxu0 0.0
    %1851 = vmatpush2.msra.mxu0 0.0
    %1852 = vmatprep.subr.mxu0 0.0
    %1853 = vmatpush2.msra.mxu0 0.0
    %1854 = vmatprep.subr.mxu0 0.0
    %1855 = vmatpush2.msra.mxu0 0.0
    %1856 = vmatprep.subr.mxu0 0.0
    %1857 = vmatpush2.msra.mxu0 0.0
    %1858 = vmatprep.subr.mxu0 0.0
    %1859 = vmatpush2.msra.mxu0 0.0
    %1860 = vmatprep.subr.mxu0 0.0
    %1861 = vmatpush2.msra.mxu0 0.0
    %1862 = vmatprep.mubr.f32.mxu0 0.0
    %1863 = vmatmul.mubr.f32.gmra.mxu0 %v1793
    %v1864 = vpop.f32.mrf.mxu0
    %v1865 = vadd.f32 0.0, %v1864
    %v1866 = vpop.f32.mrf.mxu0
    %1867 = vmatprep.mubr.f32.mxu0 0.0
    %1868 = vmatmul.mubr.f32.gmra.mxu0 %v1796
    %v1869 = vpop.f32.mrf.mxu0
    %v1870 = vadd.f32 0.0, %v1869
    %v1871 = vpop.f32.mrf.mxu0
    %1872 = vdwg.mxu0
    %v1873 = vadd.f32 %v1460, %v1865
    %v1874 = vadd.f32 %v1461, %v1870
    %v1876 = vlaneseq
    %v1877 = vshrl.u32 %v1876, 7
    %v1878 = vsub.s32 0, %v1877
    %v1879 = vrot.slane %v139, %v1878
    %v1881 = vadd.f32 %v1873, %v1879
    %v1882 = vadd.f32 %v1874, %v1879
    %v1883 = vadd.f32 %v122, %v1881
    %v1884 = vadd.f32 %v123, %v1882
    %v1885 = vld [vmem:[%s6] sm:$0x1]
    %v1886 = vld [vmem:[#allocation7] sm:$0x1]
    %v1887 = vsel %vm146, %v1883, 0.0
    %1888 = vadd.xlane.f32.xlu0 %v1887
    %v1889 = vpop.xlane.xlu0 %1888
    %v1890 = vsel %vm146, %v1884, 0.0
    %1891 = vadd.xlane.f32.xlu0 %v1890
    %v1892 = vpop.xlane.xlu0 %1891
    %v1893 = vrcp.pop 32.0
    %v1894 = vmul.f32 %v1889, %v1893
    %v1895 = vmul.f32 %v1892, %v1893
    %v1896 = vsub.f32 %v1883, %v1894
    %v1897 = vsub.f32 %v1884, %v1895
    %v1898 = vmul.f32 %v1896, %v1896
    %v1899 = vmul.f32 %v1897, %v1897
    %v1900 = vsel %vm146, %v1898, 0.0
    %1901 = vadd.xlane.f32.xlu0 %v1900
    %v1902 = vpop.xlane.xlu0 %1901
    %v1903 = vsel %vm146, %v1899, 0.0
    %1904 = vadd.xlane.f32.xlu0 %v1903
    %v1905 = vpop.xlane.xlu0 %1904
    %v1906 = vmul.f32 %v1902, %v1893
    %v1907 = vmul.f32 %v1905, %v1893
    %v1908 = vadd.f32 %v1906, 1e-05
    %v1909 = vadd.f32 %v1907, 1e-05
    %v1910 = vrsqrt.pop %v1908
    %v1911 = vrsqrt.pop %v1909
    %v1912 = vmul.f32 %v1896, %v1910
    %v1913 = vmul.f32 %v1897, %v1911
    %v1915 = vlaneseq
    %v1916 = vshrl.u32 %v1915, 7
    %v1917 = vsub.s32 0, %v1916
    %v1918 = vrot.slane %v1885, %v1917
    %v1920 = vmul.f32 %v1912, %v1918
    %v1921 = vmul.f32 %v1913, %v1918
    %v1923 = vlaneseq
    %v1924 = vshrl.u32 %v1923, 7
    %v1925 = vsub.s32 0, %v1924
    %v1926 = vrot.slane %v1886, %v1925
    %v1928 = vadd.f32 %v1920, %v1926
    %v1929 = vadd.f32 %v1921, %v1926
    %v1930 = vld [vmem:[%s8] sm:$0xff]
    %v1931 = vld [vmem:[%s8 + $0x8] sm:$0xff]
    %v1932 = vld [vmem:[%s8 + $0x10] sm:$0xff]
    %v1933 = vld [vmem:[%s8 + $0x18] sm:$0xff]
    %v1934 = vld [vmem:[#allocation8] sm:$0x1]
    %v1936 = vlaneseq
    %v1937 = vshrl.u32 %v1936, 7
    %v1938 = vsub.s32 0, %v1937
    %v1939 = vrot.slane %v1934, %v1938
    %v1942 = vsel %vm146, %v1928, 0
    %v1945 = vsel %vm146, %v1929, 0
    %1947 = vmatprep.subr.mxu0 0.0
    %1948 = vmatpush1.msra.mxu0 0.0
    %1949 = vmatprep.subr.mxu0 0.0
    %1950 = vmatpush1.msra.mxu0 0.0
    %1951 = vmatprep.subr.mxu0 0.0
    %1952 = vmatpush1.msra.mxu0 0.0
    %1953 = vmatprep.subr.mxu0 0.0
    %1954 = vmatpush1.msra.mxu0 0.0
    %1955 = vmatprep.subr.mxu0 0.0
    %1956 = vmatpush1.msra.mxu0 0.0
    %1957 = vmatprep.subr.mxu0 0.0
    %1958 = vmatpush1.msra.mxu0 0.0
    %1959 = vmatprep.subr.mxu0 0.0
    %1960 = vmatpush1.msra.mxu0 0.0
    %1961 = vmatprep.subr.mxu0 0.0
    %1962 = vmatpush1.msra.mxu0 0.0
    %1963 = vmatprep.subr.mxu0 0.0
    %1964 = vmatpush1.msra.mxu0 0.0
    %1965 = vmatprep.subr.mxu0 0.0
    %1966 = vmatpush1.msra.mxu0 0.0
    %1967 = vmatprep.subr.mxu0 0.0
    %1968 = vmatpush1.msra.mxu0 0.0
    %1969 = vmatprep.subr.mxu0 0.0
    %1970 = vmatpush1.msra.mxu0 0.0
    %1971 = vmatprep.subr.mxu0 0.0
    %1972 = vmatpush1.msra.mxu0 %v1933
    %1973 = vmatprep.subr.mxu0 0.0
    %1974 = vmatpush1.msra.mxu0 %v1932
    %1975 = vmatprep.subr.mxu0 0.0
    %1976 = vmatpush1.msra.mxu0 %v1931
    %1977 = vmatprep.subr.mxu0 0.0
    %1978 = vmatpush1.msra.mxu0 %v1930
    %1979 = vmatprep.subr.mxu0 0.0
    %1980 = vmatpush2.msra.mxu0 0.0
    %1981 = vmatprep.subr.mxu0 0.0
    %1982 = vmatpush2.msra.mxu0 0.0
    %1983 = vmatprep.subr.mxu0 0.0
    %1984 = vmatpush2.msra.mxu0 0.0
    %1985 = vmatprep.subr.mxu0 0.0
    %1986 = vmatpush2.msra.mxu0 0.0
    %1987 = vmatprep.subr.mxu0 0.0
    %1988 = vmatpush2.msra.mxu0 0.0
    %1989 = vmatprep.subr.mxu0 0.0
    %1990 = vmatpush2.msra.mxu0 0.0
    %1991 = vmatprep.subr.mxu0 0.0
    %1992 = vmatpush2.msra.mxu0 0.0
    %1993 = vmatprep.subr.mxu0 0.0
    %1994 = vmatpush2.msra.mxu0 0.0
    %1995 = vmatprep.subr.mxu0 0.0
    %1996 = vmatpush2.msra.mxu0 0.0
    %1997 = vmatprep.subr.mxu0 0.0
    %1998 = vmatpush2.msra.mxu0 0.0
    %1999 = vmatprep.subr.mxu0 0.0
    %2000 = vmatpush2.msra.mxu0 0.0
    %2001 = vmatprep.subr.mxu0 0.0
    %2002 = vmatpush2.msra.mxu0 0.0
    %2003 = vmatprep.subr.mxu0 0.0
    %2004 = vmatpush2.msra.mxu0 0.0
    %2005 = vmatprep.subr.mxu0 0.0
    %2006 = vmatpush2.msra.mxu0 0.0
    %2007 = vmatprep.subr.mxu0 0.0
    %2008 = vmatpush2.msra.mxu0 0.0
    %2009 = vmatprep.subr.mxu0 0.0
    %2010 = vmatpush2.msra.mxu0 0.0
    %2011 = vmatprep.mubr.f32.mxu0 0.0
    %2012 = vmatmul.mubr.f32.gmra.mxu0 %v1942
    %v2013 = vpop.f32.mrf.mxu0
    %v2014 = vadd.f32 %v1939, %v2013
    %v2015 = vpop.f32.mrf.mxu0
    %2016 = vmatprep.mubr.f32.mxu0 0.0
    %2017 = vmatmul.mubr.f32.gmra.mxu0 %v1945
    %v2018 = vpop.f32.mrf.mxu0
    %v2019 = vadd.f32 %v1939, %v2018
    %v2020 = vpop.f32.mrf.mxu0
    %2021 = vdwg.mxu0
    %v2022 = vmax.f32 %v2014, 0.0
    %v2023 = vmax.f32 %v2019, 0.0
    %v2024 = vld [vmem:[%s10] sm:$0xff]
    %v2025 = vld [vmem:[%s10 + $0x8] sm:$0xff]
    %v2026 = vld [vmem:[%s10 + $0x10] sm:$0xff]
    %v2027 = vld [vmem:[%s10 + $0x18] sm:$0xff]
    %v2028 = vld [vmem:[%s10 + $0x20] sm:$0xff]
    %v2029 = vld [vmem:[%s10 + $0x28] sm:$0xff]
    %v2030 = vld [vmem:[%s10 + $0x30] sm:$0xff]
    %v2031 = vld [vmem:[%s10 + $0x38] sm:$0xff]
    %v2032 = vld [vmem:[#allocation10] sm:$0x1]
    %v2034 = vlaneseq
    %v2035 = vshrl.u32 %v2034, 7
    %v2036 = vsub.s32 0, %v2035
    %v2037 = vrot.slane %v2032, %v2036
    %vm2039 = vcmask 523264
    %v2041 = vsel %vm2039, %v2022, 0
    %v2044 = vsel %vm2039, %v2023, 0
    %2046 = vmatprep.subr.mxu0 0.0
    %2047 = vmatpush1.msra.mxu0 0.0
    %2048 = vmatprep.subr.mxu0 0.0
    %2049 = vmatpush1.msra.mxu0 0.0
    %2050 = vmatprep.subr.mxu0 0.0
    %2051 = vmatpush1.msra.mxu0 0.0
    %2052 = vmatprep.subr.mxu0 0.0
    %2053 = vmatpush1.msra.mxu0 0.0
    %2054 = vmatprep.subr.mxu0 0.0
    %2055 = vmatpush1.msra.mxu0 0.0
    %2056 = vmatprep.subr.mxu0 0.0
    %2057 = vmatpush1.msra.mxu0 0.0
    %2058 = vmatprep.subr.mxu0 0.0
    %2059 = vmatpush1.msra.mxu0 0.0
    %2060 = vmatprep.subr.mxu0 0.0
    %2061 = vmatpush1.msra.mxu0 0.0
    %2062 = vmatprep.subr.mxu0 0.0
    %2063 = vmatpush1.msra.mxu0 %v2031
    %2064 = vmatprep.subr.mxu0 0.0
    %2065 = vmatpush1.msra.mxu0 %v2030
    %2066 = vmatprep.subr.mxu0 0.0
    %2067 = vmatpush1.msra.mxu0 %v2029
    %2068 = vmatprep.subr.mxu0 0.0
    %2069 = vmatpush1.msra.mxu0 %v2028
    %2070 = vmatprep.subr.mxu0 0.0
    %2071 = vmatpush1.msra.mxu0 %v2027
    %2072 = vmatprep.subr.mxu0 0.0
    %2073 = vmatpush1.msra.mxu0 %v2026
    %2074 = vmatprep.subr.mxu0 0.0
    %2075 = vmatpush1.msra.mxu0 %v2025
    %2076 = vmatprep.subr.mxu0 0.0
    %2077 = vmatpush1.msra.mxu0 %v2024
    %2078 = vmatprep.subr.mxu0 0.0
    %2079 = vmatpush2.msra.mxu0 0.0
    %2080 = vmatprep.subr.mxu0 0.0
    %2081 = vmatpush2.msra.mxu0 0.0
    %2082 = vmatprep.subr.mxu0 0.0
    %2083 = vmatpush2.msra.mxu0 0.0
    %2084 = vmatprep.subr.mxu0 0.0
    %2085 = vmatpush2.msra.mxu0 0.0
    %2086 = vmatprep.subr.mxu0 0.0
    %2087 = vmatpush2.msra.mxu0 0.0
    %2088 = vmatprep.subr.mxu0 0.0
    %2089 = vmatpush2.msra.mxu0 0.0
    %2090 = vmatprep.subr.mxu0 0.0
    %2091 = vmatpush2.msra.mxu0 0.0
    %2092 = vmatprep.subr.mxu0 0.0
    %2093 = vmatpush2.msra.mxu0 0.0
    %2094 = vmatprep.subr.mxu0 0.0
    %2095 = vmatpush2.msra.mxu0 0.0
    %2096 = vmatprep.subr.mxu0 0.0
    %2097 = vmatpush2.msra.mxu0 0.0
    %2098 = vmatprep.subr.mxu0 0.0
    %2099 = vmatpush2.msra.mxu0 0.0
    %2100 = vmatprep.subr.mxu0 0.0
    %2101 = vmatpush2.msra.mxu0 0.0
    %2102 = vmatprep.subr.mxu0 0.0
    %2103 = vmatpush2.msra.mxu0 0.0
    %2104 = vmatprep.subr.mxu0 0.0
    %2105 = vmatpush2.msra.mxu0 0.0
    %2106 = vmatprep.subr.mxu0 0.0
    %2107 = vmatpush2.msra.mxu0 0.0
    %2108 = vmatprep.subr.mxu0 0.0
    %2109 = vmatpush2.msra.mxu0 0.0
    %2110 = vmatprep.mubr.f32.mxu0 0.0
    %2111 = vmatmul.mubr.f32.gmra.mxu0 %v2041
    %v2112 = vpop.f32.mrf.mxu0
    %v2113 = vadd.f32 %v2037, %v2112
    %v2114 = vpop.f32.mrf.mxu0
    %2115 = vmatprep.mubr.f32.mxu0 0.0
    %2116 = vmatmul.mubr.f32.gmra.mxu0 %v2044
    %v2117 = vpop.f32.mrf.mxu0
    %v2118 = vadd.f32 %v2037, %v2117
    %v2119 = vpop.f32.mrf.mxu0
    %2120 = vdwg.mxu0
    %v2121 = vadd.f32 %v1928, %v2113
    %v2122 = vadd.f32 %v1929, %v2118
    %v2123 = vld [vmem:[%s12] sm:$0x1]
    %v2124 = vld [vmem:[%s13] sm:$0x1]
    %v2125 = vsel %vm146, %v2121, 0.0
    %2126 = vadd.xlane.f32.xlu0 %v2125
    %v2127 = vpop.xlane.xlu0 %2126
    %v2128 = vsel %vm146, %v2122, 0.0
    %2129 = vadd.xlane.f32.xlu0 %v2128
    %v2130 = vpop.xlane.xlu0 %2129
    %v2131 = vmul.f32 %v2127, %v1893
    %v2132 = vmul.f32 %v2130, %v1893
    %v2133 = vsub.f32 %v2121, %v2131
    %v2134 = vsub.f32 %v2122, %v2132
    %v2135 = vmul.f32 %v2133, %v2133
    %v2136 = vmul.f32 %v2134, %v2134
    %v2137 = vsel %vm146, %v2135, 0.0
    %2138 = vadd.xlane.f32.xlu0 %v2137
    %v2139 = vpop.xlane.xlu0 %2138
    %v2140 = vsel %vm146, %v2136, 0.0
    %2141 = vadd.xlane.f32.xlu0 %v2140
    %v2142 = vpop.xlane.xlu0 %2141
    %v2143 = vmul.f32 %v2139, %v1893
    %v2144 = vmul.f32 %v2142, %v1893
    %v2145 = vadd.f32 %v2143, 1e-05
    %v2146 = vadd.f32 %v2144, 1e-05
    %v2147 = vrsqrt.pop %v2145
    %v2148 = vrsqrt.pop %v2146
    %v2149 = vmul.f32 %v2133, %v2147
    %v2150 = vmul.f32 %v2134, %v2148
    %v2152 = vlaneseq
    %v2153 = vshrl.u32 %v2152, 7
    %v2154 = vsub.s32 0, %v2153
    %v2155 = vrot.slane %v2123, %v2154
    %v2157 = vmul.f32 %v2149, %v2155
    %v2158 = vmul.f32 %v2150, %v2155
    %v2160 = vlaneseq
    %v2161 = vshrl.u32 %v2160, 7
    %v2162 = vsub.s32 0, %v2161
    %v2163 = vrot.slane %v2124, %v2162
    %v2165 = vadd.f32 %v2157, %v2163
    %v2166 = vadd.f32 %v2158, %v2163
    %s2167 = scalar_lea.vmem %s2, 32
    %v2168 = vld [vmem:[%s2167] sm:$0xff]
    %v2169 = vld [vmem:[%s2167 + $0x8] sm:$0xff]
    %v2170 = vld [vmem:[%s2167 + $0x10] sm:$0xff]
    %v2171 = vld [vmem:[%s2167 + $0x18] sm:$0xff]
    %s2172 = scalar_lea.vmem %s3, 1
    %v2173 = vld [vmem:[%s2172] sm:$0x1]
    %s2174 = scalar_lea.vmem %s4, 32
    %v2175 = vld [vmem:[%s2174] sm:$0xff]
    %v2176 = vld [vmem:[%s2174 + $0x8] sm:$0xff]
    %v2177 = vld [vmem:[%s2174 + $0x10] sm:$0xff]
    %v2178 = vld [vmem:[%s2174 + $0x18] sm:$0xff]
    %s2179 = scalar_lea.vmem %s5, 1
    %v2180 = vld [vmem:[%s2179] sm:$0x1]
    %v2182 = vlaneseq
    %v2183 = vshrl.u32 %v2182, 7
    %v2184 = vsub.s32 0, %v2183
    %v2185 = vrot.slane %v2173, %v2184
    %v2188 = vsel %vm146, %v2165, 0
    %v2191 = vsel %vm146, %v2166, 0
    %2193 = vmatprep.subr.mxu0 0.0
    %2194 = vmatpush1.msra.mxu0 0.0
    %2195 = vmatprep.subr.mxu0 0.0
    %2196 = vmatpush1.msra.mxu0 0.0
    %2197 = vmatprep.subr.mxu0 0.0
    %2198 = vmatpush1.msra.mxu0 0.0
    %2199 = vmatprep.subr.mxu0 0.0
    %2200 = vmatpush1.msra.mxu0 0.0
    %2201 = vmatprep.subr.mxu0 0.0
    %2202 = vmatpush1.msra.mxu0 0.0
    %2203 = vmatprep.subr.mxu0 0.0
    %2204 = vmatpush1.msra.mxu0 0.0
    %2205 = vmatprep.subr.mxu0 0.0
    %2206 = vmatpush1.msra.mxu0 0.0
    %2207 = vmatprep.subr.mxu0 0.0
    %2208 = vmatpush1.msra.mxu0 0.0
    %2209 = vmatprep.subr.mxu0 0.0
    %2210 = vmatpush1.msra.mxu0 0.0
    %2211 = vmatprep.subr.mxu0 0.0
    %2212 = vmatpush1.msra.mxu0 0.0
    %2213 = vmatprep.subr.mxu0 0.0
    %2214 = vmatpush1.msra.mxu0 0.0
    %2215 = vmatprep.subr.mxu0 0.0
    %2216 = vmatpush1.msra.mxu0 0.0
    %2217 = vmatprep.subr.mxu0 0.0
    %2218 = vmatpush1.msra.mxu0 %v2171
    %2219 = vmatprep.subr.mxu0 0.0
    %2220 = vmatpush1.msra.mxu0 %v2170
    %2221 = vmatprep.subr.mxu0 0.0
    %2222 = vmatpush1.msra.mxu0 %v2169
    %2223 = vmatprep.subr.mxu0 0.0
    %2224 = vmatpush1.msra.mxu0 %v2168
    %2225 = vmatprep.subr.mxu0 0.0
    %2226 = vmatpush2.msra.mxu0 0.0
    %2227 = vmatprep.subr.mxu0 0.0
    %2228 = vmatpush2.msra.mxu0 0.0
    %2229 = vmatprep.subr.mxu0 0.0
    %2230 = vmatpush2.msra.mxu0 0.0
    %2231 = vmatprep.subr.mxu0 0.0
    %2232 = vmatpush2.msra.mxu0 0.0
    %2233 = vmatprep.subr.mxu0 0.0
    %2234 = vmatpush2.msra.mxu0 0.0
    %2235 = vmatprep.subr.mxu0 0.0
    %2236 = vmatpush2.msra.mxu0 0.0
    %2237 = vmatprep.subr.mxu0 0.0
    %2238 = vmatpush2.msra.mxu0 0.0
    %2239 = vmatprep.subr.mxu0 0.0
    %2240 = vmatpush2.msra.mxu0 0.0
    %2241 = vmatprep.subr.mxu0 0.0
    %2242 = vmatpush2.msra.mxu0 0.0
    %2243 = vmatprep.subr.mxu0 0.0
    %2244 = vmatpush2.msra.mxu0 0.0
    %2245 = vmatprep.subr.mxu0 0.0
    %2246 = vmatpush2.msra.mxu0 0.0
    %2247 = vmatprep.subr.mxu0 0.0
    %2248 = vmatpush2.msra.mxu0 0.0
    %2249 = vmatprep.subr.mxu0 0.0
    %2250 = vmatpush2.msra.mxu0 0.0
    %2251 = vmatprep.subr.mxu0 0.0
    %2252 = vmatpush2.msra.mxu0 0.0
    %2253 = vmatprep.subr.mxu0 0.0
    %2254 = vmatpush2.msra.mxu0 0.0
    %2255 = vmatprep.subr.mxu0 0.0
    %2256 = vmatpush2.msra.mxu0 0.0
    %2257 = vmatprep.mubr.f32.mxu0 0.0
    %2258 = vmatmul.mubr.f32.gmra.mxu0 %v2188
    %v2259 = vpop.f32.mrf.mxu0
    %v2260 = vadd.f32 %v2185, %v2259
    %v2261 = vpop.f32.mrf.mxu0
    %2262 = vmatprep.mubr.f32.mxu0 0.0
    %2263 = vmatmul.mubr.f32.gmra.mxu0 %v2191
    %v2264 = vpop.f32.mrf.mxu0
    %v2265 = vadd.f32 %v2185, %v2264
    %v2266 = vpop.f32.mrf.mxu0
    %2267 = vdwg.mxu0
    %2269 = vrot.lane.b32.xlu0 %v2260, 96
    %v2270 = vpop.permute.xlu0 %2269
    %v2271 = vsel %vm231, %v2260, 0
    %v2273 = vsel %vm231, %v2270, 0
    %2275 = vmatprep.subr.mxu0 0.0
    %2276 = vmatpush1.xpose.msra.mxu0 0.0
    %2277 = vmatprep.subr.mxu0 0.0
    %2278 = vmatpush1.xpose.msra.mxu0 0.0
    %2279 = vmatprep.subr.mxu0 0.0
    %2280 = vmatpush1.xpose.msra.mxu0 0.0
    %2281 = vmatprep.subr.mxu0 0.0
    %2282 = vmatpush1.xpose.msra.mxu0 0.0
    %2283 = vmatprep.subr.mxu0 0.0
    %2284 = vmatpush1.xpose.msra.mxu0 0.0
    %2285 = vmatprep.subr.mxu0 0.0
    %2286 = vmatpush1.xpose.msra.mxu0 0.0
    %2287 = vmatprep.subr.mxu0 0.0
    %2288 = vmatpush1.xpose.msra.mxu0 0.0
    %2289 = vmatprep.subr.mxu0 0.0
    %2290 = vmatpush1.xpose.msra.mxu0 0.0
    %2291 = vmatprep.subr.mxu0 0.0
    %2292 = vmatpush1.xpose.msra.mxu0 0.0
    %2293 = vmatprep.subr.mxu0 0.0
    %2294 = vmatpush1.xpose.msra.mxu0 0.0
    %2295 = vmatprep.subr.mxu0 0.0
    %2296 = vmatpush1.xpose.msra.mxu0 0.0
    %2297 = vmatprep.subr.mxu0 0.0
    %2298 = vmatpush1.xpose.msra.mxu0 0.0
    %2299 = vmatprep.subr.mxu0 0.0
    %2300 = vmatpush1.xpose.msra.mxu0 0.0
    %2301 = vmatprep.subr.mxu0 0.0
    %2302 = vmatpush1.xpose.msra.mxu0 0.0
    %2303 = vmatprep.subr.mxu0 0.0
    %2304 = vmatpush1.xpose.msra.mxu0 0.0
    %2305 = vmatprep.subr.mxu0 0.0
    %2306 = vmatpush1.xpose.msra.mxu0 %v2273
    %2307 = vmatprep.subr.mxu0 0.0
    %2308 = vmatpush2.xpose.msra.mxu0 0.0
    %2309 = vmatprep.subr.mxu0 0.0
    %2310 = vmatpush2.xpose.msra.mxu0 0.0
    %2311 = vmatprep.subr.mxu0 0.0
    %2312 = vmatpush2.xpose.msra.mxu0 0.0
    %2313 = vmatprep.subr.mxu0 0.0
    %2314 = vmatpush2.xpose.msra.mxu0 0.0
    %2315 = vmatprep.subr.mxu0 0.0
    %2316 = vmatpush2.xpose.msra.mxu0 0.0
    %2317 = vmatprep.subr.mxu0 0.0
    %2318 = vmatpush2.xpose.msra.mxu0 0.0
    %2319 = vmatprep.subr.mxu0 0.0
    %2320 = vmatpush2.xpose.msra.mxu0 0.0
    %2321 = vmatprep.subr.mxu0 0.0
    %2322 = vmatpush2.xpose.msra.mxu0 0.0
    %2323 = vmatprep.subr.mxu0 0.0
    %2324 = vmatpush2.xpose.msra.mxu0 0.0
    %2325 = vmatprep.subr.mxu0 0.0
    %2326 = vmatpush2.xpose.msra.mxu0 0.0
    %2327 = vmatprep.subr.mxu0 0.0
    %2328 = vmatpush2.xpose.msra.mxu0 0.0
    %2329 = vmatprep.subr.mxu0 0.0
    %2330 = vmatpush2.xpose.msra.mxu0 0.0
    %2331 = vmatprep.subr.mxu0 0.0
    %2332 = vmatpush2.xpose.msra.mxu0 0.0
    %2333 = vmatprep.subr.mxu0 0.0
    %2334 = vmatpush2.xpose.msra.mxu0 0.0
    %2335 = vmatprep.subr.mxu0 0.0
    %2336 = vmatpush2.xpose.msra.mxu0 0.0
    %2337 = vmatprep.subr.mxu0 0.0
    %2338 = vmatpush2.xpose.msra.mxu0 0.0
    %2339 = vmatprep.mubr.f32.mxu0 0.0
    %2340 = vmatmul.mubr.f32.gmra.mxu0 %v2271
    %v2341 = vpop.f32.mrf.mxu0
    %v2342 = vadd.f32 %v128, %v2341
    %v2343 = vpop.f32.mrf.mxu0
    %2344 = vdwg.mxu0
    %2346 = vrot.lane.b32.xlu0 %v2265, 96
    %v2347 = vpop.permute.xlu0 %2346
    %v2348 = vsel %vm231, %v2265, 0
    %v2350 = vsel %vm231, %v2347, 0
    %2352 = vmatprep.subr.mxu0 0.0
    %2353 = vmatpush1.xpose.msra.mxu0 0.0
    %2354 = vmatprep.subr.mxu0 0.0
    %2355 = vmatpush1.xpose.msra.mxu0 0.0
    %2356 = vmatprep.subr.mxu0 0.0
    %2357 = vmatpush1.xpose.msra.mxu0 0.0
    %2358 = vmatprep.subr.mxu0 0.0
    %2359 = vmatpush1.xpose.msra.mxu0 0.0
    %2360 = vmatprep.subr.mxu0 0.0
    %2361 = vmatpush1.xpose.msra.mxu0 0.0
    %2362 = vmatprep.subr.mxu0 0.0
    %2363 = vmatpush1.xpose.msra.mxu0 0.0
    %2364 = vmatprep.subr.mxu0 0.0
    %2365 = vmatpush1.xpose.msra.mxu0 0.0
    %2366 = vmatprep.subr.mxu0 0.0
    %2367 = vmatpush1.xpose.msra.mxu0 0.0
    %2368 = vmatprep.subr.mxu0 0.0
    %2369 = vmatpush1.xpose.msra.mxu0 0.0
    %2370 = vmatprep.subr.mxu0 0.0
    %2371 = vmatpush1.xpose.msra.mxu0 0.0
    %2372 = vmatprep.subr.mxu0 0.0
    %2373 = vmatpush1.xpose.msra.mxu0 0.0
    %2374 = vmatprep.subr.mxu0 0.0
    %2375 = vmatpush1.xpose.msra.mxu0 0.0
    %2376 = vmatprep.subr.mxu0 0.0
    %2377 = vmatpush1.xpose.msra.mxu0 0.0
    %2378 = vmatprep.subr.mxu0 0.0
    %2379 = vmatpush1.xpose.msra.mxu0 0.0
    %2380 = vmatprep.subr.mxu0 0.0
    %2381 = vmatpush1.xpose.msra.mxu0 0.0
    %2382 = vmatprep.subr.mxu0 0.0
    %2383 = vmatpush1.xpose.msra.mxu0 %v2350
    %2384 = vmatprep.subr.mxu0 0.0
    %2385 = vmatpush2.xpose.msra.mxu0 0.0
    %2386 = vmatprep.subr.mxu0 0.0
    %2387 = vmatpush2.xpose.msra.mxu0 0.0
    %2388 = vmatprep.subr.mxu0 0.0
    %2389 = vmatpush2.xpose.msra.mxu0 0.0
    %2390 = vmatprep.subr.mxu0 0.0
    %2391 = vmatpush2.xpose.msra.mxu0 0.0
    %2392 = vmatprep.subr.mxu0 0.0
    %2393 = vmatpush2.xpose.msra.mxu0 0.0
    %2394 = vmatprep.subr.mxu0 0.0
    %2395 = vmatpush2.xpose.msra.mxu0 0.0
    %2396 = vmatprep.subr.mxu0 0.0
    %2397 = vmatpush2.xpose.msra.mxu0 0.0
    %2398 = vmatprep.subr.mxu0 0.0
    %2399 = vmatpush2.xpose.msra.mxu0 0.0
    %2400 = vmatprep.subr.mxu0 0.0
    %2401 = vmatpush2.xpose.msra.mxu0 0.0
    %2402 = vmatprep.subr.mxu0 0.0
    %2403 = vmatpush2.xpose.msra.mxu0 0.0
    %2404 = vmatprep.subr.mxu0 0.0
    %2405 = vmatpush2.xpose.msra.mxu0 0.0
    %2406 = vmatprep.subr.mxu0 0.0
    %2407 = vmatpush2.xpose.msra.mxu0 0.0
    %2408 = vmatprep.subr.mxu0 0.0
    %2409 = vmatpush2.xpose.msra.mxu0 0.0
    %2410 = vmatprep.subr.mxu0 0.0
    %2411 = vmatpush2.xpose.msra.mxu0 0.0
    %2412 = vmatprep.subr.mxu0 0.0
    %2413 = vmatpush2.xpose.msra.mxu0 0.0
    %2414 = vmatprep.subr.mxu0 0.0
    %2415 = vmatpush2.xpose.msra.mxu0 0.0
    %2416 = vmatprep.mubr.f32.mxu0 0.0
    %2417 = vmatmul.mubr.f32.gmra.mxu0 %v2348
    %v2418 = vpop.f32.mrf.mxu0
    %v2419 = vadd.f32 %v129, %v2418
    %v2420 = vpop.f32.mrf.mxu0
    %2421 = vdwg.mxu0
    %v2422 = vsel %vm231, %v2342, -inf
    %2423 = vmax.xlane.f32.xlu0 %v2422
    %v2424 = vpop.xlane.xlu0 %2423
    %v2425 = vsel %vm231, %v2419, -inf
    %2426 = vmax.xlane.f32.xlu0 %v2425
    %v2427 = vpop.xlane.xlu0 %2426
    %v2428 = vsub.f32 %v2342, %v2424
    %v2429 = vsub.f32 %v2419, %v2427
    %v2430 = vmul.f32 %v2428, 1.442695
    %v2431 = vpow.pop %v2430
    %v2432 = vmul.f32 %v2429, 1.442695
    %v2433 = vpow.pop %v2432
    %v2434 = vsel %vm231, %v2431, 0.0
    %2435 = vadd.xlane.f32.xlu0 %v2434
    %v2436 = vpop.xlane.xlu0 %2435
    %v2437 = vsel %vm231, %v2433, 0.0
    %2438 = vadd.xlane.f32.xlu0 %v2437
    %v2439 = vpop.xlane.xlu0 %2438
    %v2440 = vrcp.pop %v2436
    %v2441 = vrcp.pop %v2439
    %v2442 = vmul.f32 %v2431, %v2440
    %v2443 = vmul.f32 %v2433, %v2441
    %2444 = vrot.lane.b32.xlu0 %v2260, 64
    %v2445 = vpop.permute.xlu0 %2444
    %v2448 = vsel %vm231, %v2442, 0
    %2450 = vmatprep.subr.mxu0 0.0
    %2451 = vmatpush1.msra.mxu0 0.0
    %2452 = vmatprep.subr.mxu0 0.0
    %2453 = vmatpush1.msra.mxu0 0.0
    %2454 = vmatprep.subr.mxu0 0.0
    %2455 = vmatpush1.msra.mxu0 0.0
    %2456 = vmatprep.subr.mxu0 0.0
    %2457 = vmatpush1.msra.mxu0 0.0
    %2458 = vmatprep.subr.mxu0 0.0
    %2459 = vmatpush1.msra.mxu0 0.0
    %2460 = vmatprep.subr.mxu0 0.0
    %2461 = vmatpush1.msra.mxu0 0.0
    %2462 = vmatprep.subr.mxu0 0.0
    %2463 = vmatpush1.msra.mxu0 0.0
    %2464 = vmatprep.subr.mxu0 0.0
    %2465 = vmatpush1.msra.mxu0 0.0
    %2466 = vmatprep.subr.mxu0 0.0
    %2467 = vmatpush1.msra.mxu0 0.0
    %2468 = vmatprep.subr.mxu0 0.0
    %2469 = vmatpush1.msra.mxu0 0.0
    %2470 = vmatprep.subr.mxu0 0.0
    %2471 = vmatpush1.msra.mxu0 0.0
    %2472 = vmatprep.subr.mxu0 0.0
    %2473 = vmatpush1.msra.mxu0 0.0
    %2474 = vmatprep.subr.mxu0 0.0
    %2475 = vmatpush1.msra.mxu0 0.0
    %2476 = vmatprep.subr.mxu0 0.0
    %2477 = vmatpush1.msra.mxu0 0.0
    %2478 = vmatprep.subr.mxu0 0.0
    %2479 = vmatpush1.msra.mxu0 0.0
    %2480 = vmatprep.subr.mxu0 0.0
    %2481 = vmatpush1.msra.mxu0 %v2445
    %2482 = vmatprep.subr.mxu0 0.0
    %2483 = vmatpush2.msra.mxu0 0.0
    %2484 = vmatprep.subr.mxu0 0.0
    %2485 = vmatpush2.msra.mxu0 0.0
    %2486 = vmatprep.subr.mxu0 0.0
    %2487 = vmatpush2.msra.mxu0 0.0
    %2488 = vmatprep.subr.mxu0 0.0
    %2489 = vmatpush2.msra.mxu0 0.0
    %2490 = vmatprep.subr.mxu0 0.0
    %2491 = vmatpush2.msra.mxu0 0.0
    %2492 = vmatprep.subr.mxu0 0.0
    %2493 = vmatpush2.msra.mxu0 0.0
    %2494 = vmatprep.subr.mxu0 0.0
    %2495 = vmatpush2.msra.mxu0 0.0
    %2496 = vmatprep.subr.mxu0 0.0
    %2497 = vmatpush2.msra.mxu0 0.0
    %2498 = vmatprep.subr.mxu0 0.0
    %2499 = vmatpush2.msra.mxu0 0.0
    %2500 = vmatprep.subr.mxu0 0.0
    %2501 = vmatpush2.msra.mxu0 0.0
    %2502 = vmatprep.subr.mxu0 0.0
    %2503 = vmatpush2.msra.mxu0 0.0
    %2504 = vmatprep.subr.mxu0 0.0
    %2505 = vmatpush2.msra.mxu0 0.0
    %2506 = vmatprep.subr.mxu0 0.0
    %2507 = vmatpush2.msra.mxu0 0.0
    %2508 = vmatprep.subr.mxu0 0.0
    %2509 = vmatpush2.msra.mxu0 0.0
    %2510 = vmatprep.subr.mxu0 0.0
    %2511 = vmatpush2.msra.mxu0 0.0
    %2512 = vmatprep.subr.mxu0 0.0
    %2513 = vmatpush2.msra.mxu0 0.0
    %2514 = vmatprep.mubr.f32.mxu0 0.0
    %2515 = vmatmul.mubr.f32.gmra.mxu0 %v2448
    %v2516 = vpop.f32.mrf.mxu0
    %v2517 = vadd.f32 0.0, %v2516
    %v2518 = vpop.f32.mrf.mxu0
    %2519 = vdwg.mxu0
    %2520 = vrot.lane.b32.xlu0 %v2265, 64
    %v2521 = vpop.permute.xlu0 %2520
    %v2524 = vsel %vm231, %v2443, 0
    %2526 = vmatprep.subr.mxu0 0.0
    %2527 = vmatpush1.msra.mxu0 0.0
    %2528 = vmatprep.subr.mxu0 0.0
    %2529 = vmatpush1.msra.mxu0 0.0
    %2530 = vmatprep.subr.mxu0 0.0
    %2531 = vmatpush1.msra.mxu0 0.0
    %2532 = vmatprep.subr.mxu0 0.0
    %2533 = vmatpush1.msra.mxu0 0.0
    %2534 = vmatprep.subr.mxu0 0.0
    %2535 = vmatpush1.msra.mxu0 0.0
    %2536 = vmatprep.subr.mxu0 0.0
    %2537 = vmatpush1.msra.mxu0 0.0
    %2538 = vmatprep.subr.mxu0 0.0
    %2539 = vmatpush1.msra.mxu0 0.0
    %2540 = vmatprep.subr.mxu0 0.0
    %2541 = vmatpush1.msra.mxu0 0.0
    %2542 = vmatprep.subr.mxu0 0.0
    %2543 = vmatpush1.msra.mxu0 0.0
    %2544 = vmatprep.subr.mxu0 0.0
    %2545 = vmatpush1.msra.mxu0 0.0
    %2546 = vmatprep.subr.mxu0 0.0
    %2547 = vmatpush1.msra.mxu0 0.0
    %2548 = vmatprep.subr.mxu0 0.0
    %2549 = vmatpush1.msra.mxu0 0.0
    %2550 = vmatprep.subr.mxu0 0.0
    %2551 = vmatpush1.msra.mxu0 0.0
    %2552 = vmatprep.subr.mxu0 0.0
    %2553 = vmatpush1.msra.mxu0 0.0
    %2554 = vmatprep.subr.mxu0 0.0
    %2555 = vmatpush1.msra.mxu0 0.0
    %2556 = vmatprep.subr.mxu0 0.0
    %2557 = vmatpush1.msra.mxu0 %v2521
    %2558 = vmatprep.subr.mxu0 0.0
    %2559 = vmatpush2.msra.mxu0 0.0
    %2560 = vmatprep.subr.mxu0 0.0
    %2561 = vmatpush2.msra.mxu0 0.0
    %2562 = vmatprep.subr.mxu0 0.0
    %2563 = vmatpush2.msra.mxu0 0.0
    %2564 = vmatprep.subr.mxu0 0.0
    %2565 = vmatpush2.msra.mxu0 0.0
    %2566 = vmatprep.subr.mxu0 0.0
    %2567 = vmatpush2.msra.mxu0 0.0
    %2568 = vmatprep.subr.mxu0 0.0
    %2569 = vmatpush2.msra.mxu0 0.0
    %2570 = vmatprep.subr.mxu0 0.0
    %2571 = vmatpush2.msra.mxu0 0.0
    %2572 = vmatprep.subr.mxu0 0.0
    %2573 = vmatpush2.msra.mxu0 0.0
    %2574 = vmatprep.subr.mxu0 0.0
    %2575 = vmatpush2.msra.mxu0 0.0
    %2576 = vmatprep.subr.mxu0 0.0
    %2577 = vmatpush2.msra.mxu0 0.0
    %2578 = vmatprep.subr.mxu0 0.0
    %2579 = vmatpush2.msra.mxu0 0.0
    %2580 = vmatprep.subr.mxu0 0.0
    %2581 = vmatpush2.msra.mxu0 0.0
    %2582 = vmatprep.subr.mxu0 0.0
    %2583 = vmatpush2.msra.mxu0 0.0
    %2584 = vmatprep.subr.mxu0 0.0
    %2585 = vmatpush2.msra.mxu0 0.0
    %2586 = vmatprep.subr.mxu0 0.0
    %2587 = vmatpush2.msra.mxu0 0.0
    %2588 = vmatprep.subr.mxu0 0.0
    %2589 = vmatpush2.msra.mxu0 0.0
    %2590 = vmatprep.mubr.f32.mxu0 0.0
    %2591 = vmatmul.mubr.f32.gmra.mxu0 %v2524
    %v2592 = vpop.f32.mrf.mxu0
    %v2593 = vadd.f32 0.0, %v2592
    %v2594 = vpop.f32.mrf.mxu0
    %2595 = vdwg.mxu0
    %2596 = vrot.lane.b32.xlu0 %v2260, 120
    %v2597 = vpop.permute.xlu0 %2596
    %2598 = vrot.lane.b32.xlu0 %v2260, 88
    %v2599 = vpop.permute.xlu0 %2598
    %v2600 = vsel %vm231, %v2597, 0
    %v2602 = vsel %vm231, %v2599, 0
    %2604 = vmatprep.subr.mxu0 0.0
    %2605 = vmatpush1.xpose.msra.mxu0 0.0
    %2606 = vmatprep.subr.mxu0 0.0
    %2607 = vmatpush1.xpose.msra.mxu0 0.0
    %2608 = vmatprep.subr.mxu0 0.0
    %2609 = vmatpush1.xpose.msra.mxu0 0.0
    %2610 = vmatprep.subr.mxu0 0.0
    %2611 = vmatpush1.xpose.msra.mxu0 0.0
    %2612 = vmatprep.subr.mxu0 0.0
    %2613 = vmatpush1.xpose.msra.mxu0 0.0
    %2614 = vmatprep.subr.mxu0 0.0
    %2615 = vmatpush1.xpose.msra.mxu0 0.0
    %2616 = vmatprep.subr.mxu0 0.0
    %2617 = vmatpush1.xpose.msra.mxu0 0.0
    %2618 = vmatprep.subr.mxu0 0.0
    %2619 = vmatpush1.xpose.msra.mxu0 0.0
    %2620 = vmatprep.subr.mxu0 0.0
    %2621 = vmatpush1.xpose.msra.mxu0 0.0
    %2622 = vmatprep.subr.mxu0 0.0
    %2623 = vmatpush1.xpose.msra.mxu0 0.0
    %2624 = vmatprep.subr.mxu0 0.0
    %2625 = vmatpush1.xpose.msra.mxu0 0.0
    %2626 = vmatprep.subr.mxu0 0.0
    %2627 = vmatpush1.xpose.msra.mxu0 0.0
    %2628 = vmatprep.subr.mxu0 0.0
    %2629 = vmatpush1.xpose.msra.mxu0 0.0
    %2630 = vmatprep.subr.mxu0 0.0
    %2631 = vmatpush1.xpose.msra.mxu0 0.0
    %2632 = vmatprep.subr.mxu0 0.0
    %2633 = vmatpush1.xpose.msra.mxu0 0.0
    %2634 = vmatprep.subr.mxu0 0.0
    %2635 = vmatpush1.xpose.msra.mxu0 %v2602
    %2636 = vmatprep.subr.mxu0 0.0
    %2637 = vmatpush2.xpose.msra.mxu0 0.0
    %2638 = vmatprep.subr.mxu0 0.0
    %2639 = vmatpush2.xpose.msra.mxu0 0.0
    %2640 = vmatprep.subr.mxu0 0.0
    %2641 = vmatpush2.xpose.msra.mxu0 0.0
    %2642 = vmatprep.subr.mxu0 0.0
    %2643 = vmatpush2.xpose.msra.mxu0 0.0
    %2644 = vmatprep.subr.mxu0 0.0
    %2645 = vmatpush2.xpose.msra.mxu0 0.0
    %2646 = vmatprep.subr.mxu0 0.0
    %2647 = vmatpush2.xpose.msra.mxu0 0.0
    %2648 = vmatprep.subr.mxu0 0.0
    %2649 = vmatpush2.xpose.msra.mxu0 0.0
    %2650 = vmatprep.subr.mxu0 0.0
    %2651 = vmatpush2.xpose.msra.mxu0 0.0
    %2652 = vmatprep.subr.mxu0 0.0
    %2653 = vmatpush2.xpose.msra.mxu0 0.0
    %2654 = vmatprep.subr.mxu0 0.0
    %2655 = vmatpush2.xpose.msra.mxu0 0.0
    %2656 = vmatprep.subr.mxu0 0.0
    %2657 = vmatpush2.xpose.msra.mxu0 0.0
    %2658 = vmatprep.subr.mxu0 0.0
    %2659 = vmatpush2.xpose.msra.mxu0 0.0
    %2660 = vmatprep.subr.mxu0 0.0
    %2661 = vmatpush2.xpose.msra.mxu0 0.0
    %2662 = vmatprep.subr.mxu0 0.0
    %2663 = vmatpush2.xpose.msra.mxu0 0.0
    %2664 = vmatprep.subr.mxu0 0.0
    %2665 = vmatpush2.xpose.msra.mxu0 0.0
    %2666 = vmatprep.subr.mxu0 0.0
    %2667 = vmatpush2.xpose.msra.mxu0 0.0
    %2668 = vmatprep.mubr.f32.mxu0 0.0
    %2669 = vmatmul.mubr.f32.gmra.mxu0 %v2600
    %v2670 = vpop.f32.mrf.mxu0
    %v2671 = vadd.f32 %v128, %v2670
    %v2672 = vpop.f32.mrf.mxu0
    %2673 = vdwg.mxu0
    %2674 = vrot.lane.b32.xlu0 %v2265, 120
    %v2675 = vpop.permute.xlu0 %2674
    %2676 = vrot.lane.b32.xlu0 %v2265, 88
    %v2677 = vpop.permute.xlu0 %2676
    %v2678 = vsel %vm231, %v2675, 0
    %v2680 = vsel %vm231, %v2677, 0
    %2682 = vmatprep.subr.mxu0 0.0
    %2683 = vmatpush1.xpose.msra.mxu0 0.0
    %2684 = vmatprep.subr.mxu0 0.0
    %2685 = vmatpush1.xpose.msra.mxu0 0.0
    %2686 = vmatprep.subr.mxu0 0.0
    %2687 = vmatpush1.xpose.msra.mxu0 0.0
    %2688 = vmatprep.subr.mxu0 0.0
    %2689 = vmatpush1.xpose.msra.mxu0 0.0
    %2690 = vmatprep.subr.mxu0 0.0
    %2691 = vmatpush1.xpose.msra.mxu0 0.0
    %2692 = vmatprep.subr.mxu0 0.0
    %2693 = vmatpush1.xpose.msra.mxu0 0.0
    %2694 = vmatprep.subr.mxu0 0.0
    %2695 = vmatpush1.xpose.msra.mxu0 0.0
    %2696 = vmatprep.subr.mxu0 0.0
    %2697 = vmatpush1.xpose.msra.mxu0 0.0
    %2698 = vmatprep.subr.mxu0 0.0
    %2699 = vmatpush1.xpose.msra.mxu0 0.0
    %2700 = vmatprep.subr.mxu0 0.0
    %2701 = vmatpush1.xpose.msra.mxu0 0.0
    %2702 = vmatprep.subr.mxu0 0.0
    %2703 = vmatpush1.xpose.msra.mxu0 0.0
    %2704 = vmatprep.subr.mxu0 0.0
    %2705 = vmatpush1.xpose.msra.mxu0 0.0
    %2706 = vmatprep.subr.mxu0 0.0
    %2707 = vmatpush1.xpose.msra.mxu0 0.0
    %2708 = vmatprep.subr.mxu0 0.0
    %2709 = vmatpush1.xpose.msra.mxu0 0.0
    %2710 = vmatprep.subr.mxu0 0.0
    %2711 = vmatpush1.xpose.msra.mxu0 0.0
    %2712 = vmatprep.subr.mxu0 0.0
    %2713 = vmatpush1.xpose.msra.mxu0 %v2680
    %2714 = vmatprep.subr.mxu0 0.0
    %2715 = vmatpush2.xpose.msra.mxu0 0.0
    %2716 = vmatprep.subr.mxu0 0.0
    %2717 = vmatpush2.xpose.msra.mxu0 0.0
    %2718 = vmatprep.subr.mxu0 0.0
    %2719 = vmatpush2.xpose.msra.mxu0 0.0
    %2720 = vmatprep.subr.mxu0 0.0
    %2721 = vmatpush2.xpose.msra.mxu0 0.0
    %2722 = vmatprep.subr.mxu0 0.0
    %2723 = vmatpush2.xpose.msra.mxu0 0.0
    %2724 = vmatprep.subr.mxu0 0.0
    %2725 = vmatpush2.xpose.msra.mxu0 0.0
    %2726 = vmatprep.subr.mxu0 0.0
    %2727 = vmatpush2.xpose.msra.mxu0 0.0
    %2728 = vmatprep.subr.mxu0 0.0
    %2729 = vmatpush2.xpose.msra.mxu0 0.0
    %2730 = vmatprep.subr.mxu0 0.0
    %2731 = vmatpush2.xpose.msra.mxu0 0.0
    %2732 = vmatprep.subr.mxu0 0.0
    %2733 = vmatpush2.xpose.msra.mxu0 0.0
    %2734 = vmatprep.subr.mxu0 0.0
    %2735 = vmatpush2.xpose.msra.mxu0 0.0
    %2736 = vmatprep.subr.mxu0 0.0
    %2737 = vmatpush2.xpose.msra.mxu0 0.0
    %2738 = vmatprep.subr.mxu0 0.0
    %2739 = vmatpush2.xpose.msra.mxu0 0.0
    %2740 = vmatprep.subr.mxu0 0.0
    %2741 = vmatpush2.xpose.msra.mxu0 0.0
    %2742 = vmatprep.subr.mxu0 0.0
    %2743 = vmatpush2.xpose.msra.mxu0 0.0
    %2744 = vmatprep.subr.mxu0 0.0
    %2745 = vmatpush2.xpose.msra.mxu0 0.0
    %2746 = vmatprep.mubr.f32.mxu0 0.0
    %2747 = vmatmul.mubr.f32.gmra.mxu0 %v2678
    %v2748 = vpop.f32.mrf.mxu0
    %v2749 = vadd.f32 %v129, %v2748
    %v2750 = vpop.f32.mrf.mxu0
    %2751 = vdwg.mxu0
    %v2752 = vsel %vm231, %v2671, -inf
    %2753 = vmax.xlane.f32.xlu0 %v2752
    %v2754 = vpop.xlane.xlu0 %2753
    %v2755 = vsel %vm231, %v2749, -inf
    %2756 = vmax.xlane.f32.xlu0 %v2755
    %v2757 = vpop.xlane.xlu0 %2756
    %v2758 = vsub.f32 %v2671, %v2754
    %v2759 = vsub.f32 %v2749, %v2757
    %v2760 = vmul.f32 %v2758, 1.442695
    %v2761 = vpow.pop %v2760
    %v2762 = vmul.f32 %v2759, 1.442695
    %v2763 = vpow.pop %v2762
    %v2764 = vsel %vm231, %v2761, 0.0
    %2765 = vadd.xlane.f32.xlu0 %v2764
    %v2766 = vpop.xlane.xlu0 %2765
    %v2767 = vsel %vm231, %v2763, 0.0
    %2768 = vadd.xlane.f32.xlu0 %v2767
    %v2769 = vpop.xlane.xlu0 %2768
    %v2770 = vrcp.pop %v2766
    %v2771 = vrcp.pop %v2769
    %v2772 = vmul.f32 %v2761, %v2770
    %v2773 = vmul.f32 %v2763, %v2771
    %2774 = vrot.lane.b32.xlu0 %v2260, 56
    %v2775 = vpop.permute.xlu0 %2774
    %v2778 = vsel %vm231, %v2772, 0
    %2780 = vmatprep.subr.mxu0 0.0
    %2781 = vmatpush1.msra.mxu0 0.0
    %2782 = vmatprep.subr.mxu0 0.0
    %2783 = vmatpush1.msra.mxu0 0.0
    %2784 = vmatprep.subr.mxu0 0.0
    %2785 = vmatpush1.msra.mxu0 0.0
    %2786 = vmatprep.subr.mxu0 0.0
    %2787 = vmatpush1.msra.mxu0 0.0
    %2788 = vmatprep.subr.mxu0 0.0
    %2789 = vmatpush1.msra.mxu0 0.0
    %2790 = vmatprep.subr.mxu0 0.0
    %2791 = vmatpush1.msra.mxu0 0.0
    %2792 = vmatprep.subr.mxu0 0.0
    %2793 = vmatpush1.msra.mxu0 0.0
    %2794 = vmatprep.subr.mxu0 0.0
    %2795 = vmatpush1.msra.mxu0 0.0
    %2796 = vmatprep.subr.mxu0 0.0
    %2797 = vmatpush1.msra.mxu0 0.0
    %2798 = vmatprep.subr.mxu0 0.0
    %2799 = vmatpush1.msra.mxu0 0.0
    %2800 = vmatprep.subr.mxu0 0.0
    %2801 = vmatpush1.msra.mxu0 0.0
    %2802 = vmatprep.subr.mxu0 0.0
    %2803 = vmatpush1.msra.mxu0 0.0
    %2804 = vmatprep.subr.mxu0 0.0
    %2805 = vmatpush1.msra.mxu0 0.0
    %2806 = vmatprep.subr.mxu0 0.0
    %2807 = vmatpush1.msra.mxu0 0.0
    %2808 = vmatprep.subr.mxu0 0.0
    %2809 = vmatpush1.msra.mxu0 0.0
    %2810 = vmatprep.subr.mxu0 0.0
    %2811 = vmatpush1.msra.mxu0 %v2775
    %2812 = vmatprep.subr.mxu0 0.0
    %2813 = vmatpush2.msra.mxu0 0.0
    %2814 = vmatprep.subr.mxu0 0.0
    %2815 = vmatpush2.msra.mxu0 0.0
    %2816 = vmatprep.subr.mxu0 0.0
    %2817 = vmatpush2.msra.mxu0 0.0
    %2818 = vmatprep.subr.mxu0 0.0
    %2819 = vmatpush2.msra.mxu0 0.0
    %2820 = vmatprep.subr.mxu0 0.0
    %2821 = vmatpush2.msra.mxu0 0.0
    %2822 = vmatprep.subr.mxu0 0.0
    %2823 = vmatpush2.msra.mxu0 0.0
    %2824 = vmatprep.subr.mxu0 0.0
    %2825 = vmatpush2.msra.mxu0 0.0
    %2826 = vmatprep.subr.mxu0 0.0
    %2827 = vmatpush2.msra.mxu0 0.0
    %2828 = vmatprep.subr.mxu0 0.0
    %2829 = vmatpush2.msra.mxu0 0.0
    %2830 = vmatprep.subr.mxu0 0.0
    %2831 = vmatpush2.msra.mxu0 0.0
    %2832 = vmatprep.subr.mxu0 0.0
    %2833 = vmatpush2.msra.mxu0 0.0
    %2834 = vmatprep.subr.mxu0 0.0
    %2835 = vmatpush2.msra.mxu0 0.0
    %2836 = vmatprep.subr.mxu0 0.0
    %2837 = vmatpush2.msra.mxu0 0.0
    %2838 = vmatprep.subr.mxu0 0.0
    %2839 = vmatpush2.msra.mxu0 0.0
    %2840 = vmatprep.subr.mxu0 0.0
    %2841 = vmatpush2.msra.mxu0 0.0
    %2842 = vmatprep.subr.mxu0 0.0
    %2843 = vmatpush2.msra.mxu0 0.0
    %2844 = vmatprep.mubr.f32.mxu0 0.0
    %2845 = vmatmul.mubr.f32.gmra.mxu0 %v2778
    %v2846 = vpop.f32.mrf.mxu0
    %v2847 = vadd.f32 0.0, %v2846
    %v2848 = vpop.f32.mrf.mxu0
    %2849 = vdwg.mxu0
    %2850 = vrot.lane.b32.xlu0 %v2265, 56
    %v2851 = vpop.permute.xlu0 %2850
    %v2854 = vsel %vm231, %v2773, 0
    %2856 = vmatprep.subr.mxu0 0.0
    %2857 = vmatpush1.msra.mxu0 0.0
    %2858 = vmatprep.subr.mxu0 0.0
    %2859 = vmatpush1.msra.mxu0 0.0
    %2860 = vmatprep.subr.mxu0 0.0
    %2861 = vmatpush1.msra.mxu0 0.0
    %2862 = vmatprep.subr.mxu0 0.0
    %2863 = vmatpush1.msra.mxu0 0.0
    %2864 = vmatprep.subr.mxu0 0.0
    %2865 = vmatpush1.msra.mxu0 0.0
    %2866 = vmatprep.subr.mxu0 0.0
    %2867 = vmatpush1.msra.mxu0 0.0
    %2868 = vmatprep.subr.mxu0 0.0
    %2869 = vmatpush1.msra.mxu0 0.0
    %2870 = vmatprep.subr.mxu0 0.0
    %2871 = vmatpush1.msra.mxu0 0.0
    %2872 = vmatprep.subr.mxu0 0.0
    %2873 = vmatpush1.msra.mxu0 0.0
    %2874 = vmatprep.subr.mxu0 0.0
    %2875 = vmatpush1.msra.mxu0 0.0
    %2876 = vmatprep.subr.mxu0 0.0
    %2877 = vmatpush1.msra.mxu0 0.0
    %2878 = vmatprep.subr.mxu0 0.0
    %2879 = vmatpush1.msra.mxu0 0.0
    %2880 = vmatprep.subr.mxu0 0.0
    %2881 = vmatpush1.msra.mxu0 0.0
    %2882 = vmatprep.subr.mxu0 0.0
    %2883 = vmatpush1.msra.mxu0 0.0
    %2884 = vmatprep.subr.mxu0 0.0
    %2885 = vmatpush1.msra.mxu0 0.0
    %2886 = vmatprep.subr.mxu0 0.0
    %2887 = vmatpush1.msra.mxu0 %v2851
    %2888 = vmatprep.subr.mxu0 0.0
    %2889 = vmatpush2.msra.mxu0 0.0
    %2890 = vmatprep.subr.mxu0 0.0
    %2891 = vmatpush2.msra.mxu0 0.0
    %2892 = vmatprep.subr.mxu0 0.0
    %2893 = vmatpush2.msra.mxu0 0.0
    %2894 = vmatprep.subr.mxu0 0.0
    %2895 = vmatpush2.msra.mxu0 0.0
    %2896 = vmatprep.subr.mxu0 0.0
    %2897 = vmatpush2.msra.mxu0 0.0
    %2898 = vmatprep.subr.mxu0 0.0
    %2899 = vmatpush2.msra.mxu0 0.0
    %2900 = vmatprep.subr.mxu0 0.0
    %2901 = vmatpush2.msra.mxu0 0.0
    %2902 = vmatprep.subr.mxu0 0.0
    %2903 = vmatpush2.msra.mxu0 0.0
    %2904 = vmatprep.subr.mxu0 0.0
    %2905 = vmatpush2.msra.mxu0 0.0
    %2906 = vmatprep.subr.mxu0 0.0
    %2907 = vmatpush2.msra.mxu0 0.0
    %2908 = vmatprep.subr.mxu0 0.0
    %2909 = vmatpush2.msra.mxu0 0.0
    %2910 = vmatprep.subr.mxu0 0.0
    %2911 = vmatpush2.msra.mxu0 0.0
    %2912 = vmatprep.subr.mxu0 0.0
    %2913 = vmatpush2.msra.mxu0 0.0
    %2914 = vmatprep.subr.mxu0 0.0
    %2915 = vmatpush2.msra.mxu0 0.0
    %2916 = vmatprep.subr.mxu0 0.0
    %2917 = vmatpush2.msra.mxu0 0.0
    %2918 = vmatprep.subr.mxu0 0.0
    %2919 = vmatpush2.msra.mxu0 0.0
    %2920 = vmatprep.mubr.f32.mxu0 0.0
    %2921 = vmatmul.mubr.f32.gmra.mxu0 %v2854
    %v2922 = vpop.f32.mrf.mxu0
    %v2923 = vadd.f32 0.0, %v2922
    %v2924 = vpop.f32.mrf.mxu0
    %2925 = vdwg.mxu0
    %v2927 = vsel %vm231, %v2847, 0
    %v2930 = vsel %vm231, %v2923, 0
    %2932 = vmatprep.subr.mxu0 0.0
    %2933 = vmatpush1.msra.mxu0 0.0
    %2934 = vmatprep.subr.mxu0 0.0
    %2935 = vmatpush1.msra.mxu0 0.0
    %2936 = vmatprep.subr.mxu0 0.0
    %2937 = vmatpush1.msra.mxu0 0.0
    %2938 = vmatprep.subr.mxu0 0.0
    %2939 = vmatpush1.msra.mxu0 0.0
    %2940 = vmatprep.subr.mxu0 0.0
    %2941 = vmatpush1.msra.mxu0 0.0
    %2942 = vmatprep.subr.mxu0 0.0
    %2943 = vmatpush1.msra.mxu0 0.0
    %2944 = vmatprep.subr.mxu0 0.0
    %2945 = vmatpush1.msra.mxu0 0.0
    %2946 = vmatprep.subr.mxu0 0.0
    %2947 = vmatpush1.msra.mxu0 0.0
    %2948 = vmatprep.subr.mxu0 0.0
    %2949 = vmatpush1.msra.mxu0 0.0
    %2950 = vmatprep.subr.mxu0 0.0
    %2951 = vmatpush1.msra.mxu0 0.0
    %2952 = vmatprep.subr.mxu0 0.0
    %2953 = vmatpush1.msra.mxu0 0.0
    %2954 = vmatprep.subr.mxu0 0.0
    %2955 = vmatpush1.msra.mxu0 0.0
    %2956 = vmatprep.subr.mxu0 0.0
    %2957 = vmatpush1.msra.mxu0 0.0
    %2958 = vmatprep.subr.mxu0 0.0
    %2959 = vmatpush1.msra.mxu0 0.0
    %2960 = vmatprep.subr.mxu0 0.0
    %2961 = vmatpush1.msra.mxu0 0.0
    %2962 = vmatprep.subr.mxu0 0.0
    %2963 = vmatpush1.msra.mxu0 %v2176
    %2964 = vmatprep.subr.mxu0 0.0
    %2965 = vmatpush2.msra.mxu0 0.0
    %2966 = vmatprep.subr.mxu0 0.0
    %2967 = vmatpush2.msra.mxu0 0.0
    %2968 = vmatprep.subr.mxu0 0.0
    %2969 = vmatpush2.msra.mxu0 0.0
    %2970 = vmatprep.subr.mxu0 0.0
    %2971 = vmatpush2.msra.mxu0 0.0
    %2972 = vmatprep.subr.mxu0 0.0
    %2973 = vmatpush2.msra.mxu0 0.0
    %2974 = vmatprep.subr.mxu0 0.0
    %2975 = vmatpush2.msra.mxu0 0.0
    %2976 = vmatprep.subr.mxu0 0.0
    %2977 = vmatpush2.msra.mxu0 0.0
    %2978 = vmatprep.subr.mxu0 0.0
    %2979 = vmatpush2.msra.mxu0 0.0
    %2980 = vmatprep.subr.mxu0 0.0
    %2981 = vmatpush2.msra.mxu0 0.0
    %2982 = vmatprep.subr.mxu0 0.0
    %2983 = vmatpush2.msra.mxu0 0.0
    %2984 = vmatprep.subr.mxu0 0.0
    %2985 = vmatpush2.msra.mxu0 0.0
    %2986 = vmatprep.subr.mxu0 0.0
    %2987 = vmatpush2.msra.mxu0 0.0
    %2988 = vmatprep.subr.mxu0 0.0
    %2989 = vmatpush2.msra.mxu0 0.0
    %2990 = vmatprep.subr.mxu0 0.0
    %2991 = vmatpush2.msra.mxu0 0.0
    %2992 = vmatprep.subr.mxu0 0.0
    %2993 = vmatpush2.msra.mxu0 0.0
    %2994 = vmatprep.subr.mxu0 0.0
    %2995 = vmatpush2.msra.mxu0 0.0
    %2996 = vmatprep.mubr.f32.mxu0 0.0
    %2997 = vmatmul.mubr.f32.gmra.mxu0 %v2927
    %v2998 = vpop.f32.mrf.mxu0
    %v2999 = vadd.f32 0.0, %v2998
    %v3000 = vpop.f32.mrf.mxu0
    %3001 = vmatprep.mubr.f32.mxu0 0.0
    %3002 = vmatmul.mubr.f32.gmra.mxu0 %v2930
    %v3003 = vpop.f32.mrf.mxu0
    %v3004 = vadd.f32 0.0, %v3003
    %v3005 = vpop.f32.mrf.mxu0
    %3006 = vdwg.mxu0
    %v3008 = vsel %vm231, %v2517, 0
    %v3011 = vsel %vm231, %v2593, 0
    %3013 = vmatprep.subr.mxu0 0.0
    %3014 = vmatpush1.msra.mxu0 0.0
    %3015 = vmatprep.subr.mxu0 0.0
    %3016 = vmatpush1.msra.mxu0 0.0
    %3017 = vmatprep.subr.mxu0 0.0
    %3018 = vmatpush1.msra.mxu0 0.0
    %3019 = vmatprep.subr.mxu0 0.0
    %3020 = vmatpush1.msra.mxu0 0.0
    %3021 = vmatprep.subr.mxu0 0.0
    %3022 = vmatpush1.msra.mxu0 0.0
    %3023 = vmatprep.subr.mxu0 0.0
    %3024 = vmatpush1.msra.mxu0 0.0
    %3025 = vmatprep.subr.mxu0 0.0
    %3026 = vmatpush1.msra.mxu0 0.0
    %3027 = vmatprep.subr.mxu0 0.0
    %3028 = vmatpush1.msra.mxu0 0.0
    %3029 = vmatprep.subr.mxu0 0.0
    %3030 = vmatpush1.msra.mxu0 0.0
    %3031 = vmatprep.subr.mxu0 0.0
    %3032 = vmatpush1.msra.mxu0 0.0
    %3033 = vmatprep.subr.mxu0 0.0
    %3034 = vmatpush1.msra.mxu0 0.0
    %3035 = vmatprep.subr.mxu0 0.0
    %3036 = vmatpush1.msra.mxu0 0.0
    %3037 = vmatprep.subr.mxu0 0.0
    %3038 = vmatpush1.msra.mxu0 0.0
    %3039 = vmatprep.subr.mxu0 0.0
    %3040 = vmatpush1.msra.mxu0 0.0
    %3041 = vmatprep.subr.mxu0 0.0
    %3042 = vmatpush1.msra.mxu0 0.0
    %3043 = vmatprep.subr.mxu0 0.0
    %3044 = vmatpush1.msra.mxu0 %v2175
    %3045 = vmatprep.subr.mxu0 0.0
    %3046 = vmatpush2.msra.mxu0 0.0
    %3047 = vmatprep.subr.mxu0 0.0
    %3048 = vmatpush2.msra.mxu0 0.0
    %3049 = vmatprep.subr.mxu0 0.0
    %3050 = vmatpush2.msra.mxu0 0.0
    %3051 = vmatprep.subr.mxu0 0.0
    %3052 = vmatpush2.msra.mxu0 0.0
    %3053 = vmatprep.subr.mxu0 0.0
    %3054 = vmatpush2.msra.mxu0 0.0
    %3055 = vmatprep.subr.mxu0 0.0
    %3056 = vmatpush2.msra.mxu0 0.0
    %3057 = vmatprep.subr.mxu0 0.0
    %3058 = vmatpush2.msra.mxu0 0.0
    %3059 = vmatprep.subr.mxu0 0.0
    %3060 = vmatpush2.msra.mxu0 0.0
    %3061 = vmatprep.subr.mxu0 0.0
    %3062 = vmatpush2.msra.mxu0 0.0
    %3063 = vmatprep.subr.mxu0 0.0
    %3064 = vmatpush2.msra.mxu0 0.0
    %3065 = vmatprep.subr.mxu0 0.0
    %3066 = vmatpush2.msra.mxu0 0.0
    %3067 = vmatprep.subr.mxu0 0.0
    %3068 = vmatpush2.msra.mxu0 0.0
    %3069 = vmatprep.subr.mxu0 0.0
    %3070 = vmatpush2.msra.mxu0 0.0
    %3071 = vmatprep.subr.mxu0 0.0
    %3072 = vmatpush2.msra.mxu0 0.0
    %3073 = vmatprep.subr.mxu0 0.0
    %3074 = vmatpush2.msra.mxu0 0.0
    %3075 = vmatprep.subr.mxu0 0.0
    %3076 = vmatpush2.msra.mxu0 0.0
    %3077 = vmatprep.mubr.f32.mxu0 0.0
    %3078 = vmatmul.mubr.f32.gmra.mxu0 %v3008
    %v3079 = vpop.f32.mrf.mxu0
    %v3080 = vadd.f32 %v2999, %v3079
    %v3081 = vpop.f32.mrf.mxu0
    %3082 = vmatprep.mubr.f32.mxu0 0.0
    %3083 = vmatmul.mubr.f32.gmra.mxu0 %v3011
    %v3084 = vpop.f32.mrf.mxu0
    %v3085 = vadd.f32 %v3004, %v3084
    %v3086 = vpop.f32.mrf.mxu0
    %3087 = vdwg.mxu0
    %3088 = vrot.lane.b32.xlu0 %v2260, 112
    %v3089 = vpop.permute.xlu0 %3088
    %3090 = vrot.lane.b32.xlu0 %v2260, 80
    %v3091 = vpop.permute.xlu0 %3090
    %v3092 = vsel %vm231, %v3089, 0
    %v3094 = vsel %vm231, %v3091, 0
    %3096 = vmatprep.subr.mxu0 0.0
    %3097 = vmatpush1.xpose.msra.mxu0 0.0
    %3098 = vmatprep.subr.mxu0 0.0
    %3099 = vmatpush1.xpose.msra.mxu0 0.0
    %3100 = vmatprep.subr.mxu0 0.0
    %3101 = vmatpush1.xpose.msra.mxu0 0.0
    %3102 = vmatprep.subr.mxu0 0.0
    %3103 = vmatpush1.xpose.msra.mxu0 0.0
    %3104 = vmatprep.subr.mxu0 0.0
    %3105 = vmatpush1.xpose.msra.mxu0 0.0
    %3106 = vmatprep.subr.mxu0 0.0
    %3107 = vmatpush1.xpose.msra.mxu0 0.0
    %3108 = vmatprep.subr.mxu0 0.0
    %3109 = vmatpush1.xpose.msra.mxu0 0.0
    %3110 = vmatprep.subr.mxu0 0.0
    %3111 = vmatpush1.xpose.msra.mxu0 0.0
    %3112 = vmatprep.subr.mxu0 0.0
    %3113 = vmatpush1.xpose.msra.mxu0 0.0
    %3114 = vmatprep.subr.mxu0 0.0
    %3115 = vmatpush1.xpose.msra.mxu0 0.0
    %3116 = vmatprep.subr.mxu0 0.0
    %3117 = vmatpush1.xpose.msra.mxu0 0.0
    %3118 = vmatprep.subr.mxu0 0.0
    %3119 = vmatpush1.xpose.msra.mxu0 0.0
    %3120 = vmatprep.subr.mxu0 0.0
    %3121 = vmatpush1.xpose.msra.mxu0 0.0
    %3122 = vmatprep.subr.mxu0 0.0
    %3123 = vmatpush1.xpose.msra.mxu0 0.0
    %3124 = vmatprep.subr.mxu0 0.0
    %3125 = vmatpush1.xpose.msra.mxu0 0.0
    %3126 = vmatprep.subr.mxu0 0.0
    %3127 = vmatpush1.xpose.msra.mxu0 %v3094
    %3128 = vmatprep.subr.mxu0 0.0
    %3129 = vmatpush2.xpose.msra.mxu0 0.0
    %3130 = vmatprep.subr.mxu0 0.0
    %3131 = vmatpush2.xpose.msra.mxu0 0.0
    %3132 = vmatprep.subr.mxu0 0.0
    %3133 = vmatpush2.xpose.msra.mxu0 0.0
    %3134 = vmatprep.subr.mxu0 0.0
    %3135 = vmatpush2.xpose.msra.mxu0 0.0
    %3136 = vmatprep.subr.mxu0 0.0
    %3137 = vmatpush2.xpose.msra.mxu0 0.0
    %3138 = vmatprep.subr.mxu0 0.0
    %3139 = vmatpush2.xpose.msra.mxu0 0.0
    %3140 = vmatprep.subr.mxu0 0.0
    %3141 = vmatpush2.xpose.msra.mxu0 0.0
    %3142 = vmatprep.subr.mxu0 0.0
    %3143 = vmatpush2.xpose.msra.mxu0 0.0
    %3144 = vmatprep.subr.mxu0 0.0
    %3145 = vmatpush2.xpose.msra.mxu0 0.0
    %3146 = vmatprep.subr.mxu0 0.0
    %3147 = vmatpush2.xpose.msra.mxu0 0.0
    %3148 = vmatprep.subr.mxu0 0.0
    %3149 = vmatpush2.xpose.msra.mxu0 0.0
    %3150 = vmatprep.subr.mxu0 0.0
    %3151 = vmatpush2.xpose.msra.mxu0 0.0
    %3152 = vmatprep.subr.mxu0 0.0
    %3153 = vmatpush2.xpose.msra.mxu0 0.0
    %3154 = vmatprep.subr.mxu0 0.0
    %3155 = vmatpush2.xpose.msra.mxu0 0.0
    %3156 = vmatprep.subr.mxu0 0.0
    %3157 = vmatpush2.xpose.msra.mxu0 0.0
    %3158 = vmatprep.subr.mxu0 0.0
    %3159 = vmatpush2.xpose.msra.mxu0 0.0
    %3160 = vmatprep.mubr.f32.mxu0 0.0
    %3161 = vmatmul.mubr.f32.gmra.mxu0 %v3092
    %v3162 = vpop.f32.mrf.mxu0
    %v3163 = vadd.f32 %v128, %v3162
    %v3164 = vpop.f32.mrf.mxu0
    %3165 = vdwg.mxu0
    %3166 = vrot.lane.b32.xlu0 %v2265, 112
    %v3167 = vpop.permute.xlu0 %3166
    %3168 = vrot.lane.b32.xlu0 %v2265, 80
    %v3169 = vpop.permute.xlu0 %3168
    %v3170 = vsel %vm231, %v3167, 0
    %v3172 = vsel %vm231, %v3169, 0
    %3174 = vmatprep.subr.mxu0 0.0
    %3175 = vmatpush1.xpose.msra.mxu0 0.0
    %3176 = vmatprep.subr.mxu0 0.0
    %3177 = vmatpush1.xpose.msra.mxu0 0.0
    %3178 = vmatprep.subr.mxu0 0.0
    %3179 = vmatpush1.xpose.msra.mxu0 0.0
    %3180 = vmatprep.subr.mxu0 0.0
    %3181 = vmatpush1.xpose.msra.mxu0 0.0
    %3182 = vmatprep.subr.mxu0 0.0
    %3183 = vmatpush1.xpose.msra.mxu0 0.0
    %3184 = vmatprep.subr.mxu0 0.0
    %3185 = vmatpush1.xpose.msra.mxu0 0.0
    %3186 = vmatprep.subr.mxu0 0.0
    %3187 = vmatpush1.xpose.msra.mxu0 0.0
    %3188 = vmatprep.subr.mxu0 0.0
    %3189 = vmatpush1.xpose.msra.mxu0 0.0
    %3190 = vmatprep.subr.mxu0 0.0
    %3191 = vmatpush1.xpose.msra.mxu0 0.0
    %3192 = vmatprep.subr.mxu0 0.0
    %3193 = vmatpush1.xpose.msra.mxu0 0.0
    %3194 = vmatprep.subr.mxu0 0.0
    %3195 = vmatpush1.xpose.msra.mxu0 0.0
    %3196 = vmatprep.subr.mxu0 0.0
    %3197 = vmatpush1.xpose.msra.mxu0 0.0
    %3198 = vmatprep.subr.mxu0 0.0
    %3199 = vmatpush1.xpose.msra.mxu0 0.0
    %3200 = vmatprep.subr.mxu0 0.0
    %3201 = vmatpush1.xpose.msra.mxu0 0.0
    %3202 = vmatprep.subr.mxu0 0.0
    %3203 = vmatpush1.xpose.msra.mxu0 0.0
    %3204 = vmatprep.subr.mxu0 0.0
    %3205 = vmatpush1.xpose.msra.mxu0 %v3172
    %3206 = vmatprep.subr.mxu0 0.0
    %3207 = vmatpush2.xpose.msra.mxu0 0.0
    %3208 = vmatprep.subr.mxu0 0.0
    %3209 = vmatpush2.xpose.msra.mxu0 0.0
    %3210 = vmatprep.subr.mxu0 0.0
    %3211 = vmatpush2.xpose.msra.mxu0 0.0
    %3212 = vmatprep.subr.mxu0 0.0
    %3213 = vmatpush2.xpose.msra.mxu0 0.0
    %3214 = vmatprep.subr.mxu0 0.0
    %3215 = vmatpush2.xpose.msra.mxu0 0.0
    %3216 = vmatprep.subr.mxu0 0.0
    %3217 = vmatpush2.xpose.msra.mxu0 0.0
    %3218 = vmatprep.subr.mxu0 0.0
    %3219 = vmatpush2.xpose.msra.mxu0 0.0
    %3220 = vmatprep.subr.mxu0 0.0
    %3221 = vmatpush2.xpose.msra.mxu0 0.0
    %3222 = vmatprep.subr.mxu0 0.0
    %3223 = vmatpush2.xpose.msra.mxu0 0.0
    %3224 = vmatprep.subr.mxu0 0.0
    %3225 = vmatpush2.xpose.msra.mxu0 0.0
    %3226 = vmatprep.subr.mxu0 0.0
    %3227 = vmatpush2.xpose.msra.mxu0 0.0
    %3228 = vmatprep.subr.mxu0 0.0
    %3229 = vmatpush2.xpose.msra.mxu0 0.0
    %3230 = vmatprep.subr.mxu0 0.0
    %3231 = vmatpush2.xpose.msra.mxu0 0.0
    %3232 = vmatprep.subr.mxu0 0.0
    %3233 = vmatpush2.xpose.msra.mxu0 0.0
    %3234 = vmatprep.subr.mxu0 0.0
    %3235 = vmatpush2.xpose.msra.mxu0 0.0
    %3236 = vmatprep.subr.mxu0 0.0
    %3237 = vmatpush2.xpose.msra.mxu0 0.0
    %3238 = vmatprep.mubr.f32.mxu0 0.0
    %3239 = vmatmul.mubr.f32.gmra.mxu0 %v3170
    %v3240 = vpop.f32.mrf.mxu0
    %v3241 = vadd.f32 %v129, %v3240
    %v3242 = vpop.f32.mrf.mxu0
    %3243 = vdwg.mxu0
    %v3244 = vsel %vm231, %v3163, -inf
    %3245 = vmax.xlane.f32.xlu0 %v3244
    %v3246 = vpop.xlane.xlu0 %3245
    %v3247 = vsel %vm231, %v3241, -inf
    %3248 = vmax.xlane.f32.xlu0 %v3247
    %v3249 = vpop.xlane.xlu0 %3248
    %v3250 = vsub.f32 %v3163, %v3246
    %v3251 = vsub.f32 %v3241, %v3249
    %v3252 = vmul.f32 %v3250, 1.442695
    %v3253 = vpow.pop %v3252
    %v3254 = vmul.f32 %v3251, 1.442695
    %v3255 = vpow.pop %v3254
    %v3256 = vsel %vm231, %v3253, 0.0
    %3257 = vadd.xlane.f32.xlu0 %v3256
    %v3258 = vpop.xlane.xlu0 %3257
    %v3259 = vsel %vm231, %v3255, 0.0
    %3260 = vadd.xlane.f32.xlu0 %v3259
    %v3261 = vpop.xlane.xlu0 %3260
    %v3262 = vrcp.pop %v3258
    %v3263 = vrcp.pop %v3261
    %v3264 = vmul.f32 %v3253, %v3262
    %v3265 = vmul.f32 %v3255, %v3263
    %3266 = vrot.lane.b32.xlu0 %v2260, 48
    %v3267 = vpop.permute.xlu0 %3266
    %v3270 = vsel %vm231, %v3264, 0
    %3272 = vmatprep.subr.mxu0 0.0
    %3273 = vmatpush1.msra.mxu0 0.0
    %3274 = vmatprep.subr.mxu0 0.0
    %3275 = vmatpush1.msra.mxu0 0.0
    %3276 = vmatprep.subr.mxu0 0.0
    %3277 = vmatpush1.msra.mxu0 0.0
    %3278 = vmatprep.subr.mxu0 0.0
    %3279 = vmatpush1.msra.mxu0 0.0
    %3280 = vmatprep.subr.mxu0 0.0
    %3281 = vmatpush1.msra.mxu0 0.0
    %3282 = vmatprep.subr.mxu0 0.0
    %3283 = vmatpush1.msra.mxu0 0.0
    %3284 = vmatprep.subr.mxu0 0.0
    %3285 = vmatpush1.msra.mxu0 0.0
    %3286 = vmatprep.subr.mxu0 0.0
    %3287 = vmatpush1.msra.mxu0 0.0
    %3288 = vmatprep.subr.mxu0 0.0
    %3289 = vmatpush1.msra.mxu0 0.0
    %3290 = vmatprep.subr.mxu0 0.0
    %3291 = vmatpush1.msra.mxu0 0.0
    %3292 = vmatprep.subr.mxu0 0.0
    %3293 = vmatpush1.msra.mxu0 0.0
    %3294 = vmatprep.subr.mxu0 0.0
    %3295 = vmatpush1.msra.mxu0 0.0
    %3296 = vmatprep.subr.mxu0 0.0
    %3297 = vmatpush1.msra.mxu0 0.0
    %3298 = vmatprep.subr.mxu0 0.0
    %3299 = vmatpush1.msra.mxu0 0.0
    %3300 = vmatprep.subr.mxu0 0.0
    %3301 = vmatpush1.msra.mxu0 0.0
    %3302 = vmatprep.subr.mxu0 0.0
    %3303 = vmatpush1.msra.mxu0 %v3267
    %3304 = vmatprep.subr.mxu0 0.0
    %3305 = vmatpush2.msra.mxu0 0.0
    %3306 = vmatprep.subr.mxu0 0.0
    %3307 = vmatpush2.msra.mxu0 0.0
    %3308 = vmatprep.subr.mxu0 0.0
    %3309 = vmatpush2.msra.mxu0 0.0
    %3310 = vmatprep.subr.mxu0 0.0
    %3311 = vmatpush2.msra.mxu0 0.0
    %3312 = vmatprep.subr.mxu0 0.0
    %3313 = vmatpush2.msra.mxu0 0.0
    %3314 = vmatprep.subr.mxu0 0.0
    %3315 = vmatpush2.msra.mxu0 0.0
    %3316 = vmatprep.subr.mxu0 0.0
    %3317 = vmatpush2.msra.mxu0 0.0
    %3318 = vmatprep.subr.mxu0 0.0
    %3319 = vmatpush2.msra.mxu0 0.0
    %3320 = vmatprep.subr.mxu0 0.0
    %3321 = vmatpush2.msra.mxu0 0.0
    %3322 = vmatprep.subr.mxu0 0.0
    %3323 = vmatpush2.msra.mxu0 0.0
    %3324 = vmatprep.subr.mxu0 0.0
    %3325 = vmatpush2.msra.mxu0 0.0
    %3326 = vmatprep.subr.mxu0 0.0
    %3327 = vmatpush2.msra.mxu0 0.0
    %3328 = vmatprep.subr.mxu0 0.0
    %3329 = vmatpush2.msra.mxu0 0.0
    %3330 = vmatprep.subr.mxu0 0.0
    %3331 = vmatpush2.msra.mxu0 0.0
    %3332 = vmatprep.subr.mxu0 0.0
    %3333 = vmatpush2.msra.mxu0 0.0
    %3334 = vmatprep.subr.mxu0 0.0
    %3335 = vmatpush2.msra.mxu0 0.0
    %3336 = vmatprep.mubr.f32.mxu0 0.0
    %3337 = vmatmul.mubr.f32.gmra.mxu0 %v3270
    %v3338 = vpop.f32.mrf.mxu0
    %v3339 = vadd.f32 0.0, %v3338
    %v3340 = vpop.f32.mrf.mxu0
    %3341 = vdwg.mxu0
    %3342 = vrot.lane.b32.xlu0 %v2265, 48
    %v3343 = vpop.permute.xlu0 %3342
    %v3346 = vsel %vm231, %v3265, 0
    %3348 = vmatprep.subr.mxu0 0.0
    %3349 = vmatpush1.msra.mxu0 0.0
    %3350 = vmatprep.subr.mxu0 0.0
    %3351 = vmatpush1.msra.mxu0 0.0
    %3352 = vmatprep.subr.mxu0 0.0
    %3353 = vmatpush1.msra.mxu0 0.0
    %3354 = vmatprep.subr.mxu0 0.0
    %3355 = vmatpush1.msra.mxu0 0.0
    %3356 = vmatprep.subr.mxu0 0.0
    %3357 = vmatpush1.msra.mxu0 0.0
    %3358 = vmatprep.subr.mxu0 0.0
    %3359 = vmatpush1.msra.mxu0 0.0
    %3360 = vmatprep.subr.mxu0 0.0
    %3361 = vmatpush1.msra.mxu0 0.0
    %3362 = vmatprep.subr.mxu0 0.0
    %3363 = vmatpush1.msra.mxu0 0.0
    %3364 = vmatprep.subr.mxu0 0.0
    %3365 = vmatpush1.msra.mxu0 0.0
    %3366 = vmatprep.subr.mxu0 0.0
    %3367 = vmatpush1.msra.mxu0 0.0
    %3368 = vmatprep.subr.mxu0 0.0
    %3369 = vmatpush1.msra.mxu0 0.0
    %3370 = vmatprep.subr.mxu0 0.0
    %3371 = vmatpush1.msra.mxu0 0.0
    %3372 = vmatprep.subr.mxu0 0.0
    %3373 = vmatpush1.msra.mxu0 0.0
    %3374 = vmatprep.subr.mxu0 0.0
    %3375 = vmatpush1.msra.mxu0 0.0
    %3376 = vmatprep.subr.mxu0 0.0
    %3377 = vmatpush1.msra.mxu0 0.0
    %3378 = vmatprep.subr.mxu0 0.0
    %3379 = vmatpush1.msra.mxu0 %v3343
    %3380 = vmatprep.subr.mxu0 0.0
    %3381 = vmatpush2.msra.mxu0 0.0
    %3382 = vmatprep.subr.mxu0 0.0
    %3383 = vmatpush2.msra.mxu0 0.0
    %3384 = vmatprep.subr.mxu0 0.0
    %3385 = vmatpush2.msra.mxu0 0.0
    %3386 = vmatprep.subr.mxu0 0.0
    %3387 = vmatpush2.msra.mxu0 0.0
    %3388 = vmatprep.subr.mxu0 0.0
    %3389 = vmatpush2.msra.mxu0 0.0
    %3390 = vmatprep.subr.mxu0 0.0
    %3391 = vmatpush2.msra.mxu0 0.0
    %3392 = vmatprep.subr.mxu0 0.0
    %3393 = vmatpush2.msra.mxu0 0.0
    %3394 = vmatprep.subr.mxu0 0.0
    %3395 = vmatpush2.msra.mxu0 0.0
    %3396 = vmatprep.subr.mxu0 0.0
    %3397 = vmatpush2.msra.mxu0 0.0
    %3398 = vmatprep.subr.mxu0 0.0
    %3399 = vmatpush2.msra.mxu0 0.0
    %3400 = vmatprep.subr.mxu0 0.0
    %3401 = vmatpush2.msra.mxu0 0.0
    %3402 = vmatprep.subr.mxu0 0.0
    %3403 = vmatpush2.msra.mxu0 0.0
    %3404 = vmatprep.subr.mxu0 0.0
    %3405 = vmatpush2.msra.mxu0 0.0
    %3406 = vmatprep.subr.mxu0 0.0
    %3407 = vmatpush2.msra.mxu0 0.0
    %3408 = vmatprep.subr.mxu0 0.0
    %3409 = vmatpush2.msra.mxu0 0.0
    %3410 = vmatprep.subr.mxu0 0.0
    %3411 = vmatpush2.msra.mxu0 0.0
    %3412 = vmatprep.mubr.f32.mxu0 0.0
    %3413 = vmatmul.mubr.f32.gmra.mxu0 %v3346
    %v3414 = vpop.f32.mrf.mxu0
    %v3415 = vadd.f32 0.0, %v3414
    %v3416 = vpop.f32.mrf.mxu0
    %3417 = vdwg.mxu0
    %v3419 = vsel %vm231, %v3339, 0
    %v3422 = vsel %vm231, %v3415, 0
    %3424 = vmatprep.subr.mxu0 0.0
    %3425 = vmatpush1.msra.mxu0 0.0
    %3426 = vmatprep.subr.mxu0 0.0
    %3427 = vmatpush1.msra.mxu0 0.0
    %3428 = vmatprep.subr.mxu0 0.0
    %3429 = vmatpush1.msra.mxu0 0.0
    %3430 = vmatprep.subr.mxu0 0.0
    %3431 = vmatpush1.msra.mxu0 0.0
    %3432 = vmatprep.subr.mxu0 0.0
    %3433 = vmatpush1.msra.mxu0 0.0
    %3434 = vmatprep.subr.mxu0 0.0
    %3435 = vmatpush1.msra.mxu0 0.0
    %3436 = vmatprep.subr.mxu0 0.0
    %3437 = vmatpush1.msra.mxu0 0.0
    %3438 = vmatprep.subr.mxu0 0.0
    %3439 = vmatpush1.msra.mxu0 0.0
    %3440 = vmatprep.subr.mxu0 0.0
    %3441 = vmatpush1.msra.mxu0 0.0
    %3442 = vmatprep.subr.mxu0 0.0
    %3443 = vmatpush1.msra.mxu0 0.0
    %3444 = vmatprep.subr.mxu0 0.0
    %3445 = vmatpush1.msra.mxu0 0.0
    %3446 = vmatprep.subr.mxu0 0.0
    %3447 = vmatpush1.msra.mxu0 0.0
    %3448 = vmatprep.subr.mxu0 0.0
    %3449 = vmatpush1.msra.mxu0 0.0
    %3450 = vmatprep.subr.mxu0 0.0
    %3451 = vmatpush1.msra.mxu0 0.0
    %3452 = vmatprep.subr.mxu0 0.0
    %3453 = vmatpush1.msra.mxu0 0.0
    %3454 = vmatprep.subr.mxu0 0.0
    %3455 = vmatpush1.msra.mxu0 %v2177
    %3456 = vmatprep.subr.mxu0 0.0
    %3457 = vmatpush2.msra.mxu0 0.0
    %3458 = vmatprep.subr.mxu0 0.0
    %3459 = vmatpush2.msra.mxu0 0.0
    %3460 = vmatprep.subr.mxu0 0.0
    %3461 = vmatpush2.msra.mxu0 0.0
    %3462 = vmatprep.subr.mxu0 0.0
    %3463 = vmatpush2.msra.mxu0 0.0
    %3464 = vmatprep.subr.mxu0 0.0
    %3465 = vmatpush2.msra.mxu0 0.0
    %3466 = vmatprep.subr.mxu0 0.0
    %3467 = vmatpush2.msra.mxu0 0.0
    %3468 = vmatprep.subr.mxu0 0.0
    %3469 = vmatpush2.msra.mxu0 0.0
    %3470 = vmatprep.subr.mxu0 0.0
    %3471 = vmatpush2.msra.mxu0 0.0
    %3472 = vmatprep.subr.mxu0 0.0
    %3473 = vmatpush2.msra.mxu0 0.0
    %3474 = vmatprep.subr.mxu0 0.0
    %3475 = vmatpush2.msra.mxu0 0.0
    %3476 = vmatprep.subr.mxu0 0.0
    %3477 = vmatpush2.msra.mxu0 0.0
    %3478 = vmatprep.subr.mxu0 0.0
    %3479 = vmatpush2.msra.mxu0 0.0
    %3480 = vmatprep.subr.mxu0 0.0
    %3481 = vmatpush2.msra.mxu0 0.0
    %3482 = vmatprep.subr.mxu0 0.0
    %3483 = vmatpush2.msra.mxu0 0.0
    %3484 = vmatprep.subr.mxu0 0.0
    %3485 = vmatpush2.msra.mxu0 0.0
    %3486 = vmatprep.subr.mxu0 0.0
    %3487 = vmatpush2.msra.mxu0 0.0
    %3488 = vmatprep.mubr.f32.mxu0 0.0
    %3489 = vmatmul.mubr.f32.gmra.mxu0 %v3419
    %v3490 = vpop.f32.mrf.mxu0
    %v3491 = vadd.f32 0.0, %v3490
    %v3492 = vpop.f32.mrf.mxu0
    %3493 = vmatprep.mubr.f32.mxu0 0.0
    %3494 = vmatmul.mubr.f32.gmra.mxu0 %v3422
    %v3495 = vpop.f32.mrf.mxu0
    %v3496 = vadd.f32 0.0, %v3495
    %v3497 = vpop.f32.mrf.mxu0
    %3498 = vdwg.mxu0
    %v3499 = vadd.f32 %v3080, %v3491
    %v3500 = vadd.f32 %v3085, %v3496
    %3501 = vrot.lane.b32.xlu0 %v2260, 104
    %v3502 = vpop.permute.xlu0 %3501
    %3503 = vrot.lane.b32.xlu0 %v2260, 72
    %v3504 = vpop.permute.xlu0 %3503
    %v3505 = vsel %vm231, %v3502, 0
    %v3507 = vsel %vm231, %v3504, 0
    %3509 = vmatprep.subr.mxu0 0.0
    %3510 = vmatpush1.xpose.msra.mxu0 0.0
    %3511 = vmatprep.subr.mxu0 0.0
    %3512 = vmatpush1.xpose.msra.mxu0 0.0
    %3513 = vmatprep.subr.mxu0 0.0
    %3514 = vmatpush1.xpose.msra.mxu0 0.0
    %3515 = vmatprep.subr.mxu0 0.0
    %3516 = vmatpush1.xpose.msra.mxu0 0.0
    %3517 = vmatprep.subr.mxu0 0.0
    %3518 = vmatpush1.xpose.msra.mxu0 0.0
    %3519 = vmatprep.subr.mxu0 0.0
    %3520 = vmatpush1.xpose.msra.mxu0 0.0
    %3521 = vmatprep.subr.mxu0 0.0
    %3522 = vmatpush1.xpose.msra.mxu0 0.0
    %3523 = vmatprep.subr.mxu0 0.0
    %3524 = vmatpush1.xpose.msra.mxu0 0.0
    %3525 = vmatprep.subr.mxu0 0.0
    %3526 = vmatpush1.xpose.msra.mxu0 0.0
    %3527 = vmatprep.subr.mxu0 0.0
    %3528 = vmatpush1.xpose.msra.mxu0 0.0
    %3529 = vmatprep.subr.mxu0 0.0
    %3530 = vmatpush1.xpose.msra.mxu0 0.0
    %3531 = vmatprep.subr.mxu0 0.0
    %3532 = vmatpush1.xpose.msra.mxu0 0.0
    %3533 = vmatprep.subr.mxu0 0.0
    %3534 = vmatpush1.xpose.msra.mxu0 0.0
    %3535 = vmatprep.subr.mxu0 0.0
    %3536 = vmatpush1.xpose.msra.mxu0 0.0
    %3537 = vmatprep.subr.mxu0 0.0
    %3538 = vmatpush1.xpose.msra.mxu0 0.0
    %3539 = vmatprep.subr.mxu0 0.0
    %3540 = vmatpush1.xpose.msra.mxu0 %v3507
    %3541 = vmatprep.subr.mxu0 0.0
    %3542 = vmatpush2.xpose.msra.mxu0 0.0
    %3543 = vmatprep.subr.mxu0 0.0
    %3544 = vmatpush2.xpose.msra.mxu0 0.0
    %3545 = vmatprep.subr.mxu0 0.0
    %3546 = vmatpush2.xpose.msra.mxu0 0.0
    %3547 = vmatprep.subr.mxu0 0.0
    %3548 = vmatpush2.xpose.msra.mxu0 0.0
    %3549 = vmatprep.subr.mxu0 0.0
    %3550 = vmatpush2.xpose.msra.mxu0 0.0
    %3551 = vmatprep.subr.mxu0 0.0
    %3552 = vmatpush2.xpose.msra.mxu0 0.0
    %3553 = vmatprep.subr.mxu0 0.0
    %3554 = vmatpush2.xpose.msra.mxu0 0.0
    %3555 = vmatprep.subr.mxu0 0.0
    %3556 = vmatpush2.xpose.msra.mxu0 0.0
    %3557 = vmatprep.subr.mxu0 0.0
    %3558 = vmatpush2.xpose.msra.mxu0 0.0
    %3559 = vmatprep.subr.mxu0 0.0
    %3560 = vmatpush2.xpose.msra.mxu0 0.0
    %3561 = vmatprep.subr.mxu0 0.0
    %3562 = vmatpush2.xpose.msra.mxu0 0.0
    %3563 = vmatprep.subr.mxu0 0.0
    %3564 = vmatpush2.xpose.msra.mxu0 0.0
    %3565 = vmatprep.subr.mxu0 0.0
    %3566 = vmatpush2.xpose.msra.mxu0 0.0
    %3567 = vmatprep.subr.mxu0 0.0
    %3568 = vmatpush2.xpose.msra.mxu0 0.0
    %3569 = vmatprep.subr.mxu0 0.0
    %3570 = vmatpush2.xpose.msra.mxu0 0.0
    %3571 = vmatprep.subr.mxu0 0.0
    %3572 = vmatpush2.xpose.msra.mxu0 0.0
    %3573 = vmatprep.mubr.f32.mxu0 0.0
    %3574 = vmatmul.mubr.f32.gmra.mxu0 %v3505
    %v3575 = vpop.f32.mrf.mxu0
    %v3576 = vadd.f32 %v128, %v3575
    %v3577 = vpop.f32.mrf.mxu0
    %3578 = vdwg.mxu0
    %3579 = vrot.lane.b32.xlu0 %v2265, 104
    %v3580 = vpop.permute.xlu0 %3579
    %3581 = vrot.lane.b32.xlu0 %v2265, 72
    %v3582 = vpop.permute.xlu0 %3581
    %v3583 = vsel %vm231, %v3580, 0
    %v3585 = vsel %vm231, %v3582, 0
    %3587 = vmatprep.subr.mxu0 0.0
    %3588 = vmatpush1.xpose.msra.mxu0 0.0
    %3589 = vmatprep.subr.mxu0 0.0
    %3590 = vmatpush1.xpose.msra.mxu0 0.0
    %3591 = vmatprep.subr.mxu0 0.0
    %3592 = vmatpush1.xpose.msra.mxu0 0.0
    %3593 = vmatprep.subr.mxu0 0.0
    %3594 = vmatpush1.xpose.msra.mxu0 0.0
    %3595 = vmatprep.subr.mxu0 0.0
    %3596 = vmatpush1.xpose.msra.mxu0 0.0
    %3597 = vmatprep.subr.mxu0 0.0
    %3598 = vmatpush1.xpose.msra.mxu0 0.0
    %3599 = vmatprep.subr.mxu0 0.0
    %3600 = vmatpush1.xpose.msra.mxu0 0.0
    %3601 = vmatprep.subr.mxu0 0.0
    %3602 = vmatpush1.xpose.msra.mxu0 0.0
    %3603 = vmatprep.subr.mxu0 0.0
    %3604 = vmatpush1.xpose.msra.mxu0 0.0
    %3605 = vmatprep.subr.mxu0 0.0
    %3606 = vmatpush1.xpose.msra.mxu0 0.0
    %3607 = vmatprep.subr.mxu0 0.0
    %3608 = vmatpush1.xpose.msra.mxu0 0.0
    %3609 = vmatprep.subr.mxu0 0.0
    %3610 = vmatpush1.xpose.msra.mxu0 0.0
    %3611 = vmatprep.subr.mxu0 0.0
    %3612 = vmatpush1.xpose.msra.mxu0 0.0
    %3613 = vmatprep.subr.mxu0 0.0
    %3614 = vmatpush1.xpose.msra.mxu0 0.0
    %3615 = vmatprep.subr.mxu0 0.0
    %3616 = vmatpush1.xpose.msra.mxu0 0.0
    %3617 = vmatprep.subr.mxu0 0.0
    %3618 = vmatpush1.xpose.msra.mxu0 %v3585
    %3619 = vmatprep.subr.mxu0 0.0
    %3620 = vmatpush2.xpose.msra.mxu0 0.0
    %3621 = vmatprep.subr.mxu0 0.0
    %3622 = vmatpush2.xpose.msra.mxu0 0.0
    %3623 = vmatprep.subr.mxu0 0.0
    %3624 = vmatpush2.xpose.msra.mxu0 0.0
    %3625 = vmatprep.subr.mxu0 0.0
    %3626 = vmatpush2.xpose.msra.mxu0 0.0
    %3627 = vmatprep.subr.mxu0 0.0
    %3628 = vmatpush2.xpose.msra.mxu0 0.0
    %3629 = vmatprep.subr.mxu0 0.0
    %3630 = vmatpush2.xpose.msra.mxu0 0.0
    %3631 = vmatprep.subr.mxu0 0.0
    %3632 = vmatpush2.xpose.msra.mxu0 0.0
    %3633 = vmatprep.subr.mxu0 0.0
    %3634 = vmatpush2.xpose.msra.mxu0 0.0
    %3635 = vmatprep.subr.mxu0 0.0
    %3636 = vmatpush2.xpose.msra.mxu0 0.0
    %3637 = vmatprep.subr.mxu0 0.0
    %3638 = vmatpush2.xpose.msra.mxu0 0.0
    %3639 = vmatprep.subr.mxu0 0.0
    %3640 = vmatpush2.xpose.msra.mxu0 0.0
    %3641 = vmatprep.subr.mxu0 0.0
    %3642 = vmatpush2.xpose.msra.mxu0 0.0
    %3643 = vmatprep.subr.mxu0 0.0
    %3644 = vmatpush2.xpose.msra.mxu0 0.0
    %3645 = vmatprep.subr.mxu0 0.0
    %3646 = vmatpush2.xpose.msra.mxu0 0.0
    %3647 = vmatprep.subr.mxu0 0.0
    %3648 = vmatpush2.xpose.msra.mxu0 0.0
    %3649 = vmatprep.subr.mxu0 0.0
    %3650 = vmatpush2.xpose.msra.mxu0 0.0
    %3651 = vmatprep.mubr.f32.mxu0 0.0
    %3652 = vmatmul.mubr.f32.gmra.mxu0 %v3583
    %v3653 = vpop.f32.mrf.mxu0
    %v3654 = vadd.f32 %v129, %v3653
    %v3655 = vpop.f32.mrf.mxu0
    %3656 = vdwg.mxu0
    %v3657 = vsel %vm231, %v3576, -inf
    %3658 = vmax.xlane.f32.xlu0 %v3657
    %v3659 = vpop.xlane.xlu0 %3658
    %v3660 = vsel %vm231, %v3654, -inf
    %3661 = vmax.xlane.f32.xlu0 %v3660
    %v3662 = vpop.xlane.xlu0 %3661
    %v3663 = vsub.f32 %v3576, %v3659
    %v3664 = vsub.f32 %v3654, %v3662
    %v3665 = vmul.f32 %v3663, 1.442695
    %v3666 = vpow.pop %v3665
    %v3667 = vmul.f32 %v3664, 1.442695
    %v3668 = vpow.pop %v3667
    %v3669 = vsel %vm231, %v3666, 0.0
    %3670 = vadd.xlane.f32.xlu0 %v3669
    %v3671 = vpop.xlane.xlu0 %3670
    %v3672 = vsel %vm231, %v3668, 0.0
    %3673 = vadd.xlane.f32.xlu0 %v3672
    %v3674 = vpop.xlane.xlu0 %3673
    %v3675 = vrcp.pop %v3671
    %v3676 = vrcp.pop %v3674
    %v3677 = vmul.f32 %v3666, %v3675
    %v3678 = vmul.f32 %v3668, %v3676
    %3679 = vrot.lane.b32.xlu0 %v2260, 40
    %v3680 = vpop.permute.xlu0 %3679
    %v3683 = vsel %vm231, %v3677, 0
    %3685 = vmatprep.subr.mxu0 0.0
    %3686 = vmatpush1.msra.mxu0 0.0
    %3687 = vmatprep.subr.mxu0 0.0
    %3688 = vmatpush1.msra.mxu0 0.0
    %3689 = vmatprep.subr.mxu0 0.0
    %3690 = vmatpush1.msra.mxu0 0.0
    %3691 = vmatprep.subr.mxu0 0.0
    %3692 = vmatpush1.msra.mxu0 0.0
    %3693 = vmatprep.subr.mxu0 0.0
    %3694 = vmatpush1.msra.mxu0 0.0
    %3695 = vmatprep.subr.mxu0 0.0
    %3696 = vmatpush1.msra.mxu0 0.0
    %3697 = vmatprep.subr.mxu0 0.0
    %3698 = vmatpush1.msra.mxu0 0.0
    %3699 = vmatprep.subr.mxu0 0.0
    %3700 = vmatpush1.msra.mxu0 0.0
    %3701 = vmatprep.subr.mxu0 0.0
    %3702 = vmatpush1.msra.mxu0 0.0
    %3703 = vmatprep.subr.mxu0 0.0
    %3704 = vmatpush1.msra.mxu0 0.0
    %3705 = vmatprep.subr.mxu0 0.0
    %3706 = vmatpush1.msra.mxu0 0.0
    %3707 = vmatprep.subr.mxu0 0.0
    %3708 = vmatpush1.msra.mxu0 0.0
    %3709 = vmatprep.subr.mxu0 0.0
    %3710 = vmatpush1.msra.mxu0 0.0
    %3711 = vmatprep.subr.mxu0 0.0
    %3712 = vmatpush1.msra.mxu0 0.0
    %3713 = vmatprep.subr.mxu0 0.0
    %3714 = vmatpush1.msra.mxu0 0.0
    %3715 = vmatprep.subr.mxu0 0.0
    %3716 = vmatpush1.msra.mxu0 %v3680
    %3717 = vmatprep.subr.mxu0 0.0
    %3718 = vmatpush2.msra.mxu0 0.0
    %3719 = vmatprep.subr.mxu0 0.0
    %3720 = vmatpush2.msra.mxu0 0.0
    %3721 = vmatprep.subr.mxu0 0.0
    %3722 = vmatpush2.msra.mxu0 0.0
    %3723 = vmatprep.subr.mxu0 0.0
    %3724 = vmatpush2.msra.mxu0 0.0
    %3725 = vmatprep.subr.mxu0 0.0
    %3726 = vmatpush2.msra.mxu0 0.0
    %3727 = vmatprep.subr.mxu0 0.0
    %3728 = vmatpush2.msra.mxu0 0.0
    %3729 = vmatprep.subr.mxu0 0.0
    %3730 = vmatpush2.msra.mxu0 0.0
    %3731 = vmatprep.subr.mxu0 0.0
    %3732 = vmatpush2.msra.mxu0 0.0
    %3733 = vmatprep.subr.mxu0 0.0
    %3734 = vmatpush2.msra.mxu0 0.0
    %3735 = vmatprep.subr.mxu0 0.0
    %3736 = vmatpush2.msra.mxu0 0.0
    %3737 = vmatprep.subr.mxu0 0.0
    %3738 = vmatpush2.msra.mxu0 0.0
    %3739 = vmatprep.subr.mxu0 0.0
    %3740 = vmatpush2.msra.mxu0 0.0
    %3741 = vmatprep.subr.mxu0 0.0
    %3742 = vmatpush2.msra.mxu0 0.0
    %3743 = vmatprep.subr.mxu0 0.0
    %3744 = vmatpush2.msra.mxu0 0.0
    %3745 = vmatprep.subr.mxu0 0.0
    %3746 = vmatpush2.msra.mxu0 0.0
    %3747 = vmatprep.subr.mxu0 0.0
    %3748 = vmatpush2.msra.mxu0 0.0
    %3749 = vmatprep.mubr.f32.mxu0 0.0
    %3750 = vmatmul.mubr.f32.gmra.mxu0 %v3683
    %v3751 = vpop.f32.mrf.mxu0
    %v3752 = vadd.f32 0.0, %v3751
    %v3753 = vpop.f32.mrf.mxu0
    %3754 = vdwg.mxu0
    %3755 = vrot.lane.b32.xlu0 %v2265, 40
    %v3756 = vpop.permute.xlu0 %3755
    %v3759 = vsel %vm231, %v3678, 0
    %3761 = vmatprep.subr.mxu0 0.0
    %3762 = vmatpush1.msra.mxu0 0.0
    %3763 = vmatprep.subr.mxu0 0.0
    %3764 = vmatpush1.msra.mxu0 0.0
    %3765 = vmatprep.subr.mxu0 0.0
    %3766 = vmatpush1.msra.mxu0 0.0
    %3767 = vmatprep.subr.mxu0 0.0
    %3768 = vmatpush1.msra.mxu0 0.0
    %3769 = vmatprep.subr.mxu0 0.0
    %3770 = vmatpush1.msra.mxu0 0.0
    %3771 = vmatprep.subr.mxu0 0.0
    %3772 = vmatpush1.msra.mxu0 0.0
    %3773 = vmatprep.subr.mxu0 0.0
    %3774 = vmatpush1.msra.mxu0 0.0
    %3775 = vmatprep.subr.mxu0 0.0
    %3776 = vmatpush1.msra.mxu0 0.0
    %3777 = vmatprep.subr.mxu0 0.0
    %3778 = vmatpush1.msra.mxu0 0.0
    %3779 = vmatprep.subr.mxu0 0.0
    %3780 = vmatpush1.msra.mxu0 0.0
    %3781 = vmatprep.subr.mxu0 0.0
    %3782 = vmatpush1.msra.mxu0 0.0
    %3783 = vmatprep.subr.mxu0 0.0
    %3784 = vmatpush1.msra.mxu0 0.0
    %3785 = vmatprep.subr.mxu0 0.0
    %3786 = vmatpush1.msra.mxu0 0.0
    %3787 = vmatprep.subr.mxu0 0.0
    %3788 = vmatpush1.msra.mxu0 0.0
    %3789 = vmatprep.subr.mxu0 0.0
    %3790 = vmatpush1.msra.mxu0 0.0
    %3791 = vmatprep.subr.mxu0 0.0
    %3792 = vmatpush1.msra.mxu0 %v3756
    %3793 = vmatprep.subr.mxu0 0.0
    %3794 = vmatpush2.msra.mxu0 0.0
    %3795 = vmatprep.subr.mxu0 0.0
    %3796 = vmatpush2.msra.mxu0 0.0
    %3797 = vmatprep.subr.mxu0 0.0
    %3798 = vmatpush2.msra.mxu0 0.0
    %3799 = vmatprep.subr.mxu0 0.0
    %3800 = vmatpush2.msra.mxu0 0.0
    %3801 = vmatprep.subr.mxu0 0.0
    %3802 = vmatpush2.msra.mxu0 0.0
    %3803 = vmatprep.subr.mxu0 0.0
    %3804 = vmatpush2.msra.mxu0 0.0
    %3805 = vmatprep.subr.mxu0 0.0
    %3806 = vmatpush2.msra.mxu0 0.0
    %3807 = vmatprep.subr.mxu0 0.0
    %3808 = vmatpush2.msra.mxu0 0.0
    %3809 = vmatprep.subr.mxu0 0.0
    %3810 = vmatpush2.msra.mxu0 0.0
    %3811 = vmatprep.subr.mxu0 0.0
    %3812 = vmatpush2.msra.mxu0 0.0
    %3813 = vmatprep.subr.mxu0 0.0
    %3814 = vmatpush2.msra.mxu0 0.0
    %3815 = vmatprep.subr.mxu0 0.0
    %3816 = vmatpush2.msra.mxu0 0.0
    %3817 = vmatprep.subr.mxu0 0.0
    %3818 = vmatpush2.msra.mxu0 0.0
    %3819 = vmatprep.subr.mxu0 0.0
    %3820 = vmatpush2.msra.mxu0 0.0
    %3821 = vmatprep.subr.mxu0 0.0
    %3822 = vmatpush2.msra.mxu0 0.0
    %3823 = vmatprep.subr.mxu0 0.0
    %3824 = vmatpush2.msra.mxu0 0.0
    %3825 = vmatprep.mubr.f32.mxu0 0.0
    %3826 = vmatmul.mubr.f32.gmra.mxu0 %v3759
    %v3827 = vpop.f32.mrf.mxu0
    %v3828 = vadd.f32 0.0, %v3827
    %v3829 = vpop.f32.mrf.mxu0
    %3830 = vdwg.mxu0
    %v3832 = vsel %vm231, %v3752, 0
    %v3835 = vsel %vm231, %v3828, 0
    %3837 = vmatprep.subr.mxu0 0.0
    %3838 = vmatpush1.msra.mxu0 0.0
    %3839 = vmatprep.subr.mxu0 0.0
    %3840 = vmatpush1.msra.mxu0 0.0
    %3841 = vmatprep.subr.mxu0 0.0
    %3842 = vmatpush1.msra.mxu0 0.0
    %3843 = vmatprep.subr.mxu0 0.0
    %3844 = vmatpush1.msra.mxu0 0.0
    %3845 = vmatprep.subr.mxu0 0.0
    %3846 = vmatpush1.msra.mxu0 0.0
    %3847 = vmatprep.subr.mxu0 0.0
    %3848 = vmatpush1.msra.mxu0 0.0
    %3849 = vmatprep.subr.mxu0 0.0
    %3850 = vmatpush1.msra.mxu0 0.0
    %3851 = vmatprep.subr.mxu0 0.0
    %3852 = vmatpush1.msra.mxu0 0.0
    %3853 = vmatprep.subr.mxu0 0.0
    %3854 = vmatpush1.msra.mxu0 0.0
    %3855 = vmatprep.subr.mxu0 0.0
    %3856 = vmatpush1.msra.mxu0 0.0
    %3857 = vmatprep.subr.mxu0 0.0
    %3858 = vmatpush1.msra.mxu0 0.0
    %3859 = vmatprep.subr.mxu0 0.0
    %3860 = vmatpush1.msra.mxu0 0.0
    %3861 = vmatprep.subr.mxu0 0.0
    %3862 = vmatpush1.msra.mxu0 0.0
    %3863 = vmatprep.subr.mxu0 0.0
    %3864 = vmatpush1.msra.mxu0 0.0
    %3865 = vmatprep.subr.mxu0 0.0
    %3866 = vmatpush1.msra.mxu0 0.0
    %3867 = vmatprep.subr.mxu0 0.0
    %3868 = vmatpush1.msra.mxu0 %v2178
    %3869 = vmatprep.subr.mxu0 0.0
    %3870 = vmatpush2.msra.mxu0 0.0
    %3871 = vmatprep.subr.mxu0 0.0
    %3872 = vmatpush2.msra.mxu0 0.0
    %3873 = vmatprep.subr.mxu0 0.0
    %3874 = vmatpush2.msra.mxu0 0.0
    %3875 = vmatprep.subr.mxu0 0.0
    %3876 = vmatpush2.msra.mxu0 0.0
    %3877 = vmatprep.subr.mxu0 0.0
    %3878 = vmatpush2.msra.mxu0 0.0
    %3879 = vmatprep.subr.mxu0 0.0
    %3880 = vmatpush2.msra.mxu0 0.0
    %3881 = vmatprep.subr.mxu0 0.0
    %3882 = vmatpush2.msra.mxu0 0.0
    %3883 = vmatprep.subr.mxu0 0.0
    %3884 = vmatpush2.msra.mxu0 0.0
    %3885 = vmatprep.subr.mxu0 0.0
    %3886 = vmatpush2.msra.mxu0 0.0
    %3887 = vmatprep.subr.mxu0 0.0
    %3888 = vmatpush2.msra.mxu0 0.0
    %3889 = vmatprep.subr.mxu0 0.0
    %3890 = vmatpush2.msra.mxu0 0.0
    %3891 = vmatprep.subr.mxu0 0.0
    %3892 = vmatpush2.msra.mxu0 0.0
    %3893 = vmatprep.subr.mxu0 0.0
    %3894 = vmatpush2.msra.mxu0 0.0
    %3895 = vmatprep.subr.mxu0 0.0
    %3896 = vmatpush2.msra.mxu0 0.0
    %3897 = vmatprep.subr.mxu0 0.0
    %3898 = vmatpush2.msra.mxu0 0.0
    %3899 = vmatprep.subr.mxu0 0.0
    %3900 = vmatpush2.msra.mxu0 0.0
    %3901 = vmatprep.mubr.f32.mxu0 0.0
    %3902 = vmatmul.mubr.f32.gmra.mxu0 %v3832
    %v3903 = vpop.f32.mrf.mxu0
    %v3904 = vadd.f32 0.0, %v3903
    %v3905 = vpop.f32.mrf.mxu0
    %3906 = vmatprep.mubr.f32.mxu0 0.0
    %3907 = vmatmul.mubr.f32.gmra.mxu0 %v3835
    %v3908 = vpop.f32.mrf.mxu0
    %v3909 = vadd.f32 0.0, %v3908
    %v3910 = vpop.f32.mrf.mxu0
    %3911 = vdwg.mxu0
    %v3912 = vadd.f32 %v3499, %v3904
    %v3913 = vadd.f32 %v3500, %v3909
    %v3915 = vlaneseq
    %v3916 = vshrl.u32 %v3915, 7
    %v3917 = vsub.s32 0, %v3916
    %v3918 = vrot.slane %v2180, %v3917
    %v3920 = vadd.f32 %v3912, %v3918
    %v3921 = vadd.f32 %v3913, %v3918
    %v3922 = vadd.f32 %v2165, %v3920
    %v3923 = vadd.f32 %v2166, %v3921
    %s3924 = scalar_lea.vmem %s6, 1
    %v3925 = vld [vmem:[%s3924] sm:$0x1]
    %s3926 = scalar_lea.vmem [#allocation7], 1
    %v3927 = vld [vmem:[%s3926] sm:$0x1]
    %v3928 = vsel %vm146, %v3922, 0.0
    %3929 = vadd.xlane.f32.xlu0 %v3928
    %v3930 = vpop.xlane.xlu0 %3929
    %v3931 = vsel %vm146, %v3923, 0.0
    %3932 = vadd.xlane.f32.xlu0 %v3931
    %v3933 = vpop.xlane.xlu0 %3932
    %v3934 = vmul.f32 %v3930, %v1893
    %v3935 = vmul.f32 %v3933, %v1893
    %v3936 = vsub.f32 %v3922, %v3934
    %v3937 = vsub.f32 %v3923, %v3935
    %v3938 = vmul.f32 %v3936, %v3936
    %v3939 = vmul.f32 %v3937, %v3937
    %v3940 = vsel %vm146, %v3938, 0.0
    %3941 = vadd.xlane.f32.xlu0 %v3940
    %v3942 = vpop.xlane.xlu0 %3941
    %v3943 = vsel %vm146, %v3939, 0.0
    %3944 = vadd.xlane.f32.xlu0 %v3943
    %v3945 = vpop.xlane.xlu0 %3944
    %v3946 = vmul.f32 %v3942, %v1893
    %v3947 = vmul.f32 %v3945, %v1893
    %v3948 = vadd.f32 %v3946, 1e-05
    %v3949 = vadd.f32 %v3947, 1e-05
    %v3950 = vrsqrt.pop %v3948
    %v3951 = vrsqrt.pop %v3949
    %v3952 = vmul.f32 %v3936, %v3950
    %v3953 = vmul.f32 %v3937, %v3951
    %v3955 = vlaneseq
    %v3956 = vshrl.u32 %v3955, 7
    %v3957 = vsub.s32 0, %v3956
    %v3958 = vrot.slane %v3925, %v3957
    %v3960 = vmul.f32 %v3952, %v3958
    %v3961 = vmul.f32 %v3953, %v3958
    %v3963 = vlaneseq
    %v3964 = vshrl.u32 %v3963, 7
    %v3965 = vsub.s32 0, %v3964
    %v3966 = vrot.slane %v3927, %v3965
    %v3968 = vadd.f32 %v3960, %v3966
    %v3969 = vadd.f32 %v3961, %v3966
    %s3970 = scalar_lea.vmem %s8, 32
    %v3971 = vld [vmem:[%s3970] sm:$0xff]
    %v3972 = vld [vmem:[%s3970 + $0x8] sm:$0xff]
    %v3973 = vld [vmem:[%s3970 + $0x10] sm:$0xff]
    %v3974 = vld [vmem:[%s3970 + $0x18] sm:$0xff]
    %s3975 = scalar_lea.vmem [#allocation8], 1
    %v3976 = vld [vmem:[%s3975] sm:$0x1]
    %v3978 = vlaneseq
    %v3979 = vshrl.u32 %v3978, 7
    %v3980 = vsub.s32 0, %v3979
    %v3981 = vrot.slane %v3976, %v3980
    %v3984 = vsel %vm146, %v3968, 0
    %v3987 = vsel %vm146, %v3969, 0
    %3989 = vmatprep.subr.mxu0 0.0
    %3990 = vmatpush1.msra.mxu0 0.0
    %3991 = vmatprep.subr.mxu0 0.0
    %3992 = vmatpush1.msra.mxu0 0.0
    %3993 = vmatprep.subr.mxu0 0.0
    %3994 = vmatpush1.msra.mxu0 0.0
    %3995 = vmatprep.subr.mxu0 0.0
    %3996 = vmatpush1.msra.mxu0 0.0
    %3997 = vmatprep.subr.mxu0 0.0
    %3998 = vmatpush1.msra.mxu0 0.0
    %3999 = vmatprep.subr.mxu0 0.0
    %4000 = vmatpush1.msra.mxu0 0.0
    %4001 = vmatprep.subr.mxu0 0.0
    %4002 = vmatpush1.msra.mxu0 0.0
    %4003 = vmatprep.subr.mxu0 0.0
    %4004 = vmatpush1.msra.mxu0 0.0
    %4005 = vmatprep.subr.mxu0 0.0
    %4006 = vmatpush1.msra.mxu0 0.0
    %4007 = vmatprep.subr.mxu0 0.0
    %4008 = vmatpush1.msra.mxu0 0.0
    %4009 = vmatprep.subr.mxu0 0.0
    %4010 = vmatpush1.msra.mxu0 0.0
    %4011 = vmatprep.subr.mxu0 0.0
    %4012 = vmatpush1.msra.mxu0 0.0
    %4013 = vmatprep.subr.mxu0 0.0
    %4014 = vmatpush1.msra.mxu0 %v3974
    %4015 = vmatprep.subr.mxu0 0.0
    %4016 = vmatpush1.msra.mxu0 %v3973
    %4017 = vmatprep.subr.mxu0 0.0
    %4018 = vmatpush1.msra.mxu0 %v3972
    %4019 = vmatprep.subr.mxu0 0.0
    %4020 = vmatpush1.msra.mxu0 %v3971
    %4021 = vmatprep.subr.mxu0 0.0
    %4022 = vmatpush2.msra.mxu0 0.0
    %4023 = vmatprep.subr.mxu0 0.0
    %4024 = vmatpush2.msra.mxu0 0.0
    %4025 = vmatprep.subr.mxu0 0.0
    %4026 = vmatpush2.msra.mxu0 0.0
    %4027 = vmatprep.subr.mxu0 0.0
    %4028 = vmatpush2.msra.mxu0 0.0
    %4029 = vmatprep.subr.mxu0 0.0
    %4030 = vmatpush2.msra.mxu0 0.0
    %4031 = vmatprep.subr.mxu0 0.0
    %4032 = vmatpush2.msra.mxu0 0.0
    %4033 = vmatprep.subr.mxu0 0.0
    %4034 = vmatpush2.msra.mxu0 0.0
    %4035 = vmatprep.subr.mxu0 0.0
    %4036 = vmatpush2.msra.mxu0 0.0
    %4037 = vmatprep.subr.mxu0 0.0
    %4038 = vmatpush2.msra.mxu0 0.0
    %4039 = vmatprep.subr.mxu0 0.0
    %4040 = vmatpush2.msra.mxu0 0.0
    %4041 = vmatprep.subr.mxu0 0.0
    %4042 = vmatpush2.msra.mxu0 0.0
    %4043 = vmatprep.subr.mxu0 0.0
    %4044 = vmatpush2.msra.mxu0 0.0
    %4045 = vmatprep.subr.mxu0 0.0
    %4046 = vmatpush2.msra.mxu0 0.0
    %4047 = vmatprep.subr.mxu0 0.0
    %4048 = vmatpush2.msra.mxu0 0.0
    %4049 = vmatprep.subr.mxu0 0.0
    %4050 = vmatpush2.msra.mxu0 0.0
    %4051 = vmatprep.subr.mxu0 0.0
    %4052 = vmatpush2.msra.mxu0 0.0
    %4053 = vmatprep.mubr.f32.mxu0 0.0
    %4054 = vmatmul.mubr.f32.gmra.mxu0 %v3984
    %v4055 = vpop.f32.mrf.mxu0
    %v4056 = vadd.f32 %v3981, %v4055
    %v4057 = vpop.f32.mrf.mxu0
    %4058 = vmatprep.mubr.f32.mxu0 0.0
    %4059 = vmatmul.mubr.f32.gmra.mxu0 %v3987
    %v4060 = vpop.f32.mrf.mxu0
    %v4061 = vadd.f32 %v3981, %v4060
    %v4062 = vpop.f32.mrf.mxu0
    %4063 = vdwg.mxu0
    %v4064 = vmax.f32 %v4056, 0.0
    %v4065 = vmax.f32 %v4061, 0.0
    %s4066 = scalar_lea.vmem %s10, 64
    %v4067 = vld [vmem:[%s4066] sm:$0xff]
    %v4068 = vld [vmem:[%s4066 + $0x8] sm:$0xff]
    %v4069 = vld [vmem:[%s4066 + $0x10] sm:$0xff]
    %v4070 = vld [vmem:[%s4066 + $0x18] sm:$0xff]
    %v4071 = vld [vmem:[%s4066 + $0x20] sm:$0xff]
    %v4072 = vld [vmem:[%s4066 + $0x28] sm:$0xff]
    %v4073 = vld [vmem:[%s4066 + $0x30] sm:$0xff]
    %v4074 = vld [vmem:[%s4066 + $0x38] sm:$0xff]
    %s4075 = scalar_lea.vmem [#allocation10], 1
    %v4076 = vld [vmem:[%s4075] sm:$0x1]
    %v4078 = vlaneseq
    %v4079 = vshrl.u32 %v4078, 7
    %v4080 = vsub.s32 0, %v4079
    %v4081 = vrot.slane %v4076, %v4080
    %v4084 = vsel %vm2039, %v4064, 0
    %v4087 = vsel %vm2039, %v4065, 0
    %4089 = vmatprep.subr.mxu0 0.0
    %4090 = vmatpush1.msra.mxu0 0.0
    %4091 = vmatprep.subr.mxu0 0.0
    %4092 = vmatpush1.msra.mxu0 0.0
    %4093 = vmatprep.subr.mxu0 0.0
    %4094 = vmatpush1.msra.mxu0 0.0
    %4095 = vmatprep.subr.mxu0 0.0
    %4096 = vmatpush1.msra.mxu0 0.0
    %4097 = vmatprep.subr.mxu0 0.0
    %4098 = vmatpush1.msra.mxu0 0.0
    %4099 = vmatprep.subr.mxu0 0.0
    %4100 = vmatpush1.msra.mxu0 0.0
    %4101 = vmatprep.subr.mxu0 0.0
    %4102 = vmatpush1.msra.mxu0 0.0
    %4103 = vmatprep.subr.mxu0 0.0
    %4104 = vmatpush1.msra.mxu0 0.0
    %4105 = vmatprep.subr.mxu0 0.0
    %4106 = vmatpush1.msra.mxu0 %v4074
    %4107 = vmatprep.subr.mxu0 0.0
    %4108 = vmatpush1.msra.mxu0 %v4073
    %4109 = vmatprep.subr.mxu0 0.0
    %4110 = vmatpush1.msra.mxu0 %v4072
    %4111 = vmatprep.subr.mxu0 0.0
    %4112 = vmatpush1.msra.mxu0 %v4071
    %4113 = vmatprep.subr.mxu0 0.0
    %4114 = vmatpush1.msra.mxu0 %v4070
    %4115 = vmatprep.subr.mxu0 0.0
    %4116 = vmatpush1.msra.mxu0 %v4069
    %4117 = vmatprep.subr.mxu0 0.0
    %4118 = vmatpush1.msra.mxu0 %v4068
    %4119 = vmatprep.subr.mxu0 0.0
    %4120 = vmatpush1.msra.mxu0 %v4067
    %4121 = vmatprep.subr.mxu0 0.0
    %4122 = vmatpush2.msra.mxu0 0.0
    %4123 = vmatprep.subr.mxu0 0.0
    %4124 = vmatpush2.msra.mxu0 0.0
    %4125 = vmatprep.subr.mxu0 0.0
    %4126 = vmatpush2.msra.mxu0 0.0
    %4127 = vmatprep.subr.mxu0 0.0
    %4128 = vmatpush2.msra.mxu0 0.0
    %4129 = vmatprep.subr.mxu0 0.0
    %4130 = vmatpush2.msra.mxu0 0.0
    %4131 = vmatprep.subr.mxu0 0.0
    %4132 = vmatpush2.msra.mxu0 0.0
    %4133 = vmatprep.subr.mxu0 0.0
    %4134 = vmatpush2.msra.mxu0 0.0
    %4135 = vmatprep.subr.mxu0 0.0
    %4136 = vmatpush2.msra.mxu0 0.0
    %4137 = vmatprep.subr.mxu0 0.0
    %4138 = vmatpush2.msra.mxu0 0.0
    %4139 = vmatprep.subr.mxu0 0.0
    %4140 = vmatpush2.msra.mxu0 0.0
    %4141 = vmatprep.subr.mxu0 0.0
    %4142 = vmatpush2.msra.mxu0 0.0
    %4143 = vmatprep.subr.mxu0 0.0
    %4144 = vmatpush2.msra.mxu0 0.0
    %4145 = vmatprep.subr.mxu0 0.0
    %4146 = vmatpush2.msra.mxu0 0.0
    %4147 = vmatprep.subr.mxu0 0.0
    %4148 = vmatpush2.msra.mxu0 0.0
    %4149 = vmatprep.subr.mxu0 0.0
    %4150 = vmatpush2.msra.mxu0 0.0
    %4151 = vmatprep.subr.mxu0 0.0
    %4152 = vmatpush2.msra.mxu0 0.0
    %4153 = vmatprep.mubr.f32.mxu0 0.0
    %4154 = vmatmul.mubr.f32.gmra.mxu0 %v4084
    %v4155 = vpop.f32.mrf.mxu0
    %v4156 = vadd.f32 %v4081, %v4155
    %v4157 = vpop.f32.mrf.mxu0
    %4158 = vmatprep.mubr.f32.mxu0 0.0
    %4159 = vmatmul.mubr.f32.gmra.mxu0 %v4087
    %v4160 = vpop.f32.mrf.mxu0
    %v4161 = vadd.f32 %v4081, %v4160
    %v4162 = vpop.f32.mrf.mxu0
    %4163 = vdwg.mxu0
    %v4164 = vadd.f32 %v3968, %v4156
    %v4165 = vadd.f32 %v3969, %v4161
    %s4166 = scalar_lea.vmem %s12, 1
    %v4167 = vld [vmem:[%s4166] sm:$0x1]
    %s4168 = scalar_lea.vmem %s13, 1
    %v4169 = vld [vmem:[%s4168] sm:$0x1]
    %v4170 = vsel %vm146, %v4164, 0.0
    %4171 = vadd.xlane.f32.xlu0 %v4170
    %v4172 = vpop.xlane.xlu0 %4171
    %v4173 = vsel %vm146, %v4165, 0.0
    %4174 = vadd.xlane.f32.xlu0 %v4173
    %v4175 = vpop.xlane.xlu0 %4174
    %v4176 = vmul.f32 %v4172, %v1893
    %v4177 = vmul.f32 %v4175, %v1893
    %v4178 = vsub.f32 %v4164, %v4176
    %v4179 = vsub.f32 %v4165, %v4177
    %v4180 = vmul.f32 %v4178, %v4178
    %v4181 = vmul.f32 %v4179, %v4179
    %v4182 = vsel %vm146, %v4180, 0.0
    %4183 = vadd.xlane.f32.xlu0 %v4182
    %v4184 = vpop.xlane.xlu0 %4183
    %v4185 = vsel %vm146, %v4181, 0.0
    %4186 = vadd.xlane.f32.xlu0 %v4185
    %v4187 = vpop.xlane.xlu0 %4186
    %v4188 = vmul.f32 %v4184, %v1893
    %v4189 = vmul.f32 %v4187, %v1893
    %v4190 = vadd.f32 %v4188, 1e-05
    %v4191 = vadd.f32 %v4189, 1e-05
    %v4192 = vrsqrt.pop %v4190
    %v4193 = vrsqrt.pop %v4191
    %v4194 = vmul.f32 %v4178, %v4192
    %v4195 = vmul.f32 %v4179, %v4193
    %v4197 = vlaneseq
    %v4198 = vshrl.u32 %v4197, 7
    %v4199 = vsub.s32 0, %v4198
    %v4200 = vrot.slane %v4167, %v4199
    %v4202 = vmul.f32 %v4194, %v4200
    %v4203 = vmul.f32 %v4195, %v4200
    %v4205 = vlaneseq
    %v4206 = vshrl.u32 %v4205, 7
    %v4207 = vsub.s32 0, %v4206
    %v4208 = vrot.slane %v4169, %v4207
    %v4210 = vadd.f32 %v4202, %v4208
    %v4211 = vadd.f32 %v4203, %v4208
    %v4212 = vld [vmem:[%s14] sm:$0x1]
    %v4213 = vld [vmem:[%s15] sm:$0x1]
    %v4214 = vsel %vm146, %v4210, 0.0
    %4215 = vadd.xlane.f32.xlu0 %v4214
    %v4216 = vpop.xlane.xlu0 %4215
    %v4217 = vsel %vm146, %v4211, 0.0
    %4218 = vadd.xlane.f32.xlu0 %v4217
    %v4219 = vpop.xlane.xlu0 %4218
    %v4220 = vmul.f32 %v4216, %v1893
    %v4221 = vmul.f32 %v4219, %v1893
    %v4222 = vsub.f32 %v4210, %v4220
    %v4223 = vsub.f32 %v4211, %v4221
    %v4224 = vmul.f32 %v4222, %v4222
    %v4225 = vmul.f32 %v4223, %v4223
    %v4226 = vsel %vm146, %v4224, 0.0
    %4227 = vadd.xlane.f32.xlu0 %v4226
    %v4228 = vpop.xlane.xlu0 %4227
    %v4229 = vsel %vm146, %v4225, 0.0
    %4230 = vadd.xlane.f32.xlu0 %v4229
    %v4231 = vpop.xlane.xlu0 %4230
    %v4232 = vmul.f32 %v4228, %v1893
    %v4233 = vmul.f32 %v4231, %v1893
    %v4234 = vadd.f32 %v4232, 1e-05
    %v4235 = vadd.f32 %v4233, 1e-05
    %v4236 = vrsqrt.pop %v4234
    %v4237 = vrsqrt.pop %v4235
    %v4238 = vmul.f32 %v4222, %v4236
    %v4239 = vmul.f32 %v4223, %v4237
    %v4241 = vlaneseq
    %v4242 = vshrl.u32 %v4241, 7
    %v4243 = vsub.s32 0, %v4242
    %v4244 = vrot.slane %v4212, %v4243
    %v4246 = vmul.f32 %v4238, %v4244
    %v4247 = vmul.f32 %v4239, %v4244
    %v4249 = vlaneseq
    %v4250 = vshrl.u32 %v4249, 7
    %v4251 = vsub.s32 0, %v4250
    %v4252 = vrot.slane %v4213, %v4251
    %v4254 = vadd.f32 %v4246, %v4252
    %v4255 = vadd.f32 %v4247, %v4252
    %4256 = vst.msk [vmem:[#allocation11] sm:$0xff] %vm146, %v4254
    %4257 = vst.msk [vmem:[#allocation11 + $0x8] sm:$0xff] %vm146, %v4255
    // Predicated region
    $region86: #{encoder_forward.1} parent=1 // pred_check
      _
    $region87: #{encoder_forward.1} parent=1 // pred_check_branch
      %4259 = sbr.rel (0) target = $region89
    $region88: #{encoder_forward.1} parent=1 // pred_region
      %s4261 = ssub.s32 256, 256
      %4262 = vsyncadd [#allocation4], %s4261
      %s4263 = sshll.u32 [#allocation11], 4
      %s4264 = int_to_ptr.vmem [resolvable:$true] %s4263
      %4269 = dma.vmem_to_hbm [thread:$0]  %s4264, 256, %s16, [#allocation4], 128, 128, 8
    $region89: #{encoder_forward.1} parent=1 // pred_fallthru
      _
    // Predicated region
    $region90: #{encoder_forward.1} parent=1 // pred_check
      _
    $region91: #{encoder_forward.1} parent=1 // pred_check_branch
      %4271 = sbr.rel (0) target = $region93
    $region92: #{encoder_forward.1} parent=1 // pred_region
      %4272 = dma.done [#allocation4], 256
    $region93: #{encoder_forward.1} parent=1 // pred_fallthru
      _
    %4273 = vsyncpa [#allocation3], 1
    %4274 = vsyncpa [#allocation6], 1
    %4275 = vsyncpa [#allocation9], 1
    %4276 = vsyncpa [#allocation4], 1

</llo_original>
